<compile_context>
chip_gen: v5e
topology: v5e:2x2
jax: 0.10.0
libtpu: 0.0.40
codegen_flags: <defaults>
</compile_context>

<pallas_src>
import functools

import jax
import jax.numpy as jnp
from jax.experimental import pallas as pl
from jax.experimental.pallas import tpu as pltpu

LRELU_SLOPE = 0.2
BN_EPS = 1e-5
COMPUTE_DTYPE = jnp.bfloat16          # matmul-input / activation storage dtype

# (cout, stride, use_bn, in-kernel post-activation)
_LAYER_CFG = (
    (8, 2, False, "leaky"),
    (16, 2, True, None),
    (32, 2, True, None),
    (8, 2, True, None),
    (1, 1, False, "sigmoid"),
)


def _apply_post(y, post_act):
    if post_act == "leaky":
        return jnp.where(y > 0, y, LRELU_SLOPE * y)
    if post_act == "sigmoid":                 # numerically stable sigmoid
        e = jnp.exp(-jnp.abs(y))
        return jnp.where(y >= 0, 1.0, e) / (1.0 + e)
    return y


def _pick_th(hout, wout, budget=2048):
    """Output rows per grid step: whole image when M=hout*wout is small,
    otherwise a multiple-of-16 divisor of hout (f32 accumulator stays small)."""
    if hout * wout <= budget:
        return hout
    best = 0
    for d in range(16, hout + 1, 16):
        if hout % d == 0 and d * wout <= budget:
            best = d
    if best:
        return best
    for d in range(16, hout + 1, 16):
        if hout % d == 0:
            return d
    return hout


# ---------------------------------------------------------------------------
# Tiled kernel (wout % 8 == 0): stride-phase-split input, one matmul per step.
# ---------------------------------------------------------------------------
def _make_tiled_kernel(*, stride, th, wout, hph, cin, cout, post_act,
                       collect_stats, lane_dense):
    def kernel(x_ref, w_ref, o_ref, *stats_refs):
        r = pl.program_id(1)
        row0 = r * th

        # Build the (th*wout, 9*cin) tap matrix: 9 shifted phase slices,
        # concatenated along the lane (channel) axis -> ONE MXU matmul.
        taps = []
        for kh in range(3):
            for kw in range(3):
                ph = (kh % stride) * stride + (kw % stride)
                dh, dw = kh // stride, kw // stride
                t = x_ref[0, pl.ds(ph * hph + row0 + dh, th), pl.ds(dw, wout), :]
                taps.append(t.reshape(th * wout, cin))
        tap_mat = jnp.concatenate(taps, axis=-1)          # (M, 9*cin) bf16
        acc = jnp.dot(tap_mat, w_ref[...],
                      preferred_element_type=jnp.float32)  # (M, cout) f32

        if collect_stats:
            s_ref = stats_refs[0]

            @pl.when(r == 0)
            def _init():
                s_ref[...] = jnp.zeros_like(s_ref)

            s_ref[0, 0:1, :] += jnp.sum(acc, axis=0, keepdims=True)
            s_ref[0, 1:2, :] += jnp.sum(acc * acc, axis=0, keepdims=True)

        y = _apply_post(acc, post_act)                     # f32 (M, cout)
        if lane_dense:
            # Lane-dense store: last dim = wout*cout (128 for layers 1-3).
            y3 = y.reshape(th, wout, cout)
            dense = jnp.concatenate([y3[:, j:j + 1, :] for j in range(wout)],
                                    axis=-1)               # (th, 1, wout*cout)
            o_ref[0] = dense.astype(o_ref.dtype)
        else:
            o_ref[0] = y.reshape(th, wout, cout).astype(o_ref.dtype)

    return kernel


# ---------------------------------------------------------------------------
# Tiny kernel (wout % 8 != 0): whole-image im2col input, one matmul per image.
# ---------------------------------------------------------------------------
def _make_tiny_kernel(*, post_act, collect_stats):
    def kernel(x_ref, w_ref, o_ref, *stats_refs):
        acc = jnp.dot(x_ref[0], w_ref[...],
                      preferred_element_type=jnp.float32)  # (hout*wout, cout)
        if collect_stats:
            s_ref = stats_refs[0]
            s_ref[0, 0:1, :] = jnp.sum(acc, axis=0, keepdims=True)
            s_ref[0, 1:2, :] = jnp.sum(acc * acc, axis=0, keepdims=True)
        o_ref[0] = _apply_post(acc, post_act).astype(o_ref.dtype)

    return kernel


# ---------------------------------------------------------------------------
# Wrapper-side layout glue (pure data movement; XLA fuses the preceding
# BN-affine + LeakyReLU into these, so activations are applied exactly once).
# ---------------------------------------------------------------------------
def _phase_split(x_nhwc, stride):
    N, H, W, C = x_nhwc.shape
    xp = jnp.pad(x_nhwc, ((0, 0), (1, 1), (1, 1), (0, 0)))
    if stride > 1:
        assert (H + 2) % stride == 0 and (W + 2) % stride == 0, (H, W, stride)
        xp = jnp.concatenate([xp[:, a::stride, b::stride, :]
                              for a in range(stride) for b in range(stride)],
                             axis=1)
    return xp.astype(COMPUTE_DTYPE)


def _im2col(x_nhwc, stride):
    N, H, W, C = x_nhwc.shape
    hout = (H - 1) // stride + 1
    wout = (W - 1) // stride + 1
    xp = jnp.pad(x_nhwc, ((0, 0), (1, 1), (1, 1), (0, 0)))
    cols = [xp[:, kh:kh + (hout - 1) * stride + 1:stride,
               kw:kw + (wout - 1) * stride + 1:stride, :]
            for kh in range(3) for kw in range(3)]
    t = jnp.concatenate(cols, axis=-1)                     # (N, hout, wout, 9C)
    return t.reshape(N, hout * wout, 9 * C).astype(COMPUTE_DTYPE)


# ---------------------------------------------------------------------------
# One conv layer = one pallas_call.
# ---------------------------------------------------------------------------
def _conv_layer(x_act, w_flat, *, stride, cout, post_act, collect_stats,
                out_dtype):
    N, H, W, cin = x_act.shape
    hout = (H - 1) // stride + 1
    wout = (W - 1) // stride + 1

    if wout % 8 == 0:
        # Tiled path: phase-split input, grid = (batch, row blocks).
        nph = stride * stride
        hph = (H + 2) // stride
        wph = (W + 2) // stride
        x_in = _phase_split(x_act, stride)                 # (N, nph*hph, wph, cin)
        th = _pick_th(hout, wout)
        nrb = hout // th
        lane_dense = wout <= 32
        kernel = _make_tiled_kernel(stride=stride, th=th, wout=wout, hph=hph,
                                    cin=cin, cout=cout, post_act=post_act,
                                    collect_stats=collect_stats,
                                    lane_dense=lane_dense)
        in_specs = [
            pl.BlockSpec((1, nph * hph, wph, cin), lambda n, r: (n, 0, 0, 0)),
            pl.BlockSpec((9 * cin, cout), lambda n, r: (0, 0)),
        ]
        if lane_dense:
            out_shapes = [jax.ShapeDtypeStruct((N, hout, 1, wout * cout),
                                               out_dtype)]
            out_specs = [pl.BlockSpec((1, th, 1, wout * cout),
                                      lambda n, r: (n, r, 0, 0))]
        else:
            out_shapes = [jax.ShapeDtypeStruct((N, hout, wout, cout), out_dtype)]
            out_specs = [pl.BlockSpec((1, th, wout, cout),
                                      lambda n, r: (n, r, 0, 0))]
        grid = (N, nrb)
        dims = ("parallel", "arbitrary")
        stats_spec = pl.BlockSpec((1, 2, cout), lambda n, r: (n, 0, 0))
    else:
        # Tiny path (tail layers, a few KB): host im2col, one matmul / image.
        x_in = _im2col(x_act, stride)                      # (N, hout*wout, 9*cin)
        kernel = _make_tiny_kernel(post_act=post_act, collect_stats=collect_stats)
        in_specs = [
            pl.BlockSpec((1, hout * wout, 9 * cin), lambda n: (n, 0, 0)),
            pl.BlockSpec((9 * cin, cout), lambda n: (0, 0)),
        ]
        out_shapes = [jax.ShapeDtypeStruct((N, hout * wout, cout), out_dtype)]
        out_specs = [pl.BlockSpec((1, hout * wout, cout), lambda n: (n, 0, 0))]
        grid = (N,)
        dims = ("parallel",)
        stats_spec = pl.BlockSpec((1, 2, cout), lambda n: (n, 0, 0))

    if collect_stats:
        out_shapes.append(jax.ShapeDtypeStruct((N, 2, cout), jnp.float32))
        out_specs.append(stats_spec)

    res = pl.pallas_call(
        kernel,
        grid=grid,
        in_specs=in_specs,
        out_specs=tuple(out_specs) if collect_stats else out_specs[0],
        out_shape=tuple(out_shapes) if collect_stats else out_shapes[0],
        compiler_params=pltpu.CompilerParams(dimension_semantics=dims),
    )(x_in, w_flat)

    if collect_stats:
        y, stats = res
    else:
        y, stats = res, None
    y = y.reshape(N, hout, wout, cout)                     # contiguous, free
    return y, stats


# ---------------------------------------------------------------------------
# Parameters (mirrors Discriminator.__init__ shapes; bias=False everywhere).
# ---------------------------------------------------------------------------
def init_params(key, n_channels):
    params = []
    cin = n_channels
    for (cout, _stride, _use_bn, _post) in _LAYER_CFG:
        key, wk = jax.random.split(key)
        fan_in = cin * 9
        bound = (1.0 / fan_in) ** 0.5
        w = jax.random.uniform(wk, (cout, cin, 3, 3), jnp.float32, -bound, bound)
        # (Cout, Cin, kh, kw) -> (kh, kw, Cin, Cout) -> (9*Cin, Cout);
        # row index = (kh*3 + kw)*Cin + c, matching the in-kernel tap order.
        w_flat = jnp.transpose(w, (2, 3, 1, 0)).reshape(9 * cin, cout)
        params.append(dict(
            w=w_flat.astype(COMPUTE_DTYPE),
            gamma=jnp.ones((cout,), jnp.float32),
            beta=jnp.zeros((cout,), jnp.float32),
            running_mean=jnp.zeros((cout,), jnp.float32),
            running_var=jnp.ones((cout,), jnp.float32),
        ))
        cin = cout
    return params


# ---------------------------------------------------------------------------
# Forward: (N, n_channels, S, S) -> (N, 1, S/16, S/16)
# ---------------------------------------------------------------------------
def discriminator_forward(x_nchw, params, *, bn_training=True):
    x = jnp.transpose(x_nchw, (0, 2, 3, 1))                # NCHW -> NHWC
    N = x.shape[0]
    n_layers = len(_LAYER_CFG)

    for li, ((cout, stride, use_bn, post_act), p) in enumerate(
            zip(_LAYER_CFG, params)):
        out_dtype = jnp.float32 if li == n_layers - 1 else COMPUTE_DTYPE
        collect = bool(use_bn and bn_training)

        y, stats = _conv_layer(x, p["w"], stride=stride, cout=cout,
                               post_act=post_act, collect_stats=collect,
                               out_dtype=out_dtype)

        if use_bn:
            if collect:                                    # training batch stats
                s = jnp.sum(stats, axis=0)                 # (2, cout)
                m = float(N * y.shape[1] * y.shape[2])
                mean = s[0] / m
                var = jnp.maximum(s[1] / m - mean * mean, 0.0)   # biased var
            else:                                          # eval: running stats
                mean, var = p["running_mean"], p["running_var"]
            # BN affine + LeakyReLU (applied once per element; XLA fuses this
            # with the next layer's pad / phase-split / im2col glue).
            scale = p["gamma"] * jax.lax.rsqrt(var + BN_EPS)
            shift = p["beta"] - mean * scale
            t = y.astype(jnp.float32) * scale + shift
            y = jnp.where(t > 0, t, LRELU_SLOPE * t)
        x = y

    return jnp.transpose(x, (0, 3, 1, 2))                  # NHWC -> NCHW


if __name__ == "__main__":
    key = jax.random.PRNGKey(0)
    pkey, xkey = jax.random.split(key)

    n_channels = 2            # docstring: input is (B, 2, occ_map_size, occ_map_size)
    batch, occ = 2, 32        # small, divisible by 16

    params = init_params(pkey, n_channels)
    x = jax.random.normal(xkey, (batch, n_channels, occ, occ), jnp.float32)

    fwd = jax.jit(functools.partial(discriminator_forward, bn_training=True))
    out = jax.block_until_ready(fwd(x, params))

    assert out.shape == (batch, 1, occ // 16, occ // 16), out.shape
    assert bool(jnp.all(jnp.isfinite(out)))
    assert bool(jnp.all((out >= 0.0) & (out <= 1.0)))      # sigmoid output range
    print("KERNEL_OK")
</pallas_src>

<mosaic_0001>
module attributes {stable_mosaic.version = 11 : i64} {
  func.func @kernel(%arg0: i32, %arg1: i32, %arg2: memref<1x68x17x2xbf16, #tpu.memory_space<vmem>>, %arg3: memref<18x8xbf16, #tpu.memory_space<vmem>>, %arg4: memref<1x16x1x128xbf16, #tpu.memory_space<vmem>>) attributes {dimension_semantics = [#tpu.dimension_semantics<parallel>, #tpu.dimension_semantics<arbitrary>], iteration_bounds = array<i64: 2, 1>, scalar_prefetch = 0 : i64, scratch_operands = 0 : i64, tpu.core_type = #tpu.core_type<tc>, window_params = [{transform_indices = @transform_0, window_bounds = array<i64: 1, 68, 17, 2>}, {pipeline_mode = #tpu.pipeline_mode<synchronous>, transform_indices = @transform_1, window_bounds = array<i64: 18, 8>}, {transform_indices = @transform_2, window_bounds = array<i64: 1, 16, 1, 128>}]} {
    %c16_i32 = arith.constant 16 : i32
    %0 = arith.muli %arg1, %c16_i32 : i32
    %c0_i32 = arith.constant 0 : i32
    %1 = arith.addi %c0_i32, %0 : i32
    %c0_i32_0 = arith.constant 0 : i32
    %2 = arith.addi %1, %c0_i32_0 : i32
    %c0 = arith.constant 0 : index
    %3 = arith.index_cast %2 : i32 to index
    %c0_1 = arith.constant 0 : index
    %c0_2 = arith.constant 0 : index
    %4 = vector.load %arg2[%c0, %3, %c0_1, %c0_2] : memref<1x68x17x2xbf16, #tpu.memory_space<vmem>>, vector<1x16x16x2xbf16>
    %5 = vector.shape_cast %4 : vector<1x16x16x2xbf16> to vector<16x16x2xbf16>
    %6 = vector.shape_cast %5 : vector<16x16x2xbf16> to vector<256x2xbf16>
    %c17_i32 = arith.constant 17 : i32
    %7 = arith.addi %c17_i32, %0 : i32
    %c0_i32_3 = arith.constant 0 : i32
    %8 = arith.addi %7, %c0_i32_3 : i32
    %c0_4 = arith.constant 0 : index
    %9 = arith.index_cast %8 : i32 to index
    %c0_5 = arith.constant 0 : index
    %c0_6 = arith.constant 0 : index
    %10 = vector.load %arg2[%c0_4, %9, %c0_5, %c0_6] : memref<1x68x17x2xbf16, #tpu.memory_space<vmem>>, vector<1x16x16x2xbf16>
    %11 = vector.shape_cast %10 : vector<1x16x16x2xbf16> to vector<16x16x2xbf16>
    %12 = vector.shape_cast %11 : vector<16x16x2xbf16> to vector<256x2xbf16>
    %c0_i32_7 = arith.constant 0 : i32
    %13 = arith.addi %c0_i32_7, %0 : i32
    %c0_i32_8 = arith.constant 0 : i32
    %14 = arith.addi %13, %c0_i32_8 : i32
    %c0_9 = arith.constant 0 : index
    %15 = arith.index_cast %14 : i32 to index
    %c1 = arith.constant 1 : index
    %c0_10 = arith.constant 0 : index
    %16 = vector.load %arg2[%c0_9, %15, %c1, %c0_10] : memref<1x68x17x2xbf16, #tpu.memory_space<vmem>>, vector<1x16x16x2xbf16>
    %17 = vector.shape_cast %16 : vector<1x16x16x2xbf16> to vector<16x16x2xbf16>
    %18 = vector.shape_cast %17 : vector<16x16x2xbf16> to vector<256x2xbf16>
    %c34_i32 = arith.constant 34 : i32
    %19 = arith.addi %c34_i32, %0 : i32
    %c0_i32_11 = arith.constant 0 : i32
    %20 = arith.addi %19, %c0_i32_11 : i32
    %c0_12 = arith.constant 0 : index
    %21 = arith.index_cast %20 : i32 to index
    %c0_13 = arith.constant 0 : index
    %c0_14 = arith.constant 0 : index
    %22 = vector.load %arg2[%c0_12, %21, %c0_13, %c0_14] : memref<1x68x17x2xbf16, #tpu.memory_space<vmem>>, vector<1x16x16x2xbf16>
    %23 = vector.shape_cast %22 : vector<1x16x16x2xbf16> to vector<16x16x2xbf16>
    %24 = vector.shape_cast %23 : vector<16x16x2xbf16> to vector<256x2xbf16>
    %c51_i32 = arith.constant 51 : i32
    %25 = arith.addi %c51_i32, %0 : i32
    %c0_i32_15 = arith.constant 0 : i32
    %26 = arith.addi %25, %c0_i32_15 : i32
    %c0_16 = arith.constant 0 : index
    %27 = arith.index_cast %26 : i32 to index
    %c0_17 = arith.constant 0 : index
    %c0_18 = arith.constant 0 : index
    %28 = vector.load %arg2[%c0_16, %27, %c0_17, %c0_18] : memref<1x68x17x2xbf16, #tpu.memory_space<vmem>>, vector<1x16x16x2xbf16>
    %29 = vector.shape_cast %28 : vector<1x16x16x2xbf16> to vector<16x16x2xbf16>
    %30 = vector.shape_cast %29 : vector<16x16x2xbf16> to vector<256x2xbf16>
    %c34_i32_19 = arith.constant 34 : i32
    %31 = arith.addi %c34_i32_19, %0 : i32
    %c0_i32_20 = arith.constant 0 : i32
    %32 = arith.addi %31, %c0_i32_20 : i32
    %c0_21 = arith.constant 0 : index
    %33 = arith.index_cast %32 : i32 to index
    %c1_22 = arith.constant 1 : index
    %c0_23 = arith.constant 0 : index
    %34 = vector.load %arg2[%c0_21, %33, %c1_22, %c0_23] : memref<1x68x17x2xbf16, #tpu.memory_space<vmem>>, vector<1x16x16x2xbf16>
    %35 = vector.shape_cast %34 : vector<1x16x16x2xbf16> to vector<16x16x2xbf16>
    %36 = vector.shape_cast %35 : vector<16x16x2xbf16> to vector<256x2xbf16>
    %c0_i32_24 = arith.constant 0 : i32
    %37 = arith.addi %c0_i32_24, %0 : i32
    %c1_i32 = arith.constant 1 : i32
    %38 = arith.addi %37, %c1_i32 : i32
    %c0_25 = arith.constant 0 : index
    %39 = arith.index_cast %38 : i32 to index
    %c0_26 = arith.constant 0 : index
    %c0_27 = arith.constant 0 : index
    %40 = vector.load %arg2[%c0_25, %39, %c0_26, %c0_27] : memref<1x68x17x2xbf16, #tpu.memory_space<vmem>>, vector<1x16x16x2xbf16>
    %41 = vector.shape_cast %40 : vector<1x16x16x2xbf16> to vector<16x16x2xbf16>
    %42 = vector.shape_cast %41 : vector<16x16x2xbf16> to vector<256x2xbf16>
    %c17_i32_28 = arith.constant 17 : i32
    %43 = arith.addi %c17_i32_28, %0 : i32
    %c1_i32_29 = arith.constant 1 : i32
    %44 = arith.addi %43, %c1_i32_29 : i32
    %c0_30 = arith.constant 0 : index
    %45 = arith.index_cast %44 : i32 to index
    %c0_31 = arith.constant 0 : index
    %c0_32 = arith.constant 0 : index
    %46 = vector.load %arg2[%c0_30, %45, %c0_31, %c0_32] : memref<1x68x17x2xbf16, #tpu.memory_space<vmem>>, vector<1x16x16x2xbf16>
    %47 = vector.shape_cast %46 : vector<1x16x16x2xbf16> to vector<16x16x2xbf16>
    %48 = vector.shape_cast %47 : vector<16x16x2xbf16> to vector<256x2xbf16>
    %c0_i32_33 = arith.constant 0 : i32
    %49 = arith.addi %c0_i32_33, %0 : i32
    %c1_i32_34 = arith.constant 1 : i32
    %50 = arith.addi %49, %c1_i32_34 : i32
    %c0_35 = arith.constant 0 : index
    %51 = arith.index_cast %50 : i32 to index
    %c1_36 = arith.constant 1 : index
    %c0_37 = arith.constant 0 : index
    %52 = vector.load %arg2[%c0_35, %51, %c1_36, %c0_37] : memref<1x68x17x2xbf16, #tpu.memory_space<vmem>>, vector<1x16x16x2xbf16>
    %53 = vector.shape_cast %52 : vector<1x16x16x2xbf16> to vector<16x16x2xbf16>
    %54 = vector.shape_cast %53 : vector<16x16x2xbf16> to vector<256x2xbf16>
    %55 = tpu.concatenate %6, %12, %18, %24, %30, %36, %42, %48, %54 in 1 : vector<256x2xbf16>, vector<256x2xbf16>, vector<256x2xbf16>, vector<256x2xbf16>, vector<256x2xbf16>, vector<256x2xbf16>, vector<256x2xbf16>, vector<256x2xbf16>, vector<256x2xbf16> -> vector<256x18xbf16>
    %c0_38 = arith.constant 0 : index
    %c0_39 = arith.constant 0 : index
    %56 = vector.load %arg3[%c0_38, %c0_39] : memref<18x8xbf16, #tpu.memory_space<vmem>>, vector<18x8xbf16>
    %cst = arith.constant dense<0.000000e+00> : vector<256x8xf32>
    %57 = tpu.matmul %55, %56, %cst {dimension_numbers = #tpu.dot_dimension_numbers<[1], [0], [0], [1], [0, 0, 1, 1], [], []>} : vector<256x18xbf16>, vector<18x8xbf16>, vector<256x8xf32> -> vector<256x8xf32>
    %cst_40 = arith.constant 0.000000e+00 : f32
    %58 = vector.broadcast %cst_40 : f32 to vector<256x8xf32>
    %59 = arith.cmpf ogt, %57, %58 : vector<256x8xf32>
    %cst_41 = arith.constant 2.000000e-01 : f32
    %60 = vector.broadcast %cst_41 : f32 to vector<256x8xf32>
    %61 = arith.mulf %60, %57 : vector<256x8xf32>
    %62 = arith.select %59, %57, %61 : vector<256x8xi1>, vector<256x8xf32>
    %63 = vector.shape_cast %62 : vector<256x8xf32> to vector<16x16x8xf32>
    %64 = vector.extract_strided_slice %63 {offsets = [0, 0, 0], sizes = [16, 1, 8], strides = [1, 1, 1]} : vector<16x16x8xf32> to vector<16x1x8xf32>
    %65 = vector.extract_strided_slice %63 {offsets = [0, 1, 0], sizes = [16, 1, 8], strides = [1, 1, 1]} : vector<16x16x8xf32> to vector<16x1x8xf32>
    %66 = vector.extract_strided_slice %63 {offsets = [0, 2, 0], sizes = [16, 1, 8], strides = [1, 1, 1]} : vector<16x16x8xf32> to vector<16x1x8xf32>
    %67 = vector.extract_strided_slice %63 {offsets = [0, 3, 0], sizes = [16, 1, 8], strides = [1, 1, 1]} : vector<16x16x8xf32> to vector<16x1x8xf32>
    %68 = vector.extract_strided_slice %63 {offsets = [0, 4, 0], sizes = [16, 1, 8], strides = [1, 1, 1]} : vector<16x16x8xf32> to vector<16x1x8xf32>
    %69 = vector.extract_strided_slice %63 {offsets = [0, 5, 0], sizes = [16, 1, 8], strides = [1, 1, 1]} : vector<16x16x8xf32> to vector<16x1x8xf32>
    %70 = vector.extract_strided_slice %63 {offsets = [0, 6, 0], sizes = [16, 1, 8], strides = [1, 1, 1]} : vector<16x16x8xf32> to vector<16x1x8xf32>
    %71 = vector.extract_strided_slice %63 {offsets = [0, 7, 0], sizes = [16, 1, 8], strides = [1, 1, 1]} : vector<16x16x8xf32> to vector<16x1x8xf32>
    %72 = vector.extract_strided_slice %63 {offsets = [0, 8, 0], sizes = [16, 1, 8], strides = [1, 1, 1]} : vector<16x16x8xf32> to vector<16x1x8xf32>
    %73 = vector.extract_strided_slice %63 {offsets = [0, 9, 0], sizes = [16, 1, 8], strides = [1, 1, 1]} : vector<16x16x8xf32> to vector<16x1x8xf32>
    %74 = vector.extract_strided_slice %63 {offsets = [0, 10, 0], sizes = [16, 1, 8], strides = [1, 1, 1]} : vector<16x16x8xf32> to vector<16x1x8xf32>
    %75 = vector.extract_strided_slice %63 {offsets = [0, 11, 0], sizes = [16, 1, 8], strides = [1, 1, 1]} : vector<16x16x8xf32> to vector<16x1x8xf32>
    %76 = vector.extract_strided_slice %63 {offsets = [0, 12, 0], sizes = [16, 1, 8], strides = [1, 1, 1]} : vector<16x16x8xf32> to vector<16x1x8xf32>
    %77 = vector.extract_strided_slice %63 {offsets = [0, 13, 0], sizes = [16, 1, 8], strides = [1, 1, 1]} : vector<16x16x8xf32> to vector<16x1x8xf32>
    %78 = vector.extract_strided_slice %63 {offsets = [0, 14, 0], sizes = [16, 1, 8], strides = [1, 1, 1]} : vector<16x16x8xf32> to vector<16x1x8xf32>
    %79 = vector.extract_strided_slice %63 {offsets = [0, 15, 0], sizes = [16, 1, 8], strides = [1, 1, 1]} : vector<16x16x8xf32> to vector<16x1x8xf32>
    %80 = tpu.concatenate %64, %65, %66, %67, %68, %69, %70, %71, %72, %73, %74, %75, %76, %77, %78, %79 in 2 : vector<16x1x8xf32>, vector<16x1x8xf32>, vector<16x1x8xf32>, vector<16x1x8xf32>, vector<16x1x8xf32>, vector<16x1x8xf32>, vector<16x1x8xf32>, vector<16x1x8xf32>, vector<16x1x8xf32>, vector<16x1x8xf32>, vector<16x1x8xf32>, vector<16x1x8xf32>, vector<16x1x8xf32>, vector<16x1x8xf32>, vector<16x1x8xf32>, vector<16x1x8xf32> -> vector<16x1x128xf32>
    %81 = arith.truncf %80 : vector<16x1x128xf32> to vector<16x1x128xbf16>
    %c0_42 = arith.constant 0 : index
    %c0_43 = arith.constant 0 : index
    %c0_44 = arith.constant 0 : index
    %c0_45 = arith.constant 0 : index
    %82 = vector.load %arg4[%c0_42, %c0_43, %c0_44, %c0_45] : memref<1x16x1x128xbf16, #tpu.memory_space<vmem>>, vector<1x16x1x128xbf16>
    %83 = vector.shape_cast %82 : vector<1x16x1x128xbf16> to vector<16x1x128xbf16>
    %84 = vector.shape_cast %81 : vector<16x1x128xbf16> to vector<1x16x1x128xbf16>
    tpu.vector_store %arg4[%c0_42, %c0_43, %c0_44, %c0_45], %84 {strides = array<i32>} : memref<1x16x1x128xbf16, #tpu.memory_space<vmem>>, vector<1x16x1x128xbf16>,
    return
  }
  func.func @transform_0(%arg0: i32, %arg1: i32) -> (i32, i32, i32, i32) {
    %c0_i32 = arith.constant 0 : i32
    %c0_i32_0 = arith.constant 0 : i32
    %c0_i32_1 = arith.constant 0 : i32
    %c0_i32_2 = arith.constant 0 : i32
    return %arg0, %c0_i32, %c0_i32_0, %c0_i32_1 : i32, i32, i32, i32
  }
  func.func @transform_1(%arg0: i32, %arg1: i32) -> (i32, i32) {
    %c0_i32 = arith.constant 0 : i32
    %c0_i32_0 = arith.constant 0 : i32
    %c0_i32_1 = arith.constant 0 : i32
    return %c0_i32, %c0_i32_0 : i32, i32
  }
  func.func @transform_2(%arg0: i32, %arg1: i32) -> (i32, i32, i32, i32) {
    %c0_i32 = arith.constant 0 : i32
    %c0_i32_0 = arith.constant 0 : i32
    %c0_i32_1 = arith.constant 0 : i32
    return %arg0, %arg1, %c0_i32, %c0_i32_0 : i32, i32, i32, i32
  }
}

module attributes {stable_mosaic.version = 11 : i64} {
  func.func @kernel(%arg0: i32, %arg1: i32, %arg2: memref<1x36x9x8xbf16, #tpu.memory_space<vmem>>, %arg3: memref<72x16xbf16, #tpu.memory_space<vmem>>, %arg4: memref<1x8x1x128xbf16, #tpu.memory_space<vmem>>, %arg5: memref<1x2x16xf32, #tpu.memory_space<vmem>>) attributes {dimension_semantics = [#tpu.dimension_semantics<parallel>, #tpu.dimension_semantics<arbitrary>], iteration_bounds = array<i64: 2, 1>, scalar_prefetch = 0 : i64, scratch_operands = 0 : i64, tpu.core_type = #tpu.core_type<tc>, window_params = [{transform_indices = @transform_0, window_bounds = array<i64: 1, 36, 9, 8>}, {pipeline_mode = #tpu.pipeline_mode<synchronous>, transform_indices = @transform_1, window_bounds = array<i64: 72, 16>}, {transform_indices = @transform_2, window_bounds = array<i64: 1, 8, 1, 128>}, {transform_indices = @transform_3, window_bounds = array<i64: 1, 2, 16>}]} {
    %c8_i32 = arith.constant 8 : i32
    %0 = arith.muli %arg1, %c8_i32 : i32
    %c0_i32 = arith.constant 0 : i32
    %1 = arith.addi %c0_i32, %0 : i32
    %c0_i32_0 = arith.constant 0 : i32
    %2 = arith.addi %1, %c0_i32_0 : i32
    %c0 = arith.constant 0 : index
    %3 = arith.index_cast %2 : i32 to index
    %c0_1 = arith.constant 0 : index
    %c0_2 = arith.constant 0 : index
    %4 = vector.load %arg2[%c0, %3, %c0_1, %c0_2] : memref<1x36x9x8xbf16, #tpu.memory_space<vmem>>, vector<1x8x8x8xbf16>
    %5 = vector.shape_cast %4 : vector<1x8x8x8xbf16> to vector<8x8x8xbf16>
    %6 = vector.shape_cast %5 : vector<8x8x8xbf16> to vector<64x8xbf16>
    %c9_i32 = arith.constant 9 : i32
    %7 = arith.addi %c9_i32, %0 : i32
    %c0_i32_3 = arith.constant 0 : i32
    %8 = arith.addi %7, %c0_i32_3 : i32
    %c0_4 = arith.constant 0 : index
    %9 = arith.index_cast %8 : i32 to index
    %c0_5 = arith.constant 0 : index
    %c0_6 = arith.constant 0 : index
    %10 = vector.load %arg2[%c0_4, %9, %c0_5, %c0_6] : memref<1x36x9x8xbf16, #tpu.memory_space<vmem>>, vector<1x8x8x8xbf16>
    %11 = vector.shape_cast %10 : vector<1x8x8x8xbf16> to vector<8x8x8xbf16>
    %12 = vector.shape_cast %11 : vector<8x8x8xbf16> to vector<64x8xbf16>
    %c0_i32_7 = arith.constant 0 : i32
    %13 = arith.addi %c0_i32_7, %0 : i32
    %c0_i32_8 = arith.constant 0 : i32
    %14 = arith.addi %13, %c0_i32_8 : i32
    %c0_9 = arith.constant 0 : index
    %15 = arith.index_cast %14 : i32 to index
    %c1 = arith.constant 1 : index
    %c0_10 = arith.constant 0 : index
    %16 = vector.load %arg2[%c0_9, %15, %c1, %c0_10] : memref<1x36x9x8xbf16, #tpu.memory_space<vmem>>, vector<1x8x8x8xbf16>
    %17 = vector.shape_cast %16 : vector<1x8x8x8xbf16> to vector<8x8x8xbf16>
    %18 = vector.shape_cast %17 : vector<8x8x8xbf16> to vector<64x8xbf16>
    %c18_i32 = arith.constant 18 : i32
    %19 = arith.addi %c18_i32, %0 : i32
    %c0_i32_11 = arith.constant 0 : i32
    %20 = arith.addi %19, %c0_i32_11 : i32
    %c0_12 = arith.constant 0 : index
    %21 = arith.index_cast %20 : i32 to index
    %c0_13 = arith.constant 0 : index
    %c0_14 = arith.constant 0 : index
    %22 = vector.load %arg2[%c0_12, %21, %c0_13, %c0_14] : memref<1x36x9x8xbf16, #tpu.memory_space<vmem>>, vector<1x8x8x8xbf16>
    %23 = vector.shape_cast %22 : vector<1x8x8x8xbf16> to vector<8x8x8xbf16>
    %24 = vector.shape_cast %23 : vector<8x8x8xbf16> to vector<64x8xbf16>
    %c27_i32 = arith.constant 27 : i32
    %25 = arith.addi %c27_i32, %0 : i32
    %c0_i32_15 = arith.constant 0 : i32
    %26 = arith.addi %25, %c0_i32_15 : i32
    %c0_16 = arith.constant 0 : index
    %27 = arith.index_cast %26 : i32 to index
    %c0_17 = arith.constant 0 : index
    %c0_18 = arith.constant 0 : index
    %28 = vector.load %arg2[%c0_16, %27, %c0_17, %c0_18] : memref<1x36x9x8xbf16, #tpu.memory_space<vmem>>, vector<1x8x8x8xbf16>
    %29 = vector.shape_cast %28 : vector<1x8x8x8xbf16> to vector<8x8x8xbf16>
    %30 = vector.shape_cast %29 : vector<8x8x8xbf16> to vector<64x8xbf16>
    %c18_i32_19 = arith.constant 18 : i32
    %31 = arith.addi %c18_i32_19, %0 : i32
    %c0_i32_20 = arith.constant 0 : i32
    %32 = arith.addi %31, %c0_i32_20 : i32
    %c0_21 = arith.constant 0 : index
    %33 = arith.index_cast %32 : i32 to index
    %c1_22 = arith.constant 1 : index
    %c0_23 = arith.constant 0 : index
    %34 = vector.load %arg2[%c0_21, %33, %c1_22, %c0_23] : memref<1x36x9x8xbf16, #tpu.memory_space<vmem>>, vector<1x8x8x8xbf16>
    %35 = vector.shape_cast %34 : vector<1x8x8x8xbf16> to vector<8x8x8xbf16>
    %36 = vector.shape_cast %35 : vector<8x8x8xbf16> to vector<64x8xbf16>
    %c0_i32_24 = arith.constant 0 : i32
    %37 = arith.addi %c0_i32_24, %0 : i32
    %c1_i32 = arith.constant 1 : i32
    %38 = arith.addi %37, %c1_i32 : i32
    %c0_25 = arith.constant 0 : index
    %39 = arith.index_cast %38 : i32 to index
    %c0_26 = arith.constant 0 : index
    %c0_27 = arith.constant 0 : index
    %40 = vector.load %arg2[%c0_25, %39, %c0_26, %c0_27] : memref<1x36x9x8xbf16, #tpu.memory_space<vmem>>, vector<1x8x8x8xbf16>
    %41 = vector.shape_cast %40 : vector<1x8x8x8xbf16> to vector<8x8x8xbf16>
    %42 = vector.shape_cast %41 : vector<8x8x8xbf16> to vector<64x8xbf16>
    %c9_i32_28 = arith.constant 9 : i32
    %43 = arith.addi %c9_i32_28, %0 : i32
    %c1_i32_29 = arith.constant 1 : i32
    %44 = arith.addi %43, %c1_i32_29 : i32
    %c0_30 = arith.constant 0 : index
    %45 = arith.index_cast %44 : i32 to index
    %c0_31 = arith.constant 0 : index
    %c0_32 = arith.constant 0 : index
    %46 = vector.load %arg2[%c0_30, %45, %c0_31, %c0_32] : memref<1x36x9x8xbf16, #tpu.memory_space<vmem>>, vector<1x8x8x8xbf16>
    %47 = vector.shape_cast %46 : vector<1x8x8x8xbf16> to vector<8x8x8xbf16>
    %48 = vector.shape_cast %47 : vector<8x8x8xbf16> to vector<64x8xbf16>
    %c0_i32_33 = arith.constant 0 : i32
    %49 = arith.addi %c0_i32_33, %0 : i32
    %c1_i32_34 = arith.constant 1 : i32
    %50 = arith.addi %49, %c1_i32_34 : i32
    %c0_35 = arith.constant 0 : index
    %51 = arith.index_cast %50 : i32 to index
    %c1_36 = arith.constant 1 : index
    %c0_37 = arith.constant 0 : index
    %52 = vector.load %arg2[%c0_35, %51, %c1_36, %c0_37] : memref<1x36x9x8xbf16, #tpu.memory_space<vmem>>, vector<1x8x8x8xbf16>
    %53 = vector.shape_cast %52 : vector<1x8x8x8xbf16> to vector<8x8x8xbf16>
    %54 = vector.shape_cast %53 : vector<8x8x8xbf16> to vector<64x8xbf16>
    %55 = tpu.concatenate %6, %12, %18, %24, %30, %36, %42, %48, %54 in 1 : vector<64x8xbf16>, vector<64x8xbf16>, vector<64x8xbf16>, vector<64x8xbf16>, vector<64x8xbf16>, vector<64x8xbf16>, vector<64x8xbf16>, vector<64x8xbf16>, vector<64x8xbf16> -> vector<64x72xbf16>
    %c0_38 = arith.constant 0 : index
    %c0_39 = arith.constant 0 : index
    %56 = vector.load %arg3[%c0_38, %c0_39] : memref<72x16xbf16, #tpu.memory_space<vmem>>, vector<72x16xbf16>
    %cst = arith.constant dense<0.000000e+00> : vector<64x16xf32>
    %57 = tpu.matmul %55, %56, %cst {dimension_numbers = #tpu.dot_dimension_numbers<[1], [0], [0], [1], [0, 0, 1, 1], [], []>} : vector<64x72xbf16>, vector<72x16xbf16>, vector<64x16xf32> -> vector<64x16xf32>
    %c0_i32_40 = arith.constant 0 : i32
    %58 = arith.cmpi eq, %arg1, %c0_i32_40 : i32
    %59 = arith.extui %58 : i1 to i32
    %c0_i32_41 = arith.constant 0 : i32
    %60 = arith.cmpi ne, %59, %c0_i32_41 : i32
    scf.if %60 {
      %cst_60 = arith.constant 0.000000e+00 : f32
      %92 = vector.broadcast %cst_60 : f32 to vector<1x2x16xf32>
      %c0_61 = arith.constant 0 : index
      %c0_62 = arith.constant 0 : index
      %c0_63 = arith.constant 0 : index
      %93 = vector.load %arg5[%c0_61, %c0_62, %c0_63] : memref<1x2x16xf32, #tpu.memory_space<vmem>>, vector<1x2x16xf32>
      tpu.vector_store %arg5[%c0_61, %c0_62, %c0_63], %92 {strides = array<i32>} : memref<1x2x16xf32, #tpu.memory_space<vmem>>, vector<1x2x16xf32>,
    } else {
    }
    %c0_42 = arith.constant 0 : index
    %c0_43 = arith.constant 0 : index
    %c0_44 = arith.constant 0 : index
    %61 = vector.load %arg5[%c0_42, %c0_43, %c0_44] : memref<1x2x16xf32, #tpu.memory_space<vmem>>, vector<1x1x16xf32>
    %62 = vector.shape_cast %61 : vector<1x1x16xf32> to vector<1x16xf32>
    %cst_45 = arith.constant dense<0.000000e+00> : vector<16xf32>
    %63 = vector.multi_reduction <add>, %57, %cst_45 [0] : vector<64x16xf32> to vector<16xf32>
    %64 = vector.shape_cast %63 : vector<16xf32> to vector<1x16xf32>
    %65 = arith.addf %62, %64 : vector<1x16xf32>
    %c0_46 = arith.constant 0 : index
    %c0_47 = arith.constant 0 : index
    %c0_48 = arith.constant 0 : index
    %66 = vector.load %arg5[%c0_46, %c0_47, %c0_48] : memref<1x2x16xf32, #tpu.memory_space<vmem>>, vector<1x1x16xf32>
    %67 = vector.shape_cast %66 : vector<1x1x16xf32> to vector<1x16xf32>
    %68 = vector.shape_cast %65 : vector<1x16xf32> to vector<1x1x16xf32>
    tpu.vector_store %arg5[%c0_46, %c0_47, %c0_48], %68 {strides = array<i32>} : memref<1x2x16xf32, #tpu.memory_space<vmem>>, vector<1x1x16xf32>,
    %c0_49 = arith.constant 0 : index
    %c1_50 = arith.constant 1 : index
    %c0_51 = arith.constant 0 : index
    %69 = vector.load %arg5[%c0_49, %c1_50, %c0_51] : memref<1x2x16xf32, #tpu.memory_space<vmem>>, vector<1x1x16xf32>
    %70 = vector.shape_cast %69 : vector<1x1x16xf32> to vector<1x16xf32>
    %71 = arith.mulf %57, %57 : vector<64x16xf32>
    %cst_52 = arith.constant dense<0.000000e+00> : vector<16xf32>
    %72 = vector.multi_reduction <add>, %71, %cst_52 [0] : vector<64x16xf32> to vector<16xf32>
    %73 = vector.shape_cast %72 : vector<16xf32> to vector<1x16xf32>
    %74 = arith.addf %70, %73 : vector<1x16xf32>
    %c0_53 = arith.constant 0 : index
    %c1_54 = arith.constant 1 : index
    %c0_55 = arith.constant 0 : index
    %75 = vector.load %arg5[%c0_53, %c1_54, %c0_55] : memref<1x2x16xf32, #tpu.memory_space<vmem>>, vector<1x1x16xf32>
    %76 = vector.shape_cast %75 : vector<1x1x16xf32> to vector<1x16xf32>
    %77 = vector.shape_cast %74 : vector<1x16xf32> to vector<1x1x16xf32>
    tpu.vector_store %arg5[%c0_53, %c1_54, %c0_55], %77 {strides = array<i32>} : memref<1x2x16xf32, #tpu.memory_space<vmem>>, vector<1x1x16xf32>,
    %78 = vector.shape_cast %57 : vector<64x16xf32> to vector<8x8x16xf32>
    %79 = vector.extract_strided_slice %78 {offsets = [0, 0, 0], sizes = [8, 1, 16], strides = [1, 1, 1]} : vector<8x8x16xf32> to vector<8x1x16xf32>
    %80 = vector.extract_strided_slice %78 {offsets = [0, 1, 0], sizes = [8, 1, 16], strides = [1, 1, 1]} : vector<8x8x16xf32> to vector<8x1x16xf32>
    %81 = vector.extract_strided_slice %78 {offsets = [0, 2, 0], sizes = [8, 1, 16], strides = [1, 1, 1]} : vector<8x8x16xf32> to vector<8x1x16xf32>
    %82 = vector.extract_strided_slice %78 {offsets = [0, 3, 0], sizes = [8, 1, 16], strides = [1, 1, 1]} : vector<8x8x16xf32> to vector<8x1x16xf32>
    %83 = vector.extract_strided_slice %78 {offsets = [0, 4, 0], sizes = [8, 1, 16], strides = [1, 1, 1]} : vector<8x8x16xf32> to vector<8x1x16xf32>
    %84 = vector.extract_strided_slice %78 {offsets = [0, 5, 0], sizes = [8, 1, 16], strides = [1, 1, 1]} : vector<8x8x16xf32> to vector<8x1x16xf32>
    %85 = vector.extract_strided_slice %78 {offsets = [0, 6, 0], sizes = [8, 1, 16], strides = [1, 1, 1]} : vector<8x8x16xf32> to vector<8x1x16xf32>
    %86 = vector.extract_strided_slice %78 {offsets = [0, 7, 0], sizes = [8, 1, 16], strides = [1, 1, 1]} : vector<8x8x16xf32> to vector<8x1x16xf32>
    %87 = tpu.concatenate %79, %80, %81, %82, %83, %84, %85, %86 in 2 : vector<8x1x16xf32>, vector<8x1x16xf32>, vector<8x1x16xf32>, vector<8x1x16xf32>, vector<8x1x16xf32>, vector<8x1x16xf32>, vector<8x1x16xf32>, vector<8x1x16xf32> -> vector<8x1x128xf32>
    %88 = arith.truncf %87 : vector<8x1x128xf32> to vector<8x1x128xbf16>
    %c0_56 = arith.constant 0 : index
    %c0_57 = arith.constant 0 : index
    %c0_58 = arith.constant 0 : index
    %c0_59 = arith.constant 0 : index
    %89 = vector.load %arg4[%c0_56, %c0_57, %c0_58, %c0_59] : memref<1x8x1x128xbf16, #tpu.memory_space<vmem>>, vector<1x8x1x128xbf16>
    %90 = vector.shape_cast %89 : vector<1x8x1x128xbf16> to vector<8x1x128xbf16>
    %91 = vector.shape_cast %88 : vector<8x1x128xbf16> to vector<1x8x1x128xbf16>
    tpu.vector_store %arg4[%c0_56, %c0_57, %c0_58, %c0_59], %91 {strides = array<i32>} : memref<1x8x1x128xbf16, #tpu.memory_space<vmem>>, vector<1x8x1x128xbf16>,
    return
  }
  func.func @transform_0(%arg0: i32, %arg1: i32) -> (i32, i32, i32, i32) {
    %c0_i32 = arith.constant 0 : i32
    %c0_i32_0 = arith.constant 0 : i32
    %c0_i32_1 = arith.constant 0 : i32
    %c0_i32_2 = arith.constant 0 : i32
    return %arg0, %c0_i32, %c0_i32_0, %c0_i32_1 : i32, i32, i32, i32
  }
  func.func @transform_1(%arg0: i32, %arg1: i32) -> (i32, i32) {
    %c0_i32 = arith.constant 0 : i32
    %c0_i32_0 = arith.constant 0 : i32
    %c0_i32_1 = arith.constant 0 : i32
    return %c0_i32, %c0_i32_0 : i32, i32
  }
  func.func @transform_2(%arg0: i32, %arg1: i32) -> (i32, i32, i32, i32) {
    %c0_i32 = arith.constant 0 : i32
    %c0_i32_0 = arith.constant 0 : i32
    %c0_i32_1 = arith.constant 0 : i32
    return %arg0, %arg1, %c0_i32, %c0_i32_0 : i32, i32, i32, i32
  }
  func.func @transform_3(%arg0: i32, %arg1: i32) -> (i32, i32, i32) {
    %c0_i32 = arith.constant 0 : i32
    %c0_i32_0 = arith.constant 0 : i32
    %c0_i32_1 = arith.constant 0 : i32
    return %arg0, %c0_i32, %c0_i32_0 : i32, i32, i32
  }
}

module attributes {stable_mosaic.version = 11 : i64} {
  func.func @kernel(%arg0: i32, %arg1: memref<1x16x144xbf16, #tpu.memory_space<vmem>>, %arg2: memref<144x32xbf16, #tpu.memory_space<vmem>>, %arg3: memref<1x16x32xbf16, #tpu.memory_space<vmem>>, %arg4: memref<1x2x32xf32, #tpu.memory_space<vmem>>) attributes {dimension_semantics = [#tpu.dimension_semantics<parallel>], iteration_bounds = array<i64: 2>, scalar_prefetch = 0 : i64, scratch_operands = 0 : i64, tpu.core_type = #tpu.core_type<tc>, window_params = [{transform_indices = @transform_0, window_bounds = array<i64: 1, 16, 144>}, {pipeline_mode = #tpu.pipeline_mode<synchronous>, transform_indices = @transform_1, window_bounds = array<i64: 144, 32>}, {transform_indices = @transform_2, window_bounds = array<i64: 1, 16, 32>}, {transform_indices = @transform_3, window_bounds = array<i64: 1, 2, 32>}]} {
    %c0 = arith.constant 0 : index
    %c0_0 = arith.constant 0 : index
    %c0_1 = arith.constant 0 : index
    %0 = vector.load %arg1[%c0, %c0_0, %c0_1] : memref<1x16x144xbf16, #tpu.memory_space<vmem>>, vector<1x16x144xbf16>
    %1 = vector.shape_cast %0 : vector<1x16x144xbf16> to vector<16x144xbf16>
    %c0_2 = arith.constant 0 : index
    %c0_3 = arith.constant 0 : index
    %2 = vector.load %arg2[%c0_2, %c0_3] : memref<144x32xbf16, #tpu.memory_space<vmem>>, vector<144x32xbf16>
    %cst = arith.constant dense<0.000000e+00> : vector<16x32xf32>
    %3 = tpu.matmul %1, %2, %cst {dimension_numbers = #tpu.dot_dimension_numbers<[1], [0], [0], [1], [0, 0, 1, 1], [], []>} : vector<16x144xbf16>, vector<144x32xbf16>, vector<16x32xf32> -> vector<16x32xf32>
    %cst_4 = arith.constant dense<0.000000e+00> : vector<32xf32>
    %4 = vector.multi_reduction <add>, %3, %cst_4 [0] : vector<16x32xf32> to vector<32xf32>
    %5 = vector.shape_cast %4 : vector<32xf32> to vector<1x32xf32>
    %c0_5 = arith.constant 0 : index
    %c0_6 = arith.constant 0 : index
    %c0_7 = arith.constant 0 : index
    %6 = vector.load %arg4[%c0_5, %c0_6, %c0_7] : memref<1x2x32xf32, #tpu.memory_space<vmem>>, vector<1x1x32xf32>
    %7 = vector.shape_cast %6 : vector<1x1x32xf32> to vector<1x32xf32>
    %8 = vector.shape_cast %5 : vector<1x32xf32> to vector<1x1x32xf32>
    tpu.vector_store %arg4[%c0_5, %c0_6, %c0_7], %8 {strides = array<i32>} : memref<1x2x32xf32, #tpu.memory_space<vmem>>, vector<1x1x32xf32>,
    %9 = arith.mulf %3, %3 : vector<16x32xf32>
    %cst_8 = arith.constant dense<0.000000e+00> : vector<32xf32>
    %10 = vector.multi_reduction <add>, %9, %cst_8 [0] : vector<16x32xf32> to vector<32xf32>
    %11 = vector.shape_cast %10 : vector<32xf32> to vector<1x32xf32>
    %c0_9 = arith.constant 0 : index
    %c1 = arith.constant 1 : index
    %c0_10 = arith.constant 0 : index
    %12 = vector.load %arg4[%c0_9, %c1, %c0_10] : memref<1x2x32xf32, #tpu.memory_space<vmem>>, vector<1x1x32xf32>
    %13 = vector.shape_cast %12 : vector<1x1x32xf32> to vector<1x32xf32>
    %14 = vector.shape_cast %11 : vector<1x32xf32> to vector<1x1x32xf32>
    tpu.vector_store %arg4[%c0_9, %c1, %c0_10], %14 {strides = array<i32>} : memref<1x2x32xf32, #tpu.memory_space<vmem>>, vector<1x1x32xf32>,
    %15 = arith.truncf %3 : vector<16x32xf32> to vector<16x32xbf16>
    %c0_11 = arith.constant 0 : index
    %c0_12 = arith.constant 0 : index
    %c0_13 = arith.constant 0 : index
    %16 = vector.load %arg3[%c0_11, %c0_12, %c0_13] : memref<1x16x32xbf16, #tpu.memory_space<vmem>>, vector<1x16x32xbf16>
    %17 = vector.shape_cast %16 : vector<1x16x32xbf16> to vector<16x32xbf16>
    %18 = vector.shape_cast %15 : vector<16x32xbf16> to vector<1x16x32xbf16>
    tpu.vector_store %arg3[%c0_11, %c0_12, %c0_13], %18 {strides = array<i32>} : memref<1x16x32xbf16, #tpu.memory_space<vmem>>, vector<1x16x32xbf16>,
    return
  }
  func.func @transform_0(%arg0: i32) -> (i32, i32, i32) {
    %c0_i32 = arith.constant 0 : i32
    %c0_i32_0 = arith.constant 0 : i32
    %c0_i32_1 = arith.constant 0 : i32
    return %arg0, %c0_i32, %c0_i32_0 : i32, i32, i32
  }
  func.func @transform_1(%arg0: i32) -> (i32, i32) {
    %c0_i32 = arith.constant 0 : i32
    %c0_i32_0 = arith.constant 0 : i32
    %c0_i32_1 = arith.constant 0 : i32
    return %c0_i32, %c0_i32_0 : i32, i32
  }
  func.func @transform_2(%arg0: i32) -> (i32, i32, i32) {
    %c0_i32 = arith.constant 0 : i32
    %c0_i32_0 = arith.constant 0 : i32
    %c0_i32_1 = arith.constant 0 : i32
    return %arg0, %c0_i32, %c0_i32_0 : i32, i32, i32
  }
  func.func @transform_3(%arg0: i32) -> (i32, i32, i32) {
    %c0_i32 = arith.constant 0 : i32
    %c0_i32_0 = arith.constant 0 : i32
    %c0_i32_1 = arith.constant 0 : i32
    return %arg0, %c0_i32, %c0_i32_0 : i32, i32, i32
  }
}

module attributes {stable_mosaic.version = 11 : i64} {
  func.func @kernel(%arg0: i32, %arg1: memref<1x4x288xbf16, #tpu.memory_space<vmem>>, %arg2: memref<288x8xbf16, #tpu.memory_space<vmem>>, %arg3: memref<1x4x8xbf16, #tpu.memory_space<vmem>>, %arg4: memref<1x2x8xf32, #tpu.memory_space<vmem>>) attributes {dimension_semantics = [#tpu.dimension_semantics<parallel>], iteration_bounds = array<i64: 2>, scalar_prefetch = 0 : i64, scratch_operands = 0 : i64, tpu.core_type = #tpu.core_type<tc>, window_params = [{transform_indices = @transform_0, window_bounds = array<i64: 1, 4, 288>}, {pipeline_mode = #tpu.pipeline_mode<synchronous>, transform_indices = @transform_1, window_bounds = array<i64: 288, 8>}, {transform_indices = @transform_2, window_bounds = array<i64: 1, 4, 8>}, {transform_indices = @transform_3, window_bounds = array<i64: 1, 2, 8>}]} {
    %c0 = arith.constant 0 : index
    %c0_0 = arith.constant 0 : index
    %c0_1 = arith.constant 0 : index
    %0 = vector.load %arg1[%c0, %c0_0, %c0_1] : memref<1x4x288xbf16, #tpu.memory_space<vmem>>, vector<1x4x288xbf16>
    %1 = vector.shape_cast %0 : vector<1x4x288xbf16> to vector<4x288xbf16>
    %c0_2 = arith.constant 0 : index
    %c0_3 = arith.constant 0 : index
    %2 = vector.load %arg2[%c0_2, %c0_3] : memref<288x8xbf16, #tpu.memory_space<vmem>>, vector<288x8xbf16>
    %cst = arith.constant dense<0.000000e+00> : vector<4x8xf32>
    %3 = tpu.matmul %1, %2, %cst {dimension_numbers = #tpu.dot_dimension_numbers<[1], [0], [0], [1], [0, 0, 1, 1], [], []>} : vector<4x288xbf16>, vector<288x8xbf16>, vector<4x8xf32> -> vector<4x8xf32>
    %cst_4 = arith.constant dense<0.000000e+00> : vector<8xf32>
    %4 = vector.multi_reduction <add>, %3, %cst_4 [0] : vector<4x8xf32> to vector<8xf32>
    %5 = vector.shape_cast %4 : vector<8xf32> to vector<1x8xf32>
    %c0_5 = arith.constant 0 : index
    %c0_6 = arith.constant 0 : index
    %c0_7 = arith.constant 0 : index
    %6 = vector.load %arg4[%c0_5, %c0_6, %c0_7] : memref<1x2x8xf32, #tpu.memory_space<vmem>>, vector<1x1x8xf32>
    %7 = vector.shape_cast %6 : vector<1x1x8xf32> to vector<1x8xf32>
    %8 = vector.shape_cast %5 : vector<1x8xf32> to vector<1x1x8xf32>
    tpu.vector_store %arg4[%c0_5, %c0_6, %c0_7], %8 {strides = array<i32>} : memref<1x2x8xf32, #tpu.memory_space<vmem>>, vector<1x1x8xf32>,
    %9 = arith.mulf %3, %3 : vector<4x8xf32>
    %cst_8 = arith.constant dense<0.000000e+00> : vector<8xf32>
    %10 = vector.multi_reduction <add>, %9, %cst_8 [0] : vector<4x8xf32> to vector<8xf32>
    %11 = vector.shape_cast %10 : vector<8xf32> to vector<1x8xf32>
    %c0_9 = arith.constant 0 : index
    %c1 = arith.constant 1 : index
    %c0_10 = arith.constant 0 : index
    %12 = vector.load %arg4[%c0_9, %c1, %c0_10] : memref<1x2x8xf32, #tpu.memory_space<vmem>>, vector<1x1x8xf32>
    %13 = vector.shape_cast %12 : vector<1x1x8xf32> to vector<1x8xf32>
    %14 = vector.shape_cast %11 : vector<1x8xf32> to vector<1x1x8xf32>
    tpu.vector_store %arg4[%c0_9, %c1, %c0_10], %14 {strides = array<i32>} : memref<1x2x8xf32, #tpu.memory_space<vmem>>, vector<1x1x8xf32>,
    %15 = arith.truncf %3 : vector<4x8xf32> to vector<4x8xbf16>
    %c0_11 = arith.constant 0 : index
    %c0_12 = arith.constant 0 : index
    %c0_13 = arith.constant 0 : index
    %16 = vector.load %arg3[%c0_11, %c0_12, %c0_13] : memref<1x4x8xbf16, #tpu.memory_space<vmem>>, vector<1x4x8xbf16>
    %17 = vector.shape_cast %16 : vector<1x4x8xbf16> to vector<4x8xbf16>
    %18 = vector.shape_cast %15 : vector<4x8xbf16> to vector<1x4x8xbf16>
    tpu.vector_store %arg3[%c0_11, %c0_12, %c0_13], %18 {strides = array<i32>} : memref<1x4x8xbf16, #tpu.memory_space<vmem>>, vector<1x4x8xbf16>,
    return
  }
  func.func @transform_0(%arg0: i32) -> (i32, i32, i32) {
    %c0_i32 = arith.constant 0 : i32
    %c0_i32_0 = arith.constant 0 : i32
    %c0_i32_1 = arith.constant 0 : i32
    return %arg0, %c0_i32, %c0_i32_0 : i32, i32, i32
  }
  func.func @transform_1(%arg0: i32) -> (i32, i32) {
    %c0_i32 = arith.constant 0 : i32
    %c0_i32_0 = arith.constant 0 : i32
    %c0_i32_1 = arith.constant 0 : i32
    return %c0_i32, %c0_i32_0 : i32, i32
  }
  func.func @transform_2(%arg0: i32) -> (i32, i32, i32) {
    %c0_i32 = arith.constant 0 : i32
    %c0_i32_0 = arith.constant 0 : i32
    %c0_i32_1 = arith.constant 0 : i32
    return %arg0, %c0_i32, %c0_i32_0 : i32, i32, i32
  }
  func.func @transform_3(%arg0: i32) -> (i32, i32, i32) {
    %c0_i32 = arith.constant 0 : i32
    %c0_i32_0 = arith.constant 0 : i32
    %c0_i32_1 = arith.constant 0 : i32
    return %arg0, %c0_i32, %c0_i32_0 : i32, i32, i32
  }
}

module attributes {stable_mosaic.version = 11 : i64} {
  func.func @kernel(%arg0: i32, %arg1: memref<1x4x72xbf16, #tpu.memory_space<vmem>>, %arg2: memref<72x1xbf16, #tpu.memory_space<vmem>>, %arg3: memref<1x4x1xf32, #tpu.memory_space<vmem>>) attributes {dimension_semantics = [#tpu.dimension_semantics<parallel>], iteration_bounds = array<i64: 2>, scalar_prefetch = 0 : i64, scratch_operands = 0 : i64, tpu.core_type = #tpu.core_type<tc>, window_params = [{transform_indices = @transform_0, window_bounds = array<i64: 1, 4, 72>}, {pipeline_mode = #tpu.pipeline_mode<synchronous>, transform_indices = @transform_1, window_bounds = array<i64: 72, 1>}, {transform_indices = @transform_2, window_bounds = array<i64: 1, 4, 1>}]} {
    %c0 = arith.constant 0 : index
    %c0_0 = arith.constant 0 : index
    %c0_1 = arith.constant 0 : index
    %0 = vector.load %arg1[%c0, %c0_0, %c0_1] : memref<1x4x72xbf16, #tpu.memory_space<vmem>>, vector<1x4x72xbf16>
    %1 = vector.shape_cast %0 : vector<1x4x72xbf16> to vector<4x72xbf16>
    %c0_2 = arith.constant 0 : index
    %c0_3 = arith.constant 0 : index
    %2 = vector.load %arg2[%c0_2, %c0_3] : memref<72x1xbf16, #tpu.memory_space<vmem>>, vector<72x1xbf16>
    %cst = arith.constant dense<0.000000e+00> : vector<4x1xf32>
    %3 = tpu.matmul %1, %2, %cst {dimension_numbers = #tpu.dot_dimension_numbers<[1], [0], [0], [1], [0, 0, 1, 1], [], []>} : vector<4x72xbf16>, vector<72x1xbf16>, vector<4x1xf32> -> vector<4x1xf32>
    %4 = math.absf %3 : vector<4x1xf32>
    %cst_4 = arith.constant 0.000000e+00 : f32
    %5 = vector.broadcast %cst_4 : f32 to vector<4x1xf32>
    %6 = arith.subf %5, %4 : vector<4x1xf32>
    %7 = math.exp %6 : vector<4x1xf32>
    %cst_5 = arith.constant 0.000000e+00 : f32
    %8 = vector.broadcast %cst_5 : f32 to vector<4x1xf32>
    %9 = arith.cmpf oge, %3, %8 : vector<4x1xf32>
    %cst_6 = arith.constant 1.000000e+00 : f32
    %10 = vector.broadcast %cst_6 : f32 to vector<4x1xf32>
    %11 = arith.select %9, %10, %7 : vector<4x1xi1>, vector<4x1xf32>
    %cst_7 = arith.constant 1.000000e+00 : f32
    %12 = vector.broadcast %cst_7 : f32 to vector<4x1xf32>
    %13 = arith.addf %12, %7 : vector<4x1xf32>
    %14 = arith.divf %11, %13 : vector<4x1xf32>
    %c0_8 = arith.constant 0 : index
    %c0_9 = arith.constant 0 : index
    %c0_10 = arith.constant 0 : index
    %15 = vector.load %arg3[%c0_8, %c0_9, %c0_10] : memref<1x4x1xf32, #tpu.memory_space<vmem>>, vector<1x4x1xf32>
    %16 = vector.shape_cast %15 : vector<1x4x1xf32> to vector<4x1xf32>
    %17 = vector.shape_cast %14 : vector<4x1xf32> to vector<1x4x1xf32>
    tpu.vector_store %arg3[%c0_8, %c0_9, %c0_10], %17 {strides = array<i32>} : memref<1x4x1xf32, #tpu.memory_space<vmem>>, vector<1x4x1xf32>,
    return
  }
  func.func @transform_0(%arg0: i32) -> (i32, i32, i32) {
    %c0_i32 = arith.constant 0 : i32
    %c0_i32_0 = arith.constant 0 : i32
    %c0_i32_1 = arith.constant 0 : i32
    return %arg0, %c0_i32, %c0_i32_0 : i32, i32, i32
  }
  func.func @transform_1(%arg0: i32) -> (i32, i32) {
    %c0_i32 = arith.constant 0 : i32
    %c0_i32_0 = arith.constant 0 : i32
    %c0_i32_1 = arith.constant 0 : i32
    return %c0_i32, %c0_i32_0 : i32, i32
  }
  func.func @transform_2(%arg0: i32) -> (i32, i32, i32) {
    %c0_i32 = arith.constant 0 : i32
    %c0_i32_0 = arith.constant 0 : i32
    %c0_i32_1 = arith.constant 0 : i32
    return %arg0, %c0_i32, %c0_i32_0 : i32, i32, i32
  }
}

</mosaic_0001>

<llo_original>
// kernel: discriminator_forward.6
$region0: #{discriminator_forward.6}
  #allocation0 [shape = 'u32[]', space=smem, size = 0x4, offset = 0x4, fixed_abs, tag = 'smem constant byte address 0x4 - core index']
  #allocation1 [shape = 'u32[72,128]{1,0:T(1,128)}', space=vmem, size = 0x9000, scoped, tag = 'internal scratch']
  %s0 = inlined_call_operand.vmem [shape: bf16[2,36,9,8], index: 0, kind: input, shape index: {}]
  %s1 = inlined_call_operand.vmem [shape: bf16[72,16], index: 1, kind: input, shape index: {}]
  %s2 = inlined_call_operand.vmem [shape: bf16[2,8,1,128], index: 2, kind: output, shape index: {0}]
  %s3 = inlined_call_operand.vmem [shape: f32[2,2,16], index: 3, kind: output, shape index: {1}]
  %4 = xla_tuple %s2, %s3
  %s5 = sld [smem:[#allocation0]]
  $region53: #{discriminator_forward.6} parent=0
    _
  %s7 = ssub.s32 1, %s5
  %s8 = scalar_select 0, %s7, %s5
  loop: start=0, step=1, limit=4
  $region2: #{discriminator_forward.6} parent=0 // loop_pre_header
    _
  $region3: #{discriminator_forward.6} parent=0 // loop_header
    %s10 = sphi 0, %s14
    %p11 = scmp.ge.s32.totalorder %s10, 4
    %s17 = sphi 0, %s29
    %s18 = sphi 0, %s25
    %s19 = sphi 0, %s17
    %s20 = sphi 0, %s18
    %s21 = sphi 0, %s19
    %s22 = sphi 0, %s20
    %s32 = sphi 0, %s34
    %s35 = sphi 0, %s32
    %s36 = sphi 0, %s35
    %s52 = sphi 0, %s36
    %s56 = sphi 0, %s56
    %s58 = sphi 0, %s56
    %s59 = sphi 0, %s58
    %s73 = sphi 0, %s59
    %s81 = sphi 0, %s83
    %s84 = sphi 0, %s81
    %s85 = sphi 0, %s84
    %s101 = sphi 0, %s85
    %s107 = sphi 0, %s109
    %s110 = sphi 0, %s107
    %s111 = sphi 0, %s110
    %s127 = sphi 0, %s111
  $region4: #{discriminator_forward.6} parent=0 // loop_header_branch
    %13 = sbr.rel (%p11) target = $region8
  $region5: #{discriminator_forward.6} parent=0 // loop_body
    %s15 = ssub.s32 %s10, 1
    %s16 = ssub.s32 %s10, 2
    %s23 = sadd.s32 1, %s18
    %p24 = scmp.ge.s32.totalorder %s23, 1
    %s25 = scalar_select %p24, 0, %s23
    %s26 = sadd.s32 1, %s17
    %s27 = scalar_select %p24, %s26, %s17
    %p28 = scmp.ge.s32.totalorder %s27, 2
    %s29 = scalar_select %p28, 0, %s27
    %s30 = ssub.s32 %s17, %s29
    %p31 = scmp.eq.s32.totalorder %s30, 0
    %s33 = sadd.s32 %s32, 1
    %s34 = scalar_select %p31, %s32, %s33
    %p37 = pneg %p31
    %p38 = scmp.eq.s32.totalorder %s10, 1
    %p39 = por %p37, %p38
    %p40 = scmp.ne.s32.totalorder %s32, %s35
    %p41 = scmp.eq.s32.totalorder %s10, 0
    %p42 = por %p40, %p41
    %p43 = scmp.ne.s32.totalorder %s32, %s35
    %p44 = scmp.eq.s32.totalorder %s15, 1
    %p45 = por %p43, %p44
    %p46 = scmp.ne.s32.totalorder %s35, %s36
    %p47 = scmp.eq.s32.totalorder %s15, 0
    %p48 = por %p46, %p47
    %p49 = scmp.ne.s32.totalorder %s35, %s36
    %p50 = scmp.eq.s32.totalorder %s16, 1
    %p51 = por %p49, %p50
    %p53 = scmp.ne.s32.totalorder %s36, %s52
    %p54 = scmp.eq.s32.totalorder %s16, 0
    %p55 = por %p53, %p54
    %s57 = sadd.s32 %s56, 1
    %p60 = scmp.eq.s32.totalorder %s10, 1
    %p61 = scmp.ne.s32.totalorder %s56, %s58
    %p62 = scmp.eq.s32.totalorder %s10, 0
    %p63 = por %p61, %p62
    %p64 = scmp.ne.s32.totalorder %s56, %s58
    %p65 = scmp.eq.s32.totalorder %s15, 1
    %p66 = por %p64, %p65
    %p67 = scmp.ne.s32.totalorder %s58, %s59
    %p68 = scmp.eq.s32.totalorder %s15, 0
    %p69 = por %p67, %p68
    %p70 = scmp.ne.s32.totalorder %s58, %s59
    %p71 = scmp.eq.s32.totalorder %s16, 1
    %p72 = por %p70, %p71
    %p74 = scmp.ne.s32.totalorder %s59, %s73
    %p75 = scmp.eq.s32.totalorder %s16, 0
    %p76 = por %p74, %p75
    %s77 = ssub.s32 %s17, %s29
    %s78 = ssub.s32 %s18, %s25
    %s79 = sor.u32 %s77, %s78
    %p80 = scmp.eq.s32.totalorder %s79, 0
    %s82 = sadd.s32 %s81, 1
    %s83 = scalar_select %p80, %s81, %s82
    %p86 = pneg %p80
    %p87 = scmp.eq.s32.totalorder %s10, 1
    %p88 = por %p86, %p87
    %p89 = scmp.ne.s32.totalorder %s81, %s84
    %p90 = scmp.eq.s32.totalorder %s10, 0
    %p91 = por %p89, %p90
    %p92 = scmp.ne.s32.totalorder %s81, %s84
    %p93 = scmp.eq.s32.totalorder %s15, 1
    %p94 = por %p92, %p93
    %p95 = scmp.ne.s32.totalorder %s84, %s85
    %p96 = scmp.eq.s32.totalorder %s15, 0
    %p97 = por %p95, %p96
    %p98 = scmp.ne.s32.totalorder %s84, %s85
    %p99 = scmp.eq.s32.totalorder %s16, 1
    %p100 = por %p98, %p99
    %p102 = scmp.ne.s32.totalorder %s85, %s101
    %p103 = scmp.eq.s32.totalorder %s16, 0
    %p104 = por %p102, %p103
    %s105 = ssub.s32 %s17, %s29
    %p106 = scmp.eq.s32.totalorder %s105, 0
    %s108 = sadd.s32 %s107, 1
    %s109 = scalar_select %p106, %s107, %s108
    %p112 = pneg %p106
    %p113 = scmp.eq.s32.totalorder %s10, 1
    %p114 = por %p112, %p113
    %p115 = scmp.ne.s32.totalorder %s107, %s110
    %p116 = scmp.eq.s32.totalorder %s10, 0
    %p117 = por %p115, %p116
    %p118 = scmp.ne.s32.totalorder %s107, %s110
    %p119 = scmp.eq.s32.totalorder %s15, 1
    %p120 = por %p118, %p119
    %p121 = scmp.ne.s32.totalorder %s110, %s111
    %p122 = scmp.eq.s32.totalorder %s15, 0
    %p123 = por %p121, %p122
    %p124 = scmp.ne.s32.totalorder %s110, %s111
    %p125 = scmp.eq.s32.totalorder %s16, 1
    %p126 = por %p124, %p125
    %p128 = scmp.ne.s32.totalorder %s111, %s127
    %p129 = scmp.eq.s32.totalorder %s16, 0
    %p130 = por %p128, %p129
    %p131 = scmp.le.s32.totalorder 1, %s10
    %p132 = scmp.lt.s32.totalorder %s10, 3
    %p133 = pnand %p131, %p132
    %p134 = pneg %p133
    // Predicated region
    $region9: #{discriminator_forward.6} parent=5 // pred_check
      _
    $region10: #{discriminator_forward.6} parent=5 // pred_check_branch
      %136 = sbr.rel (%p133) target = $region12
    $region11: #{discriminator_forward.6} parent=5 // pred_region
      %s137 = ssub.s32 %s10, 1
      // Predicated region
      $region13: #{discriminator_forward.6} parent=11 // pred_check
        %p138 = pneg %p69
      $region14: #{discriminator_forward.6} parent=11 // pred_check_branch
        %140 = sbr.rel (%p138) target = $region16
      $region15: #{discriminator_forward.6} parent=11 // pred_region
        _
      $region16: #{discriminator_forward.6} parent=11 // pred_fallthru
        _
    $region12: #{discriminator_forward.6} parent=5 // pred_fallthru
      _
    %p141 = scmp.lt.s32.totalorder %s10, 2
    // Predicated region
    $region17: #{discriminator_forward.6} parent=5 // pred_check
      %p142 = pneg %p141
    $region18: #{discriminator_forward.6} parent=5 // pred_check_branch
      %144 = sbr.rel (%p142) target = $region20
    $region19: #{discriminator_forward.6} parent=5 // pred_region
      // Predicated region
      $region21: #{discriminator_forward.6} parent=19 // pred_check
        %p145 = pneg %p42
      $region22: #{discriminator_forward.6} parent=19 // pred_check_branch
        %147 = sbr.rel (%p145) target = $region24
      $region23: #{discriminator_forward.6} parent=19 // pred_region
        %p148 = scmp.lt.s32.totalorder %s17, 1
        %s149 = scalar_select %p148, %s17, 1
        %s150 = smul.addr %s149, 72
        %s151 = smul.addr %s150, 4
        %s152 = scalar_lea.vmem %s0, %s151
      $region24: #{discriminator_forward.6} parent=19 // pred_fallthru
        _
    $region20: #{discriminator_forward.6} parent=5 // pred_fallthru
      _
    %p153 = scmp.le.s32.totalorder 1, %s10
    %p154 = scmp.lt.s32.totalorder %s10, 3
    %p155 = pnand %p153, %p154
    %p156 = pneg %p155
    // Predicated region
    $region25: #{discriminator_forward.6} parent=5 // pred_check
      _
    $region26: #{discriminator_forward.6} parent=5 // pred_check_branch
      %158 = sbr.rel (%p155) target = $region28
    $region27: #{discriminator_forward.6} parent=5 // pred_region
      %s159 = ssub.s32 %s10, 1
      %p160 = scmp.lt.s32.totalorder %s19, 1
      %s161 = scalar_select %p160, %s19, 1
      %s162 = smul.addr %s161, 72
      %s163 = smul.addr %s162, 4
      %s164 = scalar_lea.vmem %s0, %s163
      %p165 = pneg %p48
      %p166 = pneg %p45
      %p167 = pneg %p69
      %p168 = pneg %p66
      %p169 = pneg %p97
      %p170 = pneg %p94
      %s171 = smul.u32 8, %s20
      %p172 = scmp.lt.s32.totalorder %s19, 1
      %s173 = scalar_select %p172, %s19, 1
      %p174 = scmp.lt.s32.totalorder %s171, 7
      %s175 = scalar_select %p174, %s171, 7
      %s176 = smul.addr %s173, 8
      %s177 = sadd.s32 %s175, %s176
      %s178 = scalar_lea.vmem %s2, %s177
      %p179 = pneg %p123
      %p180 = pneg %p120
      %p181 = scmp.lt.s32.totalorder %s19, 1
      %s182 = scalar_select %p181, %s19, 1
      %s183 = smul.addr %s182, 2
      %s184 = scalar_lea.vmem %s3, %s183
      %p185 = scmp.lt.s32.totalorder %s19, 1
      %s186 = scalar_select %p185, %s19, 1
      %s187 = smul.addr %s186, 72
      %s188 = smul.addr %s187, 4
      %s189 = scalar_lea.vmem %s0, %s188
      %s190 = smul.u32 8, %s20
      %p191 = scmp.lt.s32.totalorder %s19, 1
      %s192 = scalar_select %p191, %s19, 1
      %p193 = scmp.lt.s32.totalorder %s190, 7
      %s194 = scalar_select %p193, %s190, 7
      %s195 = smul.addr %s192, 8
      %s196 = sadd.s32 %s194, %s195
      %s197 = scalar_lea.vmem %s2, %s196
      %s198 = smul.u32 8, %s20
      %p199 = scmp.lt.s32.totalorder %s19, 1
      %s200 = scalar_select %p199, %s19, 1
      %s201 = smul.addr %s200, 2
      %s202 = scalar_lea.vmem %s3, %s201
      %s204 = smul.u32 %s20, 8
      %s205 = smul.u32 %s204, 2
      %s206 = smul.addr %s205, 4
      %s207 = scalar_lea.vmem %s189, %s206
      %v208 = vld [vmem:[%s207] sm:$0xf]
      %v209 = vld [vmem:[%s207 + $0x8] sm:$0xf]
      %v210 = vld [vmem:[%s207 + $0x10] sm:$0xf]
      %v211 = vld [vmem:[%s207 + $0x18] sm:$0xf]
      %v212 = vld [vmem:[%s207 + $0x20] sm:$0xf]
      %v213 = vld [vmem:[%s207 + $0x28] sm:$0xf]
      %v214 = vld [vmem:[%s207 + $0x30] sm:$0xf]
      %v215 = vld [vmem:[%s207 + $0x38] sm:$0xf]
      %s216 = sadd.s32 %s204, 9
      %s217 = smul.u32 %s216, 2
      %s218 = smul.addr %s217, 4
      %s219 = scalar_lea.vmem %s189, %s218
      %v220 = vld [vmem:[%s219] sm:$0xf]
      %v221 = vld [vmem:[%s219 + $0x8] sm:$0xf]
      %v222 = vld [vmem:[%s219 + $0x10] sm:$0xf]
      %v223 = vld [vmem:[%s219 + $0x18] sm:$0xf]
      %v224 = vld [vmem:[%s219 + $0x20] sm:$0xf]
      %v225 = vld [vmem:[%s219 + $0x28] sm:$0xf]
      %v226 = vld [vmem:[%s219 + $0x30] sm:$0xf]
      %v227 = vld [vmem:[%s219 + $0x38] sm:$0xf]
      %v228 = vld [vmem:[%s207 + $0x4] sm:$0x1]
      %v229 = vld [vmem:[%s207 + $0xc] sm:$0x1]
      %v230 = vld [vmem:[%s207 + $0x14] sm:$0x1]
      %v231 = vld [vmem:[%s207 + $0x1c] sm:$0x1]
      %v232 = vld [vmem:[%s207 + $0x24] sm:$0x1]
      %v233 = vld [vmem:[%s207 + $0x2c] sm:$0x1]
      %v234 = vld [vmem:[%s207 + $0x34] sm:$0x1]
      %v235 = vld [vmem:[%s207 + $0x3c] sm:$0x1]
      %vm236 = vsmask.f32 3328
      %vm237 = vsmask.f32 7440
      %vm238 = vmor %vm236, %vm237
      %v240 = vshrl.u32 %v208, 16
      %v242 = vrot.slane %v240, 4
      %v243 = vshll.u32 %v208, 16
      %v245 = vrot.slane %v243, 5
      %v246 = vor.u32 %v242, %v245
      %v247 = vrot.slane %v246, 4
      %v249 = vshll.u32 %v228, 16
      %v251 = vrot.slane %v249, 5
      %v252 = vsel %vm238, %v247, %v251
      %v254 = vshrl.u32 %v209, 16
      %v256 = vrot.slane %v254, 4
      %v257 = vshll.u32 %v209, 16
      %v259 = vrot.slane %v257, 5
      %v260 = vor.u32 %v256, %v259
      %v261 = vrot.slane %v260, 4
      %v263 = vshll.u32 %v229, 16
      %v265 = vrot.slane %v263, 5
      %v266 = vsel %vm238, %v261, %v265
      %v268 = vshrl.u32 %v210, 16
      %v270 = vrot.slane %v268, 4
      %v271 = vshll.u32 %v210, 16
      %v273 = vrot.slane %v271, 5
      %v274 = vor.u32 %v270, %v273
      %v275 = vrot.slane %v274, 4
      %v277 = vshll.u32 %v230, 16
      %v279 = vrot.slane %v277, 5
      %v280 = vsel %vm238, %v275, %v279
      %v282 = vshrl.u32 %v211, 16
      %v284 = vrot.slane %v282, 4
      %v285 = vshll.u32 %v211, 16
      %v287 = vrot.slane %v285, 5
      %v288 = vor.u32 %v284, %v287
      %v289 = vrot.slane %v288, 4
      %v291 = vshll.u32 %v231, 16
      %v293 = vrot.slane %v291, 5
      %v294 = vsel %vm238, %v289, %v293
      %v296 = vshrl.u32 %v212, 16
      %v298 = vrot.slane %v296, 4
      %v299 = vshll.u32 %v212, 16
      %v301 = vrot.slane %v299, 5
      %v302 = vor.u32 %v298, %v301
      %v303 = vrot.slane %v302, 4
      %v305 = vshll.u32 %v232, 16
      %v307 = vrot.slane %v305, 5
      %v308 = vsel %vm238, %v303, %v307
      %v310 = vshrl.u32 %v213, 16
      %v312 = vrot.slane %v310, 4
      %v313 = vshll.u32 %v213, 16
      %v315 = vrot.slane %v313, 5
      %v316 = vor.u32 %v312, %v315
      %v317 = vrot.slane %v316, 4
      %v319 = vshll.u32 %v233, 16
      %v321 = vrot.slane %v319, 5
      %v322 = vsel %vm238, %v317, %v321
      %v324 = vshrl.u32 %v214, 16
      %v326 = vrot.slane %v324, 4
      %v327 = vshll.u32 %v214, 16
      %v329 = vrot.slane %v327, 5
      %v330 = vor.u32 %v326, %v329
      %v331 = vrot.slane %v330, 4
      %v333 = vshll.u32 %v234, 16
      %v335 = vrot.slane %v333, 5
      %v336 = vsel %vm238, %v331, %v335
      %v338 = vshrl.u32 %v215, 16
      %v340 = vrot.slane %v338, 4
      %v341 = vshll.u32 %v215, 16
      %v343 = vrot.slane %v341, 5
      %v344 = vor.u32 %v340, %v343
      %v345 = vrot.slane %v344, 4
      %v347 = vshll.u32 %v235, 16
      %v349 = vrot.slane %v347, 5
      %v350 = vsel %vm238, %v345, %v349
      %s351 = sadd.s32 %s204, 18
      %s352 = smul.u32 %s351, 2
      %s353 = smul.addr %s352, 4
      %s354 = scalar_lea.vmem %s189, %s353
      %v355 = vld [vmem:[%s354] sm:$0xf]
      %v356 = vld [vmem:[%s354 + $0x8] sm:$0xf]
      %v357 = vld [vmem:[%s354 + $0x10] sm:$0xf]
      %v358 = vld [vmem:[%s354 + $0x18] sm:$0xf]
      %v359 = vld [vmem:[%s354 + $0x20] sm:$0xf]
      %v360 = vld [vmem:[%s354 + $0x28] sm:$0xf]
      %v361 = vld [vmem:[%s354 + $0x30] sm:$0xf]
      %v362 = vld [vmem:[%s354 + $0x38] sm:$0xf]
      %s363 = sadd.s32 %s204, 27
      %s364 = smul.u32 %s363, 2
      %s365 = smul.addr %s364, 4
      %s366 = scalar_lea.vmem %s189, %s365
      %v367 = vld [vmem:[%s366] sm:$0xf]
      %v368 = vld [vmem:[%s366 + $0x8] sm:$0xf]
      %v369 = vld [vmem:[%s366 + $0x10] sm:$0xf]
      %v370 = vld [vmem:[%s366 + $0x18] sm:$0xf]
      %v371 = vld [vmem:[%s366 + $0x20] sm:$0xf]
      %v372 = vld [vmem:[%s366 + $0x28] sm:$0xf]
      %v373 = vld [vmem:[%s366 + $0x30] sm:$0xf]
      %v374 = vld [vmem:[%s366 + $0x38] sm:$0xf]
      %v375 = vld [vmem:[%s354 + $0x4] sm:$0x1]
      %v376 = vld [vmem:[%s354 + $0xc] sm:$0x1]
      %v377 = vld [vmem:[%s354 + $0x14] sm:$0x1]
      %v378 = vld [vmem:[%s354 + $0x1c] sm:$0x1]
      %v379 = vld [vmem:[%s354 + $0x24] sm:$0x1]
      %v380 = vld [vmem:[%s354 + $0x2c] sm:$0x1]
      %v381 = vld [vmem:[%s354 + $0x34] sm:$0x1]
      %v382 = vld [vmem:[%s354 + $0x3c] sm:$0x1]
      %v384 = vshrl.u32 %v355, 16
      %v386 = vrot.slane %v384, 4
      %v387 = vshll.u32 %v355, 16
      %v389 = vrot.slane %v387, 5
      %v390 = vor.u32 %v386, %v389
      %v391 = vrot.slane %v390, 4
      %v393 = vshll.u32 %v375, 16
      %v395 = vrot.slane %v393, 5
      %v396 = vsel %vm238, %v391, %v395
      %v398 = vshrl.u32 %v356, 16
      %v400 = vrot.slane %v398, 4
      %v401 = vshll.u32 %v356, 16
      %v403 = vrot.slane %v401, 5
      %v404 = vor.u32 %v400, %v403
      %v405 = vrot.slane %v404, 4
      %v407 = vshll.u32 %v376, 16
      %v409 = vrot.slane %v407, 5
      %v410 = vsel %vm238, %v405, %v409
      %v412 = vshrl.u32 %v357, 16
      %v414 = vrot.slane %v412, 4
      %v415 = vshll.u32 %v357, 16
      %v417 = vrot.slane %v415, 5
      %v418 = vor.u32 %v414, %v417
      %v419 = vrot.slane %v418, 4
      %v421 = vshll.u32 %v377, 16
      %v423 = vrot.slane %v421, 5
      %v424 = vsel %vm238, %v419, %v423
      %v426 = vshrl.u32 %v358, 16
      %v428 = vrot.slane %v426, 4
      %v429 = vshll.u32 %v358, 16
      %v431 = vrot.slane %v429, 5
      %v432 = vor.u32 %v428, %v431
      %v433 = vrot.slane %v432, 4
      %v435 = vshll.u32 %v378, 16
      %v437 = vrot.slane %v435, 5
      %v438 = vsel %vm238, %v433, %v437
      %v440 = vshrl.u32 %v359, 16
      %v442 = vrot.slane %v440, 4
      %v443 = vshll.u32 %v359, 16
      %v445 = vrot.slane %v443, 5
      %v446 = vor.u32 %v442, %v445
      %v447 = vrot.slane %v446, 4
      %v449 = vshll.u32 %v379, 16
      %v451 = vrot.slane %v449, 5
      %v452 = vsel %vm238, %v447, %v451
      %v454 = vshrl.u32 %v360, 16
      %v456 = vrot.slane %v454, 4
      %v457 = vshll.u32 %v360, 16
      %v459 = vrot.slane %v457, 5
      %v460 = vor.u32 %v456, %v459
      %v461 = vrot.slane %v460, 4
      %v463 = vshll.u32 %v380, 16
      %v465 = vrot.slane %v463, 5
      %v466 = vsel %vm238, %v461, %v465
      %v468 = vshrl.u32 %v361, 16
      %v470 = vrot.slane %v468, 4
      %v471 = vshll.u32 %v361, 16
      %v473 = vrot.slane %v471, 5
      %v474 = vor.u32 %v470, %v473
      %v475 = vrot.slane %v474, 4
      %v477 = vshll.u32 %v381, 16
      %v479 = vrot.slane %v477, 5
      %v480 = vsel %vm238, %v475, %v479
      %v482 = vshrl.u32 %v362, 16
      %v484 = vrot.slane %v482, 4
      %v485 = vshll.u32 %v362, 16
      %v487 = vrot.slane %v485, 5
      %v488 = vor.u32 %v484, %v487
      %v489 = vrot.slane %v488, 4
      %v491 = vshll.u32 %v382, 16
      %v493 = vrot.slane %v491, 5
      %v494 = vsel %vm238, %v489, %v493
      %s495 = sadd.s32 %s204, 1
      %s496 = smul.u32 %s495, 2
      %s497 = smul.addr %s496, 4
      %s498 = scalar_lea.vmem %s189, %s497
      %v499 = vld [vmem:[%s498] sm:$0xf]
      %v500 = vld [vmem:[%s498 + $0x8] sm:$0xf]
      %v501 = vld [vmem:[%s498 + $0x10] sm:$0xf]
      %v502 = vld [vmem:[%s498 + $0x18] sm:$0xf]
      %v503 = vld [vmem:[%s498 + $0x20] sm:$0xf]
      %v504 = vld [vmem:[%s498 + $0x28] sm:$0xf]
      %v505 = vld [vmem:[%s498 + $0x30] sm:$0xf]
      %v506 = vld [vmem:[%s498 + $0x38] sm:$0xf]
      %s507 = sadd.s32 %s204, 10
      %s508 = smul.u32 %s507, 2
      %s509 = smul.addr %s508, 4
      %s510 = scalar_lea.vmem %s189, %s509
      %v511 = vld [vmem:[%s510] sm:$0xf]
      %v512 = vld [vmem:[%s510 + $0x8] sm:$0xf]
      %v513 = vld [vmem:[%s510 + $0x10] sm:$0xf]
      %v514 = vld [vmem:[%s510 + $0x18] sm:$0xf]
      %v515 = vld [vmem:[%s510 + $0x20] sm:$0xf]
      %v516 = vld [vmem:[%s510 + $0x28] sm:$0xf]
      %v517 = vld [vmem:[%s510 + $0x30] sm:$0xf]
      %v518 = vld [vmem:[%s510 + $0x38] sm:$0xf]
      %v519 = vld [vmem:[%s498 + $0x4] sm:$0x1]
      %v520 = vld [vmem:[%s498 + $0xc] sm:$0x1]
      %v521 = vld [vmem:[%s498 + $0x14] sm:$0x1]
      %v522 = vld [vmem:[%s498 + $0x1c] sm:$0x1]
      %v523 = vld [vmem:[%s498 + $0x24] sm:$0x1]
      %v524 = vld [vmem:[%s498 + $0x2c] sm:$0x1]
      %v525 = vld [vmem:[%s498 + $0x34] sm:$0x1]
      %v526 = vld [vmem:[%s498 + $0x3c] sm:$0x1]
      %v528 = vshrl.u32 %v499, 16
      %v530 = vrot.slane %v528, 4
      %v531 = vshll.u32 %v499, 16
      %v533 = vrot.slane %v531, 5
      %v534 = vor.u32 %v530, %v533
      %v535 = vrot.slane %v534, 4
      %v537 = vshll.u32 %v519, 16
      %v539 = vrot.slane %v537, 5
      %v540 = vsel %vm238, %v535, %v539
      %v542 = vshrl.u32 %v500, 16
      %v544 = vrot.slane %v542, 4
      %v545 = vshll.u32 %v500, 16
      %v547 = vrot.slane %v545, 5
      %v548 = vor.u32 %v544, %v547
      %v549 = vrot.slane %v548, 4
      %v551 = vshll.u32 %v520, 16
      %v553 = vrot.slane %v551, 5
      %v554 = vsel %vm238, %v549, %v553
      %v556 = vshrl.u32 %v501, 16
      %v558 = vrot.slane %v556, 4
      %v559 = vshll.u32 %v501, 16
      %v561 = vrot.slane %v559, 5
      %v562 = vor.u32 %v558, %v561
      %v563 = vrot.slane %v562, 4
      %v565 = vshll.u32 %v521, 16
      %v567 = vrot.slane %v565, 5
      %v568 = vsel %vm238, %v563, %v567
      %v570 = vshrl.u32 %v502, 16
      %v572 = vrot.slane %v570, 4
      %v573 = vshll.u32 %v502, 16
      %v575 = vrot.slane %v573, 5
      %v576 = vor.u32 %v572, %v575
      %v577 = vrot.slane %v576, 4
      %v579 = vshll.u32 %v522, 16
      %v581 = vrot.slane %v579, 5
      %v582 = vsel %vm238, %v577, %v581
      %v584 = vshrl.u32 %v503, 16
      %v586 = vrot.slane %v584, 4
      %v587 = vshll.u32 %v503, 16
      %v589 = vrot.slane %v587, 5
      %v590 = vor.u32 %v586, %v589
      %v591 = vrot.slane %v590, 4
      %v593 = vshll.u32 %v523, 16
      %v595 = vrot.slane %v593, 5
      %v596 = vsel %vm238, %v591, %v595
      %v598 = vshrl.u32 %v504, 16
      %v600 = vrot.slane %v598, 4
      %v601 = vshll.u32 %v504, 16
      %v603 = vrot.slane %v601, 5
      %v604 = vor.u32 %v600, %v603
      %v605 = vrot.slane %v604, 4
      %v607 = vshll.u32 %v524, 16
      %v609 = vrot.slane %v607, 5
      %v610 = vsel %vm238, %v605, %v609
      %v612 = vshrl.u32 %v505, 16
      %v614 = vrot.slane %v612, 4
      %v615 = vshll.u32 %v505, 16
      %v617 = vrot.slane %v615, 5
      %v618 = vor.u32 %v614, %v617
      %v619 = vrot.slane %v618, 4
      %v621 = vshll.u32 %v525, 16
      %v623 = vrot.slane %v621, 5
      %v624 = vsel %vm238, %v619, %v623
      %v626 = vshrl.u32 %v506, 16
      %v628 = vrot.slane %v626, 4
      %v629 = vshll.u32 %v506, 16
      %v631 = vrot.slane %v629, 5
      %v632 = vor.u32 %v628, %v631
      %v633 = vrot.slane %v632, 4
      %v635 = vshll.u32 %v526, 16
      %v637 = vrot.slane %v635, 5
      %v638 = vsel %vm238, %v633, %v637
      %v647 = vunpack.c.l.b16 %v208
      %v648 = vunpack.c.l.b16 %v209
      %v649 = vunpack.c.l.b16 %v210
      %v650 = vunpack.c.l.b16 %v211
      %v651 = vunpack.c.l.b16 %v212
      %v652 = vunpack.c.l.b16 %v213
      %v653 = vunpack.c.l.b16 %v214
      %v654 = vunpack.c.l.b16 %v215
      %v655 = vpack.c.b16 %v648, %v647
      %v656 = vpack.c.b16 %v650, %v649
      %v657 = vpack.c.b16 %v652, %v651
      %v658 = vpack.c.b16 %v654, %v653
      %v667 = vunpack.c.l.b16 %v220
      %v668 = vunpack.c.l.b16 %v221
      %v669 = vunpack.c.l.b16 %v222
      %v670 = vunpack.c.l.b16 %v223
      %v671 = vunpack.c.l.b16 %v224
      %v672 = vunpack.c.l.b16 %v225
      %v673 = vunpack.c.l.b16 %v226
      %v674 = vunpack.c.l.b16 %v227
      %v675 = vpack.c.b16 %v668, %v667
      %v676 = vpack.c.b16 %v670, %v669
      %v677 = vpack.c.b16 %v672, %v671
      %v678 = vpack.c.b16 %v674, %v673
      %679 = vrot.lane.b32.xlu0 %v675, 8
      %v680 = vpop.permute.xlu0 %679
      %681 = vrot.lane.b32.xlu0 %v676, 8
      %v682 = vpop.permute.xlu0 %681
      %683 = vrot.lane.b32.xlu0 %v677, 8
      %v684 = vpop.permute.xlu0 %683
      %685 = vrot.lane.b32.xlu0 %v678, 8
      %v686 = vpop.permute.xlu0 %685
      %v687 = vunpack.c.l.b16 %v252
      %v688 = vunpack.c.l.b16 %v266
      %v689 = vunpack.c.l.b16 %v280
      %v690 = vunpack.c.l.b16 %v294
      %v691 = vunpack.c.l.b16 %v308
      %v692 = vunpack.c.l.b16 %v322
      %v693 = vunpack.c.l.b16 %v336
      %v694 = vunpack.c.l.b16 %v350
      %v695 = vpack.c.b16 %v688, %v687
      %v696 = vpack.c.b16 %v690, %v689
      %v697 = vpack.c.b16 %v692, %v691
      %v698 = vpack.c.b16 %v694, %v693
      %699 = vrot.lane.b32.xlu0 %v695, 16
      %v700 = vpop.permute.xlu0 %699
      %701 = vrot.lane.b32.xlu0 %v696, 16
      %v702 = vpop.permute.xlu0 %701
      %703 = vrot.lane.b32.xlu0 %v697, 16
      %v704 = vpop.permute.xlu0 %703
      %705 = vrot.lane.b32.xlu0 %v698, 16
      %v706 = vpop.permute.xlu0 %705
      %v715 = vunpack.c.l.b16 %v355
      %v716 = vunpack.c.l.b16 %v356
      %v717 = vunpack.c.l.b16 %v357
      %v718 = vunpack.c.l.b16 %v358
      %v719 = vunpack.c.l.b16 %v359
      %v720 = vunpack.c.l.b16 %v360
      %v721 = vunpack.c.l.b16 %v361
      %v722 = vunpack.c.l.b16 %v362
      %v723 = vpack.c.b16 %v716, %v715
      %v724 = vpack.c.b16 %v718, %v717
      %v725 = vpack.c.b16 %v720, %v719
      %v726 = vpack.c.b16 %v722, %v721
      %727 = vrot.lane.b32.xlu0 %v723, 24
      %v728 = vpop.permute.xlu0 %727
      %729 = vrot.lane.b32.xlu0 %v724, 24
      %v730 = vpop.permute.xlu0 %729
      %731 = vrot.lane.b32.xlu0 %v725, 24
      %v732 = vpop.permute.xlu0 %731
      %733 = vrot.lane.b32.xlu0 %v726, 24
      %v734 = vpop.permute.xlu0 %733
      %v743 = vunpack.c.l.b16 %v367
      %v744 = vunpack.c.l.b16 %v368
      %v745 = vunpack.c.l.b16 %v369
      %v746 = vunpack.c.l.b16 %v370
      %v747 = vunpack.c.l.b16 %v371
      %v748 = vunpack.c.l.b16 %v372
      %v749 = vunpack.c.l.b16 %v373
      %v750 = vunpack.c.l.b16 %v374
      %v751 = vpack.c.b16 %v744, %v743
      %v752 = vpack.c.b16 %v746, %v745
      %v753 = vpack.c.b16 %v748, %v747
      %v754 = vpack.c.b16 %v750, %v749
      %755 = vrot.lane.b32.xlu0 %v751, 32
      %v756 = vpop.permute.xlu0 %755
      %757 = vrot.lane.b32.xlu0 %v752, 32
      %v758 = vpop.permute.xlu0 %757
      %759 = vrot.lane.b32.xlu0 %v753, 32
      %v760 = vpop.permute.xlu0 %759
      %761 = vrot.lane.b32.xlu0 %v754, 32
      %v762 = vpop.permute.xlu0 %761
      %v763 = vunpack.c.l.b16 %v396
      %v764 = vunpack.c.l.b16 %v410
      %v765 = vunpack.c.l.b16 %v424
      %v766 = vunpack.c.l.b16 %v438
      %v767 = vunpack.c.l.b16 %v452
      %v768 = vunpack.c.l.b16 %v466
      %v769 = vunpack.c.l.b16 %v480
      %v770 = vunpack.c.l.b16 %v494
      %v771 = vpack.c.b16 %v764, %v763
      %v772 = vpack.c.b16 %v766, %v765
      %v773 = vpack.c.b16 %v768, %v767
      %v774 = vpack.c.b16 %v770, %v769
      %775 = vrot.lane.b32.xlu0 %v771, 40
      %v776 = vpop.permute.xlu0 %775
      %777 = vrot.lane.b32.xlu0 %v772, 40
      %v778 = vpop.permute.xlu0 %777
      %779 = vrot.lane.b32.xlu0 %v773, 40
      %v780 = vpop.permute.xlu0 %779
      %781 = vrot.lane.b32.xlu0 %v774, 40
      %v782 = vpop.permute.xlu0 %781
      %v791 = vunpack.c.l.b16 %v499
      %v792 = vunpack.c.l.b16 %v500
      %v793 = vunpack.c.l.b16 %v501
      %v794 = vunpack.c.l.b16 %v502
      %v795 = vunpack.c.l.b16 %v503
      %v796 = vunpack.c.l.b16 %v504
      %v797 = vunpack.c.l.b16 %v505
      %v798 = vunpack.c.l.b16 %v506
      %v799 = vpack.c.b16 %v792, %v791
      %v800 = vpack.c.b16 %v794, %v793
      %v801 = vpack.c.b16 %v796, %v795
      %v802 = vpack.c.b16 %v798, %v797
      %803 = vrot.lane.b32.xlu0 %v799, 48
      %v804 = vpop.permute.xlu0 %803
      %805 = vrot.lane.b32.xlu0 %v800, 48
      %v806 = vpop.permute.xlu0 %805
      %807 = vrot.lane.b32.xlu0 %v801, 48
      %v808 = vpop.permute.xlu0 %807
      %809 = vrot.lane.b32.xlu0 %v802, 48
      %v810 = vpop.permute.xlu0 %809
      %v819 = vunpack.c.l.b16 %v511
      %v820 = vunpack.c.l.b16 %v512
      %v821 = vunpack.c.l.b16 %v513
      %v822 = vunpack.c.l.b16 %v514
      %v823 = vunpack.c.l.b16 %v515
      %v824 = vunpack.c.l.b16 %v516
      %v825 = vunpack.c.l.b16 %v517
      %v826 = vunpack.c.l.b16 %v518
      %v827 = vpack.c.b16 %v820, %v819
      %v828 = vpack.c.b16 %v822, %v821
      %v829 = vpack.c.b16 %v824, %v823
      %v830 = vpack.c.b16 %v826, %v825
      %831 = vrot.lane.b32.xlu0 %v827, 56
      %v832 = vpop.permute.xlu0 %831
      %833 = vrot.lane.b32.xlu0 %v828, 56
      %v834 = vpop.permute.xlu0 %833
      %835 = vrot.lane.b32.xlu0 %v829, 56
      %v836 = vpop.permute.xlu0 %835
      %837 = vrot.lane.b32.xlu0 %v830, 56
      %v838 = vpop.permute.xlu0 %837
      %v839 = vunpack.c.l.b16 %v540
      %v840 = vunpack.c.l.b16 %v554
      %v841 = vunpack.c.l.b16 %v568
      %v842 = vunpack.c.l.b16 %v582
      %v843 = vunpack.c.l.b16 %v596
      %v844 = vunpack.c.l.b16 %v610
      %v845 = vunpack.c.l.b16 %v624
      %v846 = vunpack.c.l.b16 %v638
      %v847 = vpack.c.b16 %v840, %v839
      %v848 = vpack.c.b16 %v842, %v841
      %v849 = vpack.c.b16 %v844, %v843
      %v850 = vpack.c.b16 %v846, %v845
      %851 = vrot.lane.b32.xlu0 %v847, 64
      %v852 = vpop.permute.xlu0 %851
      %853 = vrot.lane.b32.xlu0 %v848, 64
      %v854 = vpop.permute.xlu0 %853
      %855 = vrot.lane.b32.xlu0 %v849, 64
      %v856 = vpop.permute.xlu0 %855
      %857 = vrot.lane.b32.xlu0 %v850, 64
      %v858 = vpop.permute.xlu0 %857
      %vm859 = vcmask 64512
      %v862 = vsel %vm859, %v655, %v680
      %v865 = vsel %vm859, %v656, %v682
      %v868 = vsel %vm859, %v657, %v684
      %v871 = vsel %vm859, %v658, %v686
      %vm872 = vcmask 130048
      %v874 = vsel %vm872, %v862, %v700
      %v876 = vsel %vm872, %v865, %v702
      %v878 = vsel %vm872, %v868, %v704
      %v880 = vsel %vm872, %v871, %v706
      %vm881 = vcmask 195584
      %v883 = vsel %vm881, %v874, %v728
      %v885 = vsel %vm881, %v876, %v730
      %v887 = vsel %vm881, %v878, %v732
      %v889 = vsel %vm881, %v880, %v734
      %vm890 = vcmask 261120
      %v892 = vsel %vm890, %v883, %v756
      %v894 = vsel %vm890, %v885, %v758
      %v896 = vsel %vm890, %v887, %v760
      %v898 = vsel %vm890, %v889, %v762
      %vm899 = vcmask 326656
      %v901 = vsel %vm899, %v892, %v776
      %v903 = vsel %vm899, %v894, %v778
      %v905 = vsel %vm899, %v896, %v780
      %v907 = vsel %vm899, %v898, %v782
      %vm908 = vcmask 392192
      %v910 = vsel %vm908, %v901, %v804
      %v912 = vsel %vm908, %v903, %v806
      %v914 = vsel %vm908, %v905, %v808
      %v916 = vsel %vm908, %v907, %v810
      %vm917 = vcmask 457728
      %v919 = vsel %vm917, %v910, %v832
      %v921 = vsel %vm917, %v912, %v834
      %v923 = vsel %vm917, %v914, %v836
      %v925 = vsel %vm917, %v916, %v838
      %vm926 = vcmask 523264
      %v928 = vsel %vm926, %v919, %v852
      %v930 = vsel %vm926, %v921, %v854
      %v932 = vsel %vm926, %v923, %v856
      %v934 = vsel %vm926, %v925, %v858
      %v935 = vld [vmem:[%s1] sm:$0xf]
      %v936 = vld [vmem:[%s1 + $0x4] sm:$0xf]
      %v937 = vld [vmem:[%s1 + $0x8] sm:$0xf]
      %v938 = vld [vmem:[%s1 + $0xc] sm:$0xf]
      %v939 = vld [vmem:[%s1 + $0x10] sm:$0xf]
      %v940 = vld [vmem:[%s1 + $0x14] sm:$0xf]
      %v941 = vld [vmem:[%s1 + $0x18] sm:$0xf]
      %v942 = vld [vmem:[%s1 + $0x1c] sm:$0xf]
      %v943 = vld [vmem:[%s1 + $0x20] sm:$0xf]
      %v953 = vunpack.c.l.b16 %v935
      %v954 = vunpack.c.l.b16 %v936
      %v955 = vunpack.c.l.b16 %v937
      %v956 = vunpack.c.l.b16 %v938
      %v957 = vunpack.c.l.b16 %v939
      %v958 = vunpack.c.l.b16 %v940
      %v959 = vunpack.c.l.b16 %v941
      %v960 = vunpack.c.l.b16 %v942
      %v961 = vunpack.c.l.b16 %v943
      %v962 = vpack.c.b16 %v954, %v953
      %v963 = vpack.c.b16 %v956, %v955
      %v964 = vpack.c.b16 %v958, %v957
      %v965 = vpack.c.b16 %v960, %v959
      %v966 = vpack.c.b16 %v961, %v961
      %vm971 = vcmask 588800
      %v972 = vsel %vm971, %v928, 0
      %v974 = vsel %vm971, %v930, 0
      %v976 = vsel %vm971, %v932, 0
      %v978 = vsel %vm971, %v934, 0
      %vm980 = vcmask 1043456
      %v982 = vsel %vm980, %v966, 0
      %984 = vmatpush.bf16.msra.mxu0 0
      %985 = vmatpush.bf16.msra.mxu0 0
      %986 = vmatpush.bf16.msra.mxu0 0
      %987 = vmatpush.bf16.msra.mxu0 %v982
      %988 = vmatpush.bf16.msra.mxu0 %v965
      %989 = vmatpush.bf16.msra.mxu0 %v964
      %990 = vmatpush.bf16.msra.mxu0 %v963
      %991 = vmatpush.bf16.msra.mxu0 %v962
      %992 = vmatmul.bf16.gmra.mxu0 %v972
      %v993 = vpop.f32.mrf.mxu0
      %v994 = vadd.f32 0.0, %v993
      %v995 = vpop.f32.mrf.mxu0
      %v996 = vadd.f32 0.0, %v995
      %997 = vmatmul.bf16.gmra.mxu0 %v974
      %v998 = vpop.f32.mrf.mxu0
      %v999 = vadd.f32 0.0, %v998
      %v1000 = vpop.f32.mrf.mxu0
      %v1001 = vadd.f32 0.0, %v1000
      %1002 = vmatmul.bf16.gmra.mxu0 %v976
      %v1003 = vpop.f32.mrf.mxu0
      %v1004 = vadd.f32 0.0, %v1003
      %v1005 = vpop.f32.mrf.mxu0
      %v1006 = vadd.f32 0.0, %v1005
      %1007 = vmatmul.bf16.gmra.mxu0 %v978
      %v1008 = vpop.f32.mrf.mxu0
      %v1009 = vadd.f32 0.0, %v1008
      %v1010 = vpop.f32.mrf.mxu0
      %v1011 = vadd.f32 0.0, %v1010
      %1012 = vdwg.mxu0
      %p1013 = scmp.eq.s32.totalorder %s20, 0
      // Predicated region
      $region29: #{discriminator_forward.6} parent=27 // pred_check
        %p1014 = pneg %p1013
      $region30: #{discriminator_forward.6} parent=27 // pred_check_branch
        %1016 = sbr.rel (%p1014) target = $region32
      $region31: #{discriminator_forward.6} parent=27 // pred_region
        %vm1017 = vcmask 123904
        %1018 = vst.msk [vmem:[%s202] sm:$0x3] %vm1017, 0.0
      $region32: #{discriminator_forward.6} parent=27 // pred_fallthru
        _
      %v1019 = vld [vmem:[%s202] sm:$0x1]
      %v1020 = vsel %vm872, %v994, 0.0
      %v1021 = vsel %vm872, %v996, 0.0
      %v1022 = vadd.f32 %v1020, %v1021
      %v1023 = vsel %vm872, %v999, 0.0
      %v1024 = vadd.f32 %v1022, %v1023
      %v1025 = vsel %vm872, %v1001, 0.0
      %v1026 = vadd.f32 %v1024, %v1025
      %v1027 = vsel %vm872, %v1004, 0.0
      %v1028 = vadd.f32 %v1026, %v1027
      %v1029 = vsel %vm872, %v1006, 0.0
      %v1030 = vadd.f32 %v1028, %v1029
      %v1031 = vsel %vm872, %v1009, 0.0
      %v1032 = vadd.f32 %v1030, %v1031
      %v1033 = vsel %vm872, %v1011, 0.0
      %v1034 = vadd.f32 %v1032, %v1033
      %v1035 = vrot.slane %v1034, 4
      %v1036 = vadd.f32 %v1034, %v1035
      %v1037 = vrot.slane %v1036, 2
      %v1038 = vadd.f32 %v1036, %v1037
      %v1039 = vrot.slane %v1038, 1
      %v1040 = vadd.f32 %v1038, %v1039
      %v1041 = vadd.f32 %v1019, %v1040
      %vm1042 = vcmask 122880
      %1043 = vst.msk [vmem:[%s202] sm:$0x1] %vm1042, %v1041
      %v1044 = vld [vmem:[%s202 + $0x1] sm:$0x1]
      %v1045 = vmul.f32 %v994, %v994
      %v1046 = vmul.f32 %v996, %v996
      %v1047 = vmul.f32 %v999, %v999
      %v1048 = vmul.f32 %v1001, %v1001
      %v1049 = vmul.f32 %v1004, %v1004
      %v1050 = vmul.f32 %v1006, %v1006
      %v1051 = vmul.f32 %v1009, %v1009
      %v1052 = vmul.f32 %v1011, %v1011
      %v1053 = vsel %vm872, %v1045, 0.0
      %v1054 = vsel %vm872, %v1046, 0.0
      %v1055 = vadd.f32 %v1053, %v1054
      %v1056 = vsel %vm872, %v1047, 0.0
      %v1057 = vadd.f32 %v1055, %v1056
      %v1058 = vsel %vm872, %v1048, 0.0
      %v1059 = vadd.f32 %v1057, %v1058
      %v1060 = vsel %vm872, %v1049, 0.0
      %v1061 = vadd.f32 %v1059, %v1060
      %v1062 = vsel %vm872, %v1050, 0.0
      %v1063 = vadd.f32 %v1061, %v1062
      %v1064 = vsel %vm872, %v1051, 0.0
      %v1065 = vadd.f32 %v1063, %v1064
      %v1066 = vsel %vm872, %v1052, 0.0
      %v1067 = vadd.f32 %v1065, %v1066
      %v1068 = vrot.slane %v1067, 4
      %v1069 = vadd.f32 %v1067, %v1068
      %v1070 = vrot.slane %v1069, 2
      %v1071 = vadd.f32 %v1069, %v1070
      %v1072 = vrot.slane %v1071, 1
      %v1073 = vadd.f32 %v1071, %v1072
      %v1074 = vadd.f32 %v1044, %v1073
      %1075 = vst.msk [vmem:[%s202 + $0x1] sm:$0x1] %vm1042, %v1074
      %v1084 = vrot.slane %v994, 1
      %v1085 = vrot.slane %v996, 1
      %v1086 = vrot.slane %v999, 1
      %v1087 = vrot.slane %v1001, 1
      %v1088 = vrot.slane %v1004, 1
      %v1089 = vrot.slane %v1006, 1
      %v1090 = vrot.slane %v1009, 1
      %v1091 = vrot.slane %v1011, 1
      %1092 = vrot.lane.b32.xlu0 %v1084, 16
      %v1093 = vpop.permute.xlu0 %1092
      %1094 = vrot.lane.b32.xlu0 %v1085, 16
      %v1095 = vpop.permute.xlu0 %1094
      %1096 = vrot.lane.b32.xlu0 %v1086, 16
      %v1097 = vpop.permute.xlu0 %1096
      %1098 = vrot.lane.b32.xlu0 %v1087, 16
      %v1099 = vpop.permute.xlu0 %1098
      %1100 = vrot.lane.b32.xlu0 %v1088, 16
      %v1101 = vpop.permute.xlu0 %1100
      %1102 = vrot.lane.b32.xlu0 %v1089, 16
      %v1103 = vpop.permute.xlu0 %1102
      %1104 = vrot.lane.b32.xlu0 %v1090, 16
      %v1105 = vpop.permute.xlu0 %1104
      %1106 = vrot.lane.b32.xlu0 %v1091, 16
      %v1107 = vpop.permute.xlu0 %1106
      %v1116 = vrot.slane %v994, 2
      %v1117 = vrot.slane %v996, 2
      %v1118 = vrot.slane %v999, 2
      %v1119 = vrot.slane %v1001, 2
      %v1120 = vrot.slane %v1004, 2
      %v1121 = vrot.slane %v1006, 2
      %v1122 = vrot.slane %v1009, 2
      %v1123 = vrot.slane %v1011, 2
      %1124 = vrot.lane.b32.xlu0 %v1116, 32
      %v1125 = vpop.permute.xlu0 %1124
      %1126 = vrot.lane.b32.xlu0 %v1117, 32
      %v1127 = vpop.permute.xlu0 %1126
      %1128 = vrot.lane.b32.xlu0 %v1118, 32
      %v1129 = vpop.permute.xlu0 %1128
      %1130 = vrot.lane.b32.xlu0 %v1119, 32
      %v1131 = vpop.permute.xlu0 %1130
      %1132 = vrot.lane.b32.xlu0 %v1120, 32
      %v1133 = vpop.permute.xlu0 %1132
      %1134 = vrot.lane.b32.xlu0 %v1121, 32
      %v1135 = vpop.permute.xlu0 %1134
      %1136 = vrot.lane.b32.xlu0 %v1122, 32
      %v1137 = vpop.permute.xlu0 %1136
      %1138 = vrot.lane.b32.xlu0 %v1123, 32
      %v1139 = vpop.permute.xlu0 %1138
      %v1148 = vrot.slane %v994, 3
      %v1149 = vrot.slane %v996, 3
      %v1150 = vrot.slane %v999, 3
      %v1151 = vrot.slane %v1001, 3
      %v1152 = vrot.slane %v1004, 3
      %v1153 = vrot.slane %v1006, 3
      %v1154 = vrot.slane %v1009, 3
      %v1155 = vrot.slane %v1011, 3
      %1156 = vrot.lane.b32.xlu0 %v1148, 48
      %v1157 = vpop.permute.xlu0 %1156
      %1158 = vrot.lane.b32.xlu0 %v1149, 48
      %v1159 = vpop.permute.xlu0 %1158
      %1160 = vrot.lane.b32.xlu0 %v1150, 48
      %v1161 = vpop.permute.xlu0 %1160
      %1162 = vrot.lane.b32.xlu0 %v1151, 48
      %v1163 = vpop.permute.xlu0 %1162
      %1164 = vrot.lane.b32.xlu0 %v1152, 48
      %v1165 = vpop.permute.xlu0 %1164
      %1166 = vrot.lane.b32.xlu0 %v1153, 48
      %v1167 = vpop.permute.xlu0 %1166
      %1168 = vrot.lane.b32.xlu0 %v1154, 48
      %v1169 = vpop.permute.xlu0 %1168
      %1170 = vrot.lane.b32.xlu0 %v1155, 48
      %v1171 = vpop.permute.xlu0 %1170
      %v1180 = vrot.slane %v994, 4
      %v1181 = vrot.slane %v996, 4
      %v1182 = vrot.slane %v999, 4
      %v1183 = vrot.slane %v1001, 4
      %v1184 = vrot.slane %v1004, 4
      %v1185 = vrot.slane %v1006, 4
      %v1186 = vrot.slane %v1009, 4
      %v1187 = vrot.slane %v1011, 4
      %1188 = vrot.lane.b32.xlu0 %v1180, 64
      %v1189 = vpop.permute.xlu0 %1188
      %1190 = vrot.lane.b32.xlu0 %v1181, 64
      %v1191 = vpop.permute.xlu0 %1190
      %1192 = vrot.lane.b32.xlu0 %v1182, 64
      %v1193 = vpop.permute.xlu0 %1192
      %1194 = vrot.lane.b32.xlu0 %v1183, 64
      %v1195 = vpop.permute.xlu0 %1194
      %1196 = vrot.lane.b32.xlu0 %v1184, 64
      %v1197 = vpop.permute.xlu0 %1196
      %1198 = vrot.lane.b32.xlu0 %v1185, 64
      %v1199 = vpop.permute.xlu0 %1198
      %1200 = vrot.lane.b32.xlu0 %v1186, 64
      %v1201 = vpop.permute.xlu0 %1200
      %1202 = vrot.lane.b32.xlu0 %v1187, 64
      %v1203 = vpop.permute.xlu0 %1202
      %v1212 = vrot.slane %v994, 5
      %v1213 = vrot.slane %v996, 5
      %v1214 = vrot.slane %v999, 5
      %v1215 = vrot.slane %v1001, 5
      %v1216 = vrot.slane %v1004, 5
      %v1217 = vrot.slane %v1006, 5
      %v1218 = vrot.slane %v1009, 5
      %v1219 = vrot.slane %v1011, 5
      %1220 = vrot.lane.b32.xlu0 %v1212, 80
      %v1221 = vpop.permute.xlu0 %1220
      %1222 = vrot.lane.b32.xlu0 %v1213, 80
      %v1223 = vpop.permute.xlu0 %1222
      %1224 = vrot.lane.b32.xlu0 %v1214, 80
      %v1225 = vpop.permute.xlu0 %1224
      %1226 = vrot.lane.b32.xlu0 %v1215, 80
      %v1227 = vpop.permute.xlu0 %1226
      %1228 = vrot.lane.b32.xlu0 %v1216, 80
      %v1229 = vpop.permute.xlu0 %1228
      %1230 = vrot.lane.b32.xlu0 %v1217, 80
      %v1231 = vpop.permute.xlu0 %1230
      %1232 = vrot.lane.b32.xlu0 %v1218, 80
      %v1233 = vpop.permute.xlu0 %1232
      %1234 = vrot.lane.b32.xlu0 %v1219, 80
      %v1235 = vpop.permute.xlu0 %1234
      %v1244 = vrot.slane %v994, 6
      %v1245 = vrot.slane %v996, 6
      %v1246 = vrot.slane %v999, 6
      %v1247 = vrot.slane %v1001, 6
      %v1248 = vrot.slane %v1004, 6
      %v1249 = vrot.slane %v1006, 6
      %v1250 = vrot.slane %v1009, 6
      %v1251 = vrot.slane %v1011, 6
      %1252 = vrot.lane.b32.xlu0 %v1244, 96
      %v1253 = vpop.permute.xlu0 %1252
      %1254 = vrot.lane.b32.xlu0 %v1245, 96
      %v1255 = vpop.permute.xlu0 %1254
      %1256 = vrot.lane.b32.xlu0 %v1246, 96
      %v1257 = vpop.permute.xlu0 %1256
      %1258 = vrot.lane.b32.xlu0 %v1247, 96
      %v1259 = vpop.permute.xlu0 %1258
      %1260 = vrot.lane.b32.xlu0 %v1248, 96
      %v1261 = vpop.permute.xlu0 %1260
      %1262 = vrot.lane.b32.xlu0 %v1249, 96
      %v1263 = vpop.permute.xlu0 %1262
      %1264 = vrot.lane.b32.xlu0 %v1250, 96
      %v1265 = vpop.permute.xlu0 %1264
      %1266 = vrot.lane.b32.xlu0 %v1251, 96
      %v1267 = vpop.permute.xlu0 %1266
      %v1276 = vrot.slane %v994, 7
      %v1277 = vrot.slane %v996, 7
      %v1278 = vrot.slane %v999, 7
      %v1279 = vrot.slane %v1001, 7
      %v1280 = vrot.slane %v1004, 7
      %v1281 = vrot.slane %v1006, 7
      %v1282 = vrot.slane %v1009, 7
      %v1283 = vrot.slane %v1011, 7
      %1284 = vrot.lane.b32.xlu0 %v1276, 112
      %v1285 = vpop.permute.xlu0 %1284
      %1286 = vrot.lane.b32.xlu0 %v1277, 112
      %v1287 = vpop.permute.xlu0 %1286
      %1288 = vrot.lane.b32.xlu0 %v1278, 112
      %v1289 = vpop.permute.xlu0 %1288
      %1290 = vrot.lane.b32.xlu0 %v1279, 112
      %v1291 = vpop.permute.xlu0 %1290
      %1292 = vrot.lane.b32.xlu0 %v1280, 112
      %v1293 = vpop.permute.xlu0 %1292
      %1294 = vrot.lane.b32.xlu0 %v1281, 112
      %v1295 = vpop.permute.xlu0 %1294
      %1296 = vrot.lane.b32.xlu0 %v1282, 112
      %v1297 = vpop.permute.xlu0 %1296
      %1298 = vrot.lane.b32.xlu0 %v1283, 112
      %v1299 = vpop.permute.xlu0 %1298
      %v1308 = vsel %vm872, %v994, %v1093
      %v1309 = vsel %vm872, %v996, %v1095
      %v1310 = vsel %vm872, %v999, %v1097
      %v1311 = vsel %vm872, %v1001, %v1099
      %v1312 = vsel %vm872, %v1004, %v1101
      %v1313 = vsel %vm872, %v1006, %v1103
      %v1314 = vsel %vm872, %v1009, %v1105
      %v1315 = vsel %vm872, %v1011, %v1107
      %v1316 = vsel %vm890, %v1308, %v1125
      %v1317 = vsel %vm890, %v1309, %v1127
      %v1318 = vsel %vm890, %v1310, %v1129
      %v1319 = vsel %vm890, %v1311, %v1131
      %v1320 = vsel %vm890, %v1312, %v1133
      %v1321 = vsel %vm890, %v1313, %v1135
      %v1322 = vsel %vm890, %v1314, %v1137
      %v1323 = vsel %vm890, %v1315, %v1139
      %v1324 = vsel %vm908, %v1316, %v1157
      %v1325 = vsel %vm908, %v1317, %v1159
      %v1326 = vsel %vm908, %v1318, %v1161
      %v1327 = vsel %vm908, %v1319, %v1163
      %v1328 = vsel %vm908, %v1320, %v1165
      %v1329 = vsel %vm908, %v1321, %v1167
      %v1330 = vsel %vm908, %v1322, %v1169
      %v1331 = vsel %vm908, %v1323, %v1171
      %v1332 = vsel %vm926, %v1324, %v1189
      %v1333 = vsel %vm926, %v1325, %v1191
      %v1334 = vsel %vm926, %v1326, %v1193
      %v1335 = vsel %vm926, %v1327, %v1195
      %v1336 = vsel %vm926, %v1328, %v1197
      %v1337 = vsel %vm926, %v1329, %v1199
      %v1338 = vsel %vm926, %v1330, %v1201
      %v1339 = vsel %vm926, %v1331, %v1203
      %vm1340 = vcmask 654336
      %v1341 = vsel %vm1340, %v1332, %v1221
      %v1342 = vsel %vm1340, %v1333, %v1223
      %v1343 = vsel %vm1340, %v1334, %v1225
      %v1344 = vsel %vm1340, %v1335, %v1227
      %v1345 = vsel %vm1340, %v1336, %v1229
      %v1346 = vsel %vm1340, %v1337, %v1231
      %v1347 = vsel %vm1340, %v1338, %v1233
      %v1348 = vsel %vm1340, %v1339, %v1235
      %vm1349 = vcmask 785408
      %v1350 = vsel %vm1349, %v1341, %v1253
      %v1351 = vsel %vm1349, %v1342, %v1255
      %v1352 = vsel %vm1349, %v1343, %v1257
      %v1353 = vsel %vm1349, %v1344, %v1259
      %v1354 = vsel %vm1349, %v1345, %v1261
      %v1355 = vsel %vm1349, %v1346, %v1263
      %v1356 = vsel %vm1349, %v1347, %v1265
      %v1357 = vsel %vm1349, %v1348, %v1267
      %vm1358 = vcmask 916480
      %v1359 = vsel %vm1358, %v1350, %v1285
      %v1360 = vsel %vm1358, %v1351, %v1287
      %v1361 = vsel %vm1358, %v1352, %v1289
      %v1362 = vsel %vm1358, %v1353, %v1291
      %v1363 = vsel %vm1358, %v1354, %v1293
      %v1364 = vsel %vm1358, %v1355, %v1295
      %v1365 = vsel %vm1358, %v1356, %v1297
      %v1366 = vsel %vm1358, %v1357, %v1299
      %v1367 = vpack.c.bf16 %v1359, %v1359
      %v1368 = vpack.c.bf16 %v1360, %v1360
      %v1369 = vpack.c.bf16 %v1361, %v1361
      %v1370 = vpack.c.bf16 %v1362, %v1362
      %v1371 = vpack.c.bf16 %v1363, %v1363
      %v1372 = vpack.c.bf16 %v1364, %v1364
      %v1373 = vpack.c.bf16 %v1365, %v1365
      %v1374 = vpack.c.bf16 %v1366, %v1366
      %vm1375 = vcmask 1040384
      %vm1376 = vsmask.f32 256
      %vm1377 = vmand %vm1375, %vm1376
      %v1378 = vld [vmem:[%s197] sm:$0x1]
      %v1379 = vsel %vm1377, %v1367, %v1378
      %1380 = vst [vmem:[%s197] sm:$0x1] %v1379
      %v1381 = vld [vmem:[%s197 + $0x1] sm:$0x1]
      %v1382 = vsel %vm1377, %v1368, %v1381
      %1383 = vst [vmem:[%s197 + $0x1] sm:$0x1] %v1382
      %v1384 = vld [vmem:[%s197 + $0x2] sm:$0x1]
      %v1385 = vsel %vm1377, %v1369, %v1384
      %1386 = vst [vmem:[%s197 + $0x2] sm:$0x1] %v1385
      %v1387 = vld [vmem:[%s197 + $0x3] sm:$0x1]
      %v1388 = vsel %vm1377, %v1370, %v1387
      %1389 = vst [vmem:[%s197 + $0x3] sm:$0x1] %v1388
      %v1390 = vld [vmem:[%s197 + $0x4] sm:$0x1]
      %v1391 = vsel %vm1377, %v1371, %v1390
      %1392 = vst [vmem:[%s197 + $0x4] sm:$0x1] %v1391
      %v1393 = vld [vmem:[%s197 + $0x5] sm:$0x1]
      %v1394 = vsel %vm1377, %v1372, %v1393
      %1395 = vst [vmem:[%s197 + $0x5] sm:$0x1] %v1394
      %v1396 = vld [vmem:[%s197 + $0x6] sm:$0x1]
      %v1397 = vsel %vm1377, %v1373, %v1396
      %1398 = vst [vmem:[%s197 + $0x6] sm:$0x1] %v1397
      %v1399 = vld [vmem:[%s197 + $0x7] sm:$0x1]
      %v1400 = vsel %vm1377, %v1374, %v1399
      %1401 = vst [vmem:[%s197 + $0x7] sm:$0x1] %v1400
      %s1402 = smul.u32 8, %s20
      %p1403 = scmp.lt.s32.totalorder %s19, 1
      %s1404 = scalar_select %p1403, %s19, 1
      %p1405 = scmp.lt.s32.totalorder %s1402, 7
      %s1406 = scalar_select %p1405, %s1402, 7
      %s1407 = smul.addr %s1404, 8
      %s1408 = sadd.s32 %s1406, %s1407
      %s1409 = scalar_lea.vmem %s2, %s1408
      %p1410 = scmp.lt.s32.totalorder %s19, 1
      %s1411 = scalar_select %p1410, %s19, 1
      %s1412 = smul.addr %s1411, 2
      %s1413 = scalar_lea.vmem %s3, %s1412
      // Predicated region
      $region33: #{discriminator_forward.6} parent=27 // pred_check
        %p1414 = pneg %p94
      $region34: #{discriminator_forward.6} parent=27 // pred_check_branch
        %1416 = sbr.rel (%p1414) target = $region36
      $region35: #{discriminator_forward.6} parent=27 // pred_region
        %s1417 = smul.u32 8, %s20
      $region36: #{discriminator_forward.6} parent=27 // pred_fallthru
        _
      // Predicated region
      $region37: #{discriminator_forward.6} parent=27 // pred_check
        %p1418 = pneg %p120
      $region38: #{discriminator_forward.6} parent=27 // pred_check_branch
        %1420 = sbr.rel (%p1418) target = $region40
      $region39: #{discriminator_forward.6} parent=27 // pred_region
        _
      $region40: #{discriminator_forward.6} parent=27 // pred_fallthru
        _
    $region28: #{discriminator_forward.6} parent=5 // pred_fallthru
      _
    %p1421 = scmp.le.s32.totalorder 2, %s10
    // Predicated region
    $region41: #{discriminator_forward.6} parent=5 // pred_check
      %p1422 = pneg %p1421
    $region42: #{discriminator_forward.6} parent=5 // pred_check_branch
      %1424 = sbr.rel (%p1422) target = $region44
    $region43: #{discriminator_forward.6} parent=5 // pred_region
      %s1425 = ssub.s32 %s10, 2
      // Predicated region
      $region45: #{discriminator_forward.6} parent=43 // pred_check
        %p1426 = pneg %p100
      $region46: #{discriminator_forward.6} parent=43 // pred_check_branch
        %1428 = sbr.rel (%p1426) target = $region48
      $region47: #{discriminator_forward.6} parent=43 // pred_region
        %s1429 = smul.u32 8, %s22
        %p1430 = scmp.lt.s32.totalorder %s21, 1
        %s1431 = scalar_select %p1430, %s21, 1
        %p1432 = scmp.lt.s32.totalorder %s1429, 7
        %s1433 = scalar_select %p1432, %s1429, 7
        %s1434 = smul.addr %s1431, 8
        %s1435 = sadd.s32 %s1433, %s1434
        %s1436 = scalar_lea.vmem %s2, %s1435
      $region48: #{discriminator_forward.6} parent=43 // pred_fallthru
        _
      // Predicated region
      $region49: #{discriminator_forward.6} parent=43 // pred_check
        %p1437 = pneg %p126
      $region50: #{discriminator_forward.6} parent=43 // pred_check_branch
        %1439 = sbr.rel (%p1437) target = $region52
      $region51: #{discriminator_forward.6} parent=43 // pred_region
        %p1440 = scmp.lt.s32.totalorder %s21, 1
        %s1441 = scalar_select %p1440, %s21, 1
        %s1442 = smul.addr %s1441, 2
        %s1443 = scalar_lea.vmem %s3, %s1442
      $region52: #{discriminator_forward.6} parent=43 // pred_fallthru
        _
    $region44: #{discriminator_forward.6} parent=5 // pred_fallthru
      _
  $region6: #{discriminator_forward.6} parent=0 // loop_footer
    %s14 = sadd.s32 1, %s10
  $region7: #{discriminator_forward.6} parent=0 // loop_footer_branch
    %9 = sbr.rel target = $region3
  $region8: #{discriminator_forward.6} parent=0 // loop_exit
    _

// kernel: discriminator_forward.5
$region0: #{discriminator_forward.5}
  #allocation0 [shape = 'u32[]', space=smem, size = 0x4, offset = 0x4, fixed_abs, tag = 'smem constant byte address 0x4 - core index']
  #allocation1 [shape = 'u32[72,128]{1,0:T(1,128)}', space=vmem, size = 0x9000, scoped, tag = 'internal scratch']
  %s0 = inlined_call_operand.vmem [shape: bf16[2,68,17,2], index: 0, kind: input, shape index: {}]
  %s1 = inlined_call_operand.vmem [shape: bf16[18,8], index: 1, kind: input, shape index: {}]
  %s2 = inlined_call_operand.vmem [shape: bf16[2,16,1,128], index: 2, kind: output, shape index: {}]
  %s3 = sld [smem:[#allocation0]]
  $region41: #{discriminator_forward.5} parent=0
    _
  %s5 = ssub.s32 1, %s3
  %s6 = scalar_select 0, %s5, %s3
  loop: start=0, step=1, limit=4
  $region2: #{discriminator_forward.5} parent=0 // loop_pre_header
    _
  $region3: #{discriminator_forward.5} parent=0 // loop_header
    %s8 = sphi 0, %s12
    %p9 = scmp.ge.s32.totalorder %s8, 4
    %s15 = sphi 0, %s27
    %s16 = sphi 0, %s23
    %s17 = sphi 0, %s15
    %s18 = sphi 0, %s16
    %s19 = sphi 0, %s17
    %s20 = sphi 0, %s18
    %s30 = sphi 0, %s32
    %s33 = sphi 0, %s30
    %s34 = sphi 0, %s33
    %s50 = sphi 0, %s34
    %s54 = sphi 0, %s54
    %s56 = sphi 0, %s54
    %s57 = sphi 0, %s56
    %s71 = sphi 0, %s57
    %s79 = sphi 0, %s81
    %s82 = sphi 0, %s79
    %s83 = sphi 0, %s82
    %s99 = sphi 0, %s83
  $region4: #{discriminator_forward.5} parent=0 // loop_header_branch
    %11 = sbr.rel (%p9) target = $region8
  $region5: #{discriminator_forward.5} parent=0 // loop_body
    %s13 = ssub.s32 %s8, 1
    %s14 = ssub.s32 %s8, 2
    %s21 = sadd.s32 1, %s16
    %p22 = scmp.ge.s32.totalorder %s21, 1
    %s23 = scalar_select %p22, 0, %s21
    %s24 = sadd.s32 1, %s15
    %s25 = scalar_select %p22, %s24, %s15
    %p26 = scmp.ge.s32.totalorder %s25, 2
    %s27 = scalar_select %p26, 0, %s25
    %s28 = ssub.s32 %s15, %s27
    %p29 = scmp.eq.s32.totalorder %s28, 0
    %s31 = sadd.s32 %s30, 1
    %s32 = scalar_select %p29, %s30, %s31
    %p35 = pneg %p29
    %p36 = scmp.eq.s32.totalorder %s8, 1
    %p37 = por %p35, %p36
    %p38 = scmp.ne.s32.totalorder %s30, %s33
    %p39 = scmp.eq.s32.totalorder %s8, 0
    %p40 = por %p38, %p39
    %p41 = scmp.ne.s32.totalorder %s30, %s33
    %p42 = scmp.eq.s32.totalorder %s13, 1
    %p43 = por %p41, %p42
    %p44 = scmp.ne.s32.totalorder %s33, %s34
    %p45 = scmp.eq.s32.totalorder %s13, 0
    %p46 = por %p44, %p45
    %p47 = scmp.ne.s32.totalorder %s33, %s34
    %p48 = scmp.eq.s32.totalorder %s14, 1
    %p49 = por %p47, %p48
    %p51 = scmp.ne.s32.totalorder %s34, %s50
    %p52 = scmp.eq.s32.totalorder %s14, 0
    %p53 = por %p51, %p52
    %s55 = sadd.s32 %s54, 1
    %p58 = scmp.eq.s32.totalorder %s8, 1
    %p59 = scmp.ne.s32.totalorder %s54, %s56
    %p60 = scmp.eq.s32.totalorder %s8, 0
    %p61 = por %p59, %p60
    %p62 = scmp.ne.s32.totalorder %s54, %s56
    %p63 = scmp.eq.s32.totalorder %s13, 1
    %p64 = por %p62, %p63
    %p65 = scmp.ne.s32.totalorder %s56, %s57
    %p66 = scmp.eq.s32.totalorder %s13, 0
    %p67 = por %p65, %p66
    %p68 = scmp.ne.s32.totalorder %s56, %s57
    %p69 = scmp.eq.s32.totalorder %s14, 1
    %p70 = por %p68, %p69
    %p72 = scmp.ne.s32.totalorder %s57, %s71
    %p73 = scmp.eq.s32.totalorder %s14, 0
    %p74 = por %p72, %p73
    %s75 = ssub.s32 %s15, %s27
    %s76 = ssub.s32 %s16, %s23
    %s77 = sor.u32 %s75, %s76
    %p78 = scmp.eq.s32.totalorder %s77, 0
    %s80 = sadd.s32 %s79, 1
    %s81 = scalar_select %p78, %s79, %s80
    %p84 = pneg %p78
    %p85 = scmp.eq.s32.totalorder %s8, 1
    %p86 = por %p84, %p85
    %p87 = scmp.ne.s32.totalorder %s79, %s82
    %p88 = scmp.eq.s32.totalorder %s8, 0
    %p89 = por %p87, %p88
    %p90 = scmp.ne.s32.totalorder %s79, %s82
    %p91 = scmp.eq.s32.totalorder %s13, 1
    %p92 = por %p90, %p91
    %p93 = scmp.ne.s32.totalorder %s82, %s83
    %p94 = scmp.eq.s32.totalorder %s13, 0
    %p95 = por %p93, %p94
    %p96 = scmp.ne.s32.totalorder %s82, %s83
    %p97 = scmp.eq.s32.totalorder %s14, 1
    %p98 = por %p96, %p97
    %p100 = scmp.ne.s32.totalorder %s83, %s99
    %p101 = scmp.eq.s32.totalorder %s14, 0
    %p102 = por %p100, %p101
    %p103 = scmp.le.s32.totalorder 1, %s8
    %p104 = scmp.lt.s32.totalorder %s8, 3
    %p105 = pnand %p103, %p104
    %p106 = pneg %p105
    // Predicated region
    $region9: #{discriminator_forward.5} parent=5 // pred_check
      _
    $region10: #{discriminator_forward.5} parent=5 // pred_check_branch
      %108 = sbr.rel (%p105) target = $region12
    $region11: #{discriminator_forward.5} parent=5 // pred_region
      %s109 = ssub.s32 %s8, 1
      // Predicated region
      $region13: #{discriminator_forward.5} parent=11 // pred_check
        %p110 = pneg %p67
      $region14: #{discriminator_forward.5} parent=11 // pred_check_branch
        %112 = sbr.rel (%p110) target = $region16
      $region15: #{discriminator_forward.5} parent=11 // pred_region
        _
      $region16: #{discriminator_forward.5} parent=11 // pred_fallthru
        _
    $region12: #{discriminator_forward.5} parent=5 // pred_fallthru
      _
    %p113 = scmp.lt.s32.totalorder %s8, 2
    // Predicated region
    $region17: #{discriminator_forward.5} parent=5 // pred_check
      %p114 = pneg %p113
    $region18: #{discriminator_forward.5} parent=5 // pred_check_branch
      %116 = sbr.rel (%p114) target = $region20
    $region19: #{discriminator_forward.5} parent=5 // pred_region
      // Predicated region
      $region21: #{discriminator_forward.5} parent=19 // pred_check
        %p117 = pneg %p40
      $region22: #{discriminator_forward.5} parent=19 // pred_check_branch
        %119 = sbr.rel (%p117) target = $region24
      $region23: #{discriminator_forward.5} parent=19 // pred_region
        %p120 = scmp.lt.s32.totalorder %s15, 1
        %s121 = scalar_select %p120, %s15, 1
        %s122 = smul.addr %s121, 204
        %s123 = smul.addr %s122, 4
        %s124 = scalar_lea.vmem %s0, %s123
      $region24: #{discriminator_forward.5} parent=19 // pred_fallthru
        _
    $region20: #{discriminator_forward.5} parent=5 // pred_fallthru
      _
    %p125 = scmp.le.s32.totalorder 1, %s8
    %p126 = scmp.lt.s32.totalorder %s8, 3
    %p127 = pnand %p125, %p126
    %p128 = pneg %p127
    // Predicated region
    $region25: #{discriminator_forward.5} parent=5 // pred_check
      _
    $region26: #{discriminator_forward.5} parent=5 // pred_check_branch
      %130 = sbr.rel (%p127) target = $region28
    $region27: #{discriminator_forward.5} parent=5 // pred_region
      %s131 = ssub.s32 %s8, 1
      %p132 = scmp.lt.s32.totalorder %s17, 1
      %s133 = scalar_select %p132, %s17, 1
      %s134 = smul.addr %s133, 204
      %s135 = smul.addr %s134, 4
      %s136 = scalar_lea.vmem %s0, %s135
      %p137 = pneg %p46
      %p138 = pneg %p43
      %p139 = pneg %p67
      %p140 = pneg %p64
      %p141 = pneg %p95
      %p142 = pneg %p92
      %s143 = smul.u32 16, %s18
      %p144 = scmp.lt.s32.totalorder %s17, 1
      %s145 = scalar_select %p144, %s17, 1
      %p146 = scmp.lt.s32.totalorder %s143, 15
      %s147 = scalar_select %p146, %s143, 15
      %s148 = smul.addr %s145, 16
      %s149 = sadd.s32 %s147, %s148
      %s150 = scalar_lea.vmem %s2, %s149
      %p151 = scmp.lt.s32.totalorder %s17, 1
      %s152 = scalar_select %p151, %s17, 1
      %s153 = smul.addr %s152, 204
      %s154 = smul.addr %s153, 4
      %s155 = scalar_lea.vmem %s0, %s154
      %s156 = smul.u32 16, %s18
      %p157 = scmp.lt.s32.totalorder %s17, 1
      %s158 = scalar_select %p157, %s17, 1
      %p159 = scmp.lt.s32.totalorder %s156, 15
      %s160 = scalar_select %p159, %s156, 15
      %s161 = smul.addr %s158, 16
      %s162 = sadd.s32 %s160, %s161
      %s163 = scalar_lea.vmem %s2, %s162
      %s164 = smul.u32 16, %s18
      %s166 = smul.u32 %s18, 16
      %s167 = smul.u32 %s166, 3
      %s168 = smul.addr %s167, 4
      %s169 = scalar_lea.vmem %s155, %s168
      %v170 = vld [vmem:[%s169] sm:$0xf]
      %v171 = vld [vmem:[%s169 + $0x4] sm:$0xf]
      %v172 = vld [vmem:[%s169 + $0xc] sm:$0xf]
      %v173 = vld [vmem:[%s169 + $0x10] sm:$0xf]
      %v174 = vld [vmem:[%s169 + $0x18] sm:$0xf]
      %v175 = vld [vmem:[%s169 + $0x1c] sm:$0xf]
      %v176 = vld [vmem:[%s169 + $0x24] sm:$0xf]
      %v177 = vld [vmem:[%s169 + $0x28] sm:$0xf]
      %v178 = vld [vmem:[%s169 + $0x30] sm:$0xf]
      %v179 = vld [vmem:[%s169 + $0x34] sm:$0xf]
      %v180 = vld [vmem:[%s169 + $0x3c] sm:$0xf]
      %v181 = vld [vmem:[%s169 + $0x40] sm:$0xf]
      %v182 = vld [vmem:[%s169 + $0x48] sm:$0xf]
      %v183 = vld [vmem:[%s169 + $0x4c] sm:$0xf]
      %v184 = vld [vmem:[%s169 + $0x54] sm:$0xf]
      %v185 = vld [vmem:[%s169 + $0x58] sm:$0xf]
      %v186 = vld [vmem:[%s169 + $0x60] sm:$0xf]
      %v187 = vld [vmem:[%s169 + $0x64] sm:$0xf]
      %v188 = vld [vmem:[%s169 + $0x6c] sm:$0xf]
      %v189 = vld [vmem:[%s169 + $0x70] sm:$0xf]
      %v190 = vld [vmem:[%s169 + $0x78] sm:$0xf]
      %v191 = vld [vmem:[%s169 + $0x7c] sm:$0xf]
      %v192 = vld [vmem:[%s169 + $0x84] sm:$0xf]
      %v193 = vld [vmem:[%s169 + $0x88] sm:$0xf]
      %v194 = vld [vmem:[%s169 + $0x90] sm:$0xf]
      %v195 = vld [vmem:[%s169 + $0x94] sm:$0xf]
      %v196 = vld [vmem:[%s169 + $0x9c] sm:$0xf]
      %v197 = vld [vmem:[%s169 + $0xa0] sm:$0xf]
      %v198 = vld [vmem:[%s169 + $0xa8] sm:$0xf]
      %v199 = vld [vmem:[%s169 + $0xac] sm:$0xf]
      %v200 = vld [vmem:[%s169 + $0xb4] sm:$0xf]
      %v201 = vld [vmem:[%s169 + $0xb8] sm:$0xf]
      %s202 = sadd.s32 %s166, 17
      %s203 = smul.u32 %s202, 3
      %s204 = smul.addr %s203, 4
      %s205 = scalar_lea.vmem %s155, %s204
      %v206 = vld [vmem:[%s205] sm:$0xf]
      %v207 = vld [vmem:[%s205 + $0x4] sm:$0xf]
      %v208 = vld [vmem:[%s205 + $0xc] sm:$0xf]
      %v209 = vld [vmem:[%s205 + $0x10] sm:$0xf]
      %v210 = vld [vmem:[%s205 + $0x18] sm:$0xf]
      %v211 = vld [vmem:[%s205 + $0x1c] sm:$0xf]
      %v212 = vld [vmem:[%s205 + $0x24] sm:$0xf]
      %v213 = vld [vmem:[%s205 + $0x28] sm:$0xf]
      %v214 = vld [vmem:[%s205 + $0x30] sm:$0xf]
      %v215 = vld [vmem:[%s205 + $0x34] sm:$0xf]
      %v216 = vld [vmem:[%s205 + $0x3c] sm:$0xf]
      %v217 = vld [vmem:[%s205 + $0x40] sm:$0xf]
      %v218 = vld [vmem:[%s205 + $0x48] sm:$0xf]
      %v219 = vld [vmem:[%s205 + $0x4c] sm:$0xf]
      %v220 = vld [vmem:[%s205 + $0x54] sm:$0xf]
      %v221 = vld [vmem:[%s205 + $0x58] sm:$0xf]
      %v222 = vld [vmem:[%s205 + $0x60] sm:$0xf]
      %v223 = vld [vmem:[%s205 + $0x64] sm:$0xf]
      %v224 = vld [vmem:[%s205 + $0x6c] sm:$0xf]
      %v225 = vld [vmem:[%s205 + $0x70] sm:$0xf]
      %v226 = vld [vmem:[%s205 + $0x78] sm:$0xf]
      %v227 = vld [vmem:[%s205 + $0x7c] sm:$0xf]
      %v228 = vld [vmem:[%s205 + $0x84] sm:$0xf]
      %v229 = vld [vmem:[%s205 + $0x88] sm:$0xf]
      %v230 = vld [vmem:[%s205 + $0x90] sm:$0xf]
      %v231 = vld [vmem:[%s205 + $0x94] sm:$0xf]
      %v232 = vld [vmem:[%s205 + $0x9c] sm:$0xf]
      %v233 = vld [vmem:[%s205 + $0xa0] sm:$0xf]
      %v234 = vld [vmem:[%s205 + $0xa8] sm:$0xf]
      %v235 = vld [vmem:[%s205 + $0xac] sm:$0xf]
      %v236 = vld [vmem:[%s205 + $0xb4] sm:$0xf]
      %v237 = vld [vmem:[%s205 + $0xb8] sm:$0xf]
      %v238 = vld [vmem:[%s169 + $0x8] sm:$0x1]
      %v239 = vld [vmem:[%s169 + $0x14] sm:$0x1]
      %v240 = vld [vmem:[%s169 + $0x20] sm:$0x1]
      %v241 = vld [vmem:[%s169 + $0x2c] sm:$0x1]
      %v242 = vld [vmem:[%s169 + $0x38] sm:$0x1]
      %v243 = vld [vmem:[%s169 + $0x44] sm:$0x1]
      %v244 = vld [vmem:[%s169 + $0x50] sm:$0x1]
      %v245 = vld [vmem:[%s169 + $0x5c] sm:$0x1]
      %v246 = vld [vmem:[%s169 + $0x68] sm:$0x1]
      %v247 = vld [vmem:[%s169 + $0x74] sm:$0x1]
      %v248 = vld [vmem:[%s169 + $0x80] sm:$0x1]
      %v249 = vld [vmem:[%s169 + $0x8c] sm:$0x1]
      %v250 = vld [vmem:[%s169 + $0x98] sm:$0x1]
      %v251 = vld [vmem:[%s169 + $0xa4] sm:$0x1]
      %v252 = vld [vmem:[%s169 + $0xb0] sm:$0x1]
      %v253 = vld [vmem:[%s169 + $0xbc] sm:$0x1]
      %vm254 = vsmask.f32 3328
      %vm255 = vsmask.f32 7440
      %vm256 = vmor %vm254, %vm255
      %v258 = vshrl.u32 %v170, 16
      %v260 = vrot.slane %v258, 4
      %v261 = vshll.u32 %v170, 16
      %v263 = vrot.slane %v261, 5
      %v264 = vor.u32 %v260, %v263
      %v265 = vrot.slane %v264, 4
      %v267 = vshll.u32 %v171, 16
      %v269 = vrot.slane %v267, 5
      %v270 = vsel %vm256, %v265, %v269
      %v271 = vshrl.u32 %v171, 16
      %v273 = vrot.slane %v271, 4
      %v274 = vor.u32 %v273, %v269
      %v275 = vrot.slane %v274, 4
      %v277 = vshll.u32 %v238, 16
      %v279 = vrot.slane %v277, 5
      %v280 = vsel %vm256, %v275, %v279
      %v282 = vshrl.u32 %v172, 16
      %v284 = vrot.slane %v282, 4
      %v285 = vshll.u32 %v172, 16
      %v287 = vrot.slane %v285, 5
      %v288 = vor.u32 %v284, %v287
      %v289 = vrot.slane %v288, 4
      %v291 = vshll.u32 %v173, 16
      %v293 = vrot.slane %v291, 5
      %v294 = vsel %vm256, %v289, %v293
      %v295 = vshrl.u32 %v173, 16
      %v297 = vrot.slane %v295, 4
      %v298 = vor.u32 %v297, %v293
      %v299 = vrot.slane %v298, 4
      %v301 = vshll.u32 %v239, 16
      %v303 = vrot.slane %v301, 5
      %v304 = vsel %vm256, %v299, %v303
      %v306 = vshrl.u32 %v174, 16
      %v308 = vrot.slane %v306, 4
      %v309 = vshll.u32 %v174, 16
      %v311 = vrot.slane %v309, 5
      %v312 = vor.u32 %v308, %v311
      %v313 = vrot.slane %v312, 4
      %v315 = vshll.u32 %v175, 16
      %v317 = vrot.slane %v315, 5
      %v318 = vsel %vm256, %v313, %v317
      %v319 = vshrl.u32 %v175, 16
      %v321 = vrot.slane %v319, 4
      %v322 = vor.u32 %v321, %v317
      %v323 = vrot.slane %v322, 4
      %v325 = vshll.u32 %v240, 16
      %v327 = vrot.slane %v325, 5
      %v328 = vsel %vm256, %v323, %v327
      %v330 = vshrl.u32 %v176, 16
      %v332 = vrot.slane %v330, 4
      %v333 = vshll.u32 %v176, 16
      %v335 = vrot.slane %v333, 5
      %v336 = vor.u32 %v332, %v335
      %v337 = vrot.slane %v336, 4
      %v339 = vshll.u32 %v177, 16
      %v341 = vrot.slane %v339, 5
      %v342 = vsel %vm256, %v337, %v341
      %v343 = vshrl.u32 %v177, 16
      %v345 = vrot.slane %v343, 4
      %v346 = vor.u32 %v345, %v341
      %v347 = vrot.slane %v346, 4
      %v349 = vshll.u32 %v241, 16
      %v351 = vrot.slane %v349, 5
      %v352 = vsel %vm256, %v347, %v351
      %v354 = vshrl.u32 %v178, 16
      %v356 = vrot.slane %v354, 4
      %v357 = vshll.u32 %v178, 16
      %v359 = vrot.slane %v357, 5
      %v360 = vor.u32 %v356, %v359
      %v361 = vrot.slane %v360, 4
      %v363 = vshll.u32 %v179, 16
      %v365 = vrot.slane %v363, 5
      %v366 = vsel %vm256, %v361, %v365
      %v367 = vshrl.u32 %v179, 16
      %v369 = vrot.slane %v367, 4
      %v370 = vor.u32 %v369, %v365
      %v371 = vrot.slane %v370, 4
      %v373 = vshll.u32 %v242, 16
      %v375 = vrot.slane %v373, 5
      %v376 = vsel %vm256, %v371, %v375
      %v378 = vshrl.u32 %v180, 16
      %v380 = vrot.slane %v378, 4
      %v381 = vshll.u32 %v180, 16
      %v383 = vrot.slane %v381, 5
      %v384 = vor.u32 %v380, %v383
      %v385 = vrot.slane %v384, 4
      %v387 = vshll.u32 %v181, 16
      %v389 = vrot.slane %v387, 5
      %v390 = vsel %vm256, %v385, %v389
      %v391 = vshrl.u32 %v181, 16
      %v393 = vrot.slane %v391, 4
      %v394 = vor.u32 %v393, %v389
      %v395 = vrot.slane %v394, 4
      %v397 = vshll.u32 %v243, 16
      %v399 = vrot.slane %v397, 5
      %v400 = vsel %vm256, %v395, %v399
      %v402 = vshrl.u32 %v182, 16
      %v404 = vrot.slane %v402, 4
      %v405 = vshll.u32 %v182, 16
      %v407 = vrot.slane %v405, 5
      %v408 = vor.u32 %v404, %v407
      %v409 = vrot.slane %v408, 4
      %v411 = vshll.u32 %v183, 16
      %v413 = vrot.slane %v411, 5
      %v414 = vsel %vm256, %v409, %v413
      %v415 = vshrl.u32 %v183, 16
      %v417 = vrot.slane %v415, 4
      %v418 = vor.u32 %v417, %v413
      %v419 = vrot.slane %v418, 4
      %v421 = vshll.u32 %v244, 16
      %v423 = vrot.slane %v421, 5
      %v424 = vsel %vm256, %v419, %v423
      %v426 = vshrl.u32 %v184, 16
      %v428 = vrot.slane %v426, 4
      %v429 = vshll.u32 %v184, 16
      %v431 = vrot.slane %v429, 5
      %v432 = vor.u32 %v428, %v431
      %v433 = vrot.slane %v432, 4
      %v435 = vshll.u32 %v185, 16
      %v437 = vrot.slane %v435, 5
      %v438 = vsel %vm256, %v433, %v437
      %v439 = vshrl.u32 %v185, 16
      %v441 = vrot.slane %v439, 4
      %v442 = vor.u32 %v441, %v437
      %v443 = vrot.slane %v442, 4
      %v445 = vshll.u32 %v245, 16
      %v447 = vrot.slane %v445, 5
      %v448 = vsel %vm256, %v443, %v447
      %v450 = vshrl.u32 %v186, 16
      %v452 = vrot.slane %v450, 4
      %v453 = vshll.u32 %v186, 16
      %v455 = vrot.slane %v453, 5
      %v456 = vor.u32 %v452, %v455
      %v457 = vrot.slane %v456, 4
      %v459 = vshll.u32 %v187, 16
      %v461 = vrot.slane %v459, 5
      %v462 = vsel %vm256, %v457, %v461
      %v463 = vshrl.u32 %v187, 16
      %v465 = vrot.slane %v463, 4
      %v466 = vor.u32 %v465, %v461
      %v467 = vrot.slane %v466, 4
      %v469 = vshll.u32 %v246, 16
      %v471 = vrot.slane %v469, 5
      %v472 = vsel %vm256, %v467, %v471
      %v474 = vshrl.u32 %v188, 16
      %v476 = vrot.slane %v474, 4
      %v477 = vshll.u32 %v188, 16
      %v479 = vrot.slane %v477, 5
      %v480 = vor.u32 %v476, %v479
      %v481 = vrot.slane %v480, 4
      %v483 = vshll.u32 %v189, 16
      %v485 = vrot.slane %v483, 5
      %v486 = vsel %vm256, %v481, %v485
      %v487 = vshrl.u32 %v189, 16
      %v489 = vrot.slane %v487, 4
      %v490 = vor.u32 %v489, %v485
      %v491 = vrot.slane %v490, 4
      %v493 = vshll.u32 %v247, 16
      %v495 = vrot.slane %v493, 5
      %v496 = vsel %vm256, %v491, %v495
      %v498 = vshrl.u32 %v190, 16
      %v500 = vrot.slane %v498, 4
      %v501 = vshll.u32 %v190, 16
      %v503 = vrot.slane %v501, 5
      %v504 = vor.u32 %v500, %v503
      %v505 = vrot.slane %v504, 4
      %v507 = vshll.u32 %v191, 16
      %v509 = vrot.slane %v507, 5
      %v510 = vsel %vm256, %v505, %v509
      %v511 = vshrl.u32 %v191, 16
      %v513 = vrot.slane %v511, 4
      %v514 = vor.u32 %v513, %v509
      %v515 = vrot.slane %v514, 4
      %v517 = vshll.u32 %v248, 16
      %v519 = vrot.slane %v517, 5
      %v520 = vsel %vm256, %v515, %v519
      %v522 = vshrl.u32 %v192, 16
      %v524 = vrot.slane %v522, 4
      %v525 = vshll.u32 %v192, 16
      %v527 = vrot.slane %v525, 5
      %v528 = vor.u32 %v524, %v527
      %v529 = vrot.slane %v528, 4
      %v531 = vshll.u32 %v193, 16
      %v533 = vrot.slane %v531, 5
      %v534 = vsel %vm256, %v529, %v533
      %v535 = vshrl.u32 %v193, 16
      %v537 = vrot.slane %v535, 4
      %v538 = vor.u32 %v537, %v533
      %v539 = vrot.slane %v538, 4
      %v541 = vshll.u32 %v249, 16
      %v543 = vrot.slane %v541, 5
      %v544 = vsel %vm256, %v539, %v543
      %v546 = vshrl.u32 %v194, 16
      %v548 = vrot.slane %v546, 4
      %v549 = vshll.u32 %v194, 16
      %v551 = vrot.slane %v549, 5
      %v552 = vor.u32 %v548, %v551
      %v553 = vrot.slane %v552, 4
      %v555 = vshll.u32 %v195, 16
      %v557 = vrot.slane %v555, 5
      %v558 = vsel %vm256, %v553, %v557
      %v559 = vshrl.u32 %v195, 16
      %v561 = vrot.slane %v559, 4
      %v562 = vor.u32 %v561, %v557
      %v563 = vrot.slane %v562, 4
      %v565 = vshll.u32 %v250, 16
      %v567 = vrot.slane %v565, 5
      %v568 = vsel %vm256, %v563, %v567
      %v570 = vshrl.u32 %v196, 16
      %v572 = vrot.slane %v570, 4
      %v573 = vshll.u32 %v196, 16
      %v575 = vrot.slane %v573, 5
      %v576 = vor.u32 %v572, %v575
      %v577 = vrot.slane %v576, 4
      %v579 = vshll.u32 %v197, 16
      %v581 = vrot.slane %v579, 5
      %v582 = vsel %vm256, %v577, %v581
      %v583 = vshrl.u32 %v197, 16
      %v585 = vrot.slane %v583, 4
      %v586 = vor.u32 %v585, %v581
      %v587 = vrot.slane %v586, 4
      %v589 = vshll.u32 %v251, 16
      %v591 = vrot.slane %v589, 5
      %v592 = vsel %vm256, %v587, %v591
      %v594 = vshrl.u32 %v198, 16
      %v596 = vrot.slane %v594, 4
      %v597 = vshll.u32 %v198, 16
      %v599 = vrot.slane %v597, 5
      %v600 = vor.u32 %v596, %v599
      %v601 = vrot.slane %v600, 4
      %v603 = vshll.u32 %v199, 16
      %v605 = vrot.slane %v603, 5
      %v606 = vsel %vm256, %v601, %v605
      %v607 = vshrl.u32 %v199, 16
      %v609 = vrot.slane %v607, 4
      %v610 = vor.u32 %v609, %v605
      %v611 = vrot.slane %v610, 4
      %v613 = vshll.u32 %v252, 16
      %v615 = vrot.slane %v613, 5
      %v616 = vsel %vm256, %v611, %v615
      %v618 = vshrl.u32 %v200, 16
      %v620 = vrot.slane %v618, 4
      %v621 = vshll.u32 %v200, 16
      %v623 = vrot.slane %v621, 5
      %v624 = vor.u32 %v620, %v623
      %v625 = vrot.slane %v624, 4
      %v627 = vshll.u32 %v201, 16
      %v629 = vrot.slane %v627, 5
      %v630 = vsel %vm256, %v625, %v629
      %v631 = vshrl.u32 %v201, 16
      %v633 = vrot.slane %v631, 4
      %v634 = vor.u32 %v633, %v629
      %v635 = vrot.slane %v634, 4
      %v637 = vshll.u32 %v253, 16
      %v639 = vrot.slane %v637, 5
      %v640 = vsel %vm256, %v635, %v639
      %s641 = sadd.s32 %s166, 34
      %s642 = smul.u32 %s641, 3
      %s643 = smul.addr %s642, 4
      %s644 = scalar_lea.vmem %s155, %s643
      %v645 = vld [vmem:[%s644] sm:$0xf]
      %v646 = vld [vmem:[%s644 + $0x4] sm:$0xf]
      %v647 = vld [vmem:[%s644 + $0xc] sm:$0xf]
      %v648 = vld [vmem:[%s644 + $0x10] sm:$0xf]
      %v649 = vld [vmem:[%s644 + $0x18] sm:$0xf]
      %v650 = vld [vmem:[%s644 + $0x1c] sm:$0xf]
      %v651 = vld [vmem:[%s644 + $0x24] sm:$0xf]
      %v652 = vld [vmem:[%s644 + $0x28] sm:$0xf]
      %v653 = vld [vmem:[%s644 + $0x30] sm:$0xf]
      %v654 = vld [vmem:[%s644 + $0x34] sm:$0xf]
      %v655 = vld [vmem:[%s644 + $0x3c] sm:$0xf]
      %v656 = vld [vmem:[%s644 + $0x40] sm:$0xf]
      %v657 = vld [vmem:[%s644 + $0x48] sm:$0xf]
      %v658 = vld [vmem:[%s644 + $0x4c] sm:$0xf]
      %v659 = vld [vmem:[%s644 + $0x54] sm:$0xf]
      %v660 = vld [vmem:[%s644 + $0x58] sm:$0xf]
      %v661 = vld [vmem:[%s644 + $0x60] sm:$0xf]
      %v662 = vld [vmem:[%s644 + $0x64] sm:$0xf]
      %v663 = vld [vmem:[%s644 + $0x6c] sm:$0xf]
      %v664 = vld [vmem:[%s644 + $0x70] sm:$0xf]
      %v665 = vld [vmem:[%s644 + $0x78] sm:$0xf]
      %v666 = vld [vmem:[%s644 + $0x7c] sm:$0xf]
      %v667 = vld [vmem:[%s644 + $0x84] sm:$0xf]
      %v668 = vld [vmem:[%s644 + $0x88] sm:$0xf]
      %v669 = vld [vmem:[%s644 + $0x90] sm:$0xf]
      %v670 = vld [vmem:[%s644 + $0x94] sm:$0xf]
      %v671 = vld [vmem:[%s644 + $0x9c] sm:$0xf]
      %v672 = vld [vmem:[%s644 + $0xa0] sm:$0xf]
      %v673 = vld [vmem:[%s644 + $0xa8] sm:$0xf]
      %v674 = vld [vmem:[%s644 + $0xac] sm:$0xf]
      %v675 = vld [vmem:[%s644 + $0xb4] sm:$0xf]
      %v676 = vld [vmem:[%s644 + $0xb8] sm:$0xf]
      %s677 = sadd.s32 %s166, 51
      %s678 = smul.u32 %s677, 3
      %s679 = smul.addr %s678, 4
      %s680 = scalar_lea.vmem %s155, %s679
      %v681 = vld [vmem:[%s680] sm:$0xf]
      %v682 = vld [vmem:[%s680 + $0x4] sm:$0xf]
      %v683 = vld [vmem:[%s680 + $0xc] sm:$0xf]
      %v684 = vld [vmem:[%s680 + $0x10] sm:$0xf]
      %v685 = vld [vmem:[%s680 + $0x18] sm:$0xf]
      %v686 = vld [vmem:[%s680 + $0x1c] sm:$0xf]
      %v687 = vld [vmem:[%s680 + $0x24] sm:$0xf]
      %v688 = vld [vmem:[%s680 + $0x28] sm:$0xf]
      %v689 = vld [vmem:[%s680 + $0x30] sm:$0xf]
      %v690 = vld [vmem:[%s680 + $0x34] sm:$0xf]
      %v691 = vld [vmem:[%s680 + $0x3c] sm:$0xf]
      %v692 = vld [vmem:[%s680 + $0x40] sm:$0xf]
      %v693 = vld [vmem:[%s680 + $0x48] sm:$0xf]
      %v694 = vld [vmem:[%s680 + $0x4c] sm:$0xf]
      %v695 = vld [vmem:[%s680 + $0x54] sm:$0xf]
      %v696 = vld [vmem:[%s680 + $0x58] sm:$0xf]
      %v697 = vld [vmem:[%s680 + $0x60] sm:$0xf]
      %v698 = vld [vmem:[%s680 + $0x64] sm:$0xf]
      %v699 = vld [vmem:[%s680 + $0x6c] sm:$0xf]
      %v700 = vld [vmem:[%s680 + $0x70] sm:$0xf]
      %v701 = vld [vmem:[%s680 + $0x78] sm:$0xf]
      %v702 = vld [vmem:[%s680 + $0x7c] sm:$0xf]
      %v703 = vld [vmem:[%s680 + $0x84] sm:$0xf]
      %v704 = vld [vmem:[%s680 + $0x88] sm:$0xf]
      %v705 = vld [vmem:[%s680 + $0x90] sm:$0xf]
      %v706 = vld [vmem:[%s680 + $0x94] sm:$0xf]
      %v707 = vld [vmem:[%s680 + $0x9c] sm:$0xf]
      %v708 = vld [vmem:[%s680 + $0xa0] sm:$0xf]
      %v709 = vld [vmem:[%s680 + $0xa8] sm:$0xf]
      %v710 = vld [vmem:[%s680 + $0xac] sm:$0xf]
      %v711 = vld [vmem:[%s680 + $0xb4] sm:$0xf]
      %v712 = vld [vmem:[%s680 + $0xb8] sm:$0xf]
      %v713 = vld [vmem:[%s644 + $0x8] sm:$0x1]
      %v714 = vld [vmem:[%s644 + $0x14] sm:$0x1]
      %v715 = vld [vmem:[%s644 + $0x20] sm:$0x1]
      %v716 = vld [vmem:[%s644 + $0x2c] sm:$0x1]
      %v717 = vld [vmem:[%s644 + $0x38] sm:$0x1]
      %v718 = vld [vmem:[%s644 + $0x44] sm:$0x1]
      %v719 = vld [vmem:[%s644 + $0x50] sm:$0x1]
      %v720 = vld [vmem:[%s644 + $0x5c] sm:$0x1]
      %v721 = vld [vmem:[%s644 + $0x68] sm:$0x1]
      %v722 = vld [vmem:[%s644 + $0x74] sm:$0x1]
      %v723 = vld [vmem:[%s644 + $0x80] sm:$0x1]
      %v724 = vld [vmem:[%s644 + $0x8c] sm:$0x1]
      %v725 = vld [vmem:[%s644 + $0x98] sm:$0x1]
      %v726 = vld [vmem:[%s644 + $0xa4] sm:$0x1]
      %v727 = vld [vmem:[%s644 + $0xb0] sm:$0x1]
      %v728 = vld [vmem:[%s644 + $0xbc] sm:$0x1]
      %v730 = vshrl.u32 %v645, 16
      %v732 = vrot.slane %v730, 4
      %v733 = vshll.u32 %v645, 16
      %v735 = vrot.slane %v733, 5
      %v736 = vor.u32 %v732, %v735
      %v737 = vrot.slane %v736, 4
      %v739 = vshll.u32 %v646, 16
      %v741 = vrot.slane %v739, 5
      %v742 = vsel %vm256, %v737, %v741
      %v743 = vshrl.u32 %v646, 16
      %v745 = vrot.slane %v743, 4
      %v746 = vor.u32 %v745, %v741
      %v747 = vrot.slane %v746, 4
      %v749 = vshll.u32 %v713, 16
      %v751 = vrot.slane %v749, 5
      %v752 = vsel %vm256, %v747, %v751
      %v754 = vshrl.u32 %v647, 16
      %v756 = vrot.slane %v754, 4
      %v757 = vshll.u32 %v647, 16
      %v759 = vrot.slane %v757, 5
      %v760 = vor.u32 %v756, %v759
      %v761 = vrot.slane %v760, 4
      %v763 = vshll.u32 %v648, 16
      %v765 = vrot.slane %v763, 5
      %v766 = vsel %vm256, %v761, %v765
      %v767 = vshrl.u32 %v648, 16
      %v769 = vrot.slane %v767, 4
      %v770 = vor.u32 %v769, %v765
      %v771 = vrot.slane %v770, 4
      %v773 = vshll.u32 %v714, 16
      %v775 = vrot.slane %v773, 5
      %v776 = vsel %vm256, %v771, %v775
      %v778 = vshrl.u32 %v649, 16
      %v780 = vrot.slane %v778, 4
      %v781 = vshll.u32 %v649, 16
      %v783 = vrot.slane %v781, 5
      %v784 = vor.u32 %v780, %v783
      %v785 = vrot.slane %v784, 4
      %v787 = vshll.u32 %v650, 16
      %v789 = vrot.slane %v787, 5
      %v790 = vsel %vm256, %v785, %v789
      %v791 = vshrl.u32 %v650, 16
      %v793 = vrot.slane %v791, 4
      %v794 = vor.u32 %v793, %v789
      %v795 = vrot.slane %v794, 4
      %v797 = vshll.u32 %v715, 16
      %v799 = vrot.slane %v797, 5
      %v800 = vsel %vm256, %v795, %v799
      %v802 = vshrl.u32 %v651, 16
      %v804 = vrot.slane %v802, 4
      %v805 = vshll.u32 %v651, 16
      %v807 = vrot.slane %v805, 5
      %v808 = vor.u32 %v804, %v807
      %v809 = vrot.slane %v808, 4
      %v811 = vshll.u32 %v652, 16
      %v813 = vrot.slane %v811, 5
      %v814 = vsel %vm256, %v809, %v813
      %v815 = vshrl.u32 %v652, 16
      %v817 = vrot.slane %v815, 4
      %v818 = vor.u32 %v817, %v813
      %v819 = vrot.slane %v818, 4
      %v821 = vshll.u32 %v716, 16
      %v823 = vrot.slane %v821, 5
      %v824 = vsel %vm256, %v819, %v823
      %v826 = vshrl.u32 %v653, 16
      %v828 = vrot.slane %v826, 4
      %v829 = vshll.u32 %v653, 16
      %v831 = vrot.slane %v829, 5
      %v832 = vor.u32 %v828, %v831
      %v833 = vrot.slane %v832, 4
      %v835 = vshll.u32 %v654, 16
      %v837 = vrot.slane %v835, 5
      %v838 = vsel %vm256, %v833, %v837
      %v839 = vshrl.u32 %v654, 16
      %v841 = vrot.slane %v839, 4
      %v842 = vor.u32 %v841, %v837
      %v843 = vrot.slane %v842, 4
      %v845 = vshll.u32 %v717, 16
      %v847 = vrot.slane %v845, 5
      %v848 = vsel %vm256, %v843, %v847
      %v850 = vshrl.u32 %v655, 16
      %v852 = vrot.slane %v850, 4
      %v853 = vshll.u32 %v655, 16
      %v855 = vrot.slane %v853, 5
      %v856 = vor.u32 %v852, %v855
      %v857 = vrot.slane %v856, 4
      %v859 = vshll.u32 %v656, 16
      %v861 = vrot.slane %v859, 5
      %v862 = vsel %vm256, %v857, %v861
      %v863 = vshrl.u32 %v656, 16
      %v865 = vrot.slane %v863, 4
      %v866 = vor.u32 %v865, %v861
      %v867 = vrot.slane %v866, 4
      %v869 = vshll.u32 %v718, 16
      %v871 = vrot.slane %v869, 5
      %v872 = vsel %vm256, %v867, %v871
      %v874 = vshrl.u32 %v657, 16
      %v876 = vrot.slane %v874, 4
      %v877 = vshll.u32 %v657, 16
      %v879 = vrot.slane %v877, 5
      %v880 = vor.u32 %v876, %v879
      %v881 = vrot.slane %v880, 4
      %v883 = vshll.u32 %v658, 16
      %v885 = vrot.slane %v883, 5
      %v886 = vsel %vm256, %v881, %v885
      %v887 = vshrl.u32 %v658, 16
      %v889 = vrot.slane %v887, 4
      %v890 = vor.u32 %v889, %v885
      %v891 = vrot.slane %v890, 4
      %v893 = vshll.u32 %v719, 16
      %v895 = vrot.slane %v893, 5
      %v896 = vsel %vm256, %v891, %v895
      %v898 = vshrl.u32 %v659, 16
      %v900 = vrot.slane %v898, 4
      %v901 = vshll.u32 %v659, 16
      %v903 = vrot.slane %v901, 5
      %v904 = vor.u32 %v900, %v903
      %v905 = vrot.slane %v904, 4
      %v907 = vshll.u32 %v660, 16
      %v909 = vrot.slane %v907, 5
      %v910 = vsel %vm256, %v905, %v909
      %v911 = vshrl.u32 %v660, 16
      %v913 = vrot.slane %v911, 4
      %v914 = vor.u32 %v913, %v909
      %v915 = vrot.slane %v914, 4
      %v917 = vshll.u32 %v720, 16
      %v919 = vrot.slane %v917, 5
      %v920 = vsel %vm256, %v915, %v919
      %v922 = vshrl.u32 %v661, 16
      %v924 = vrot.slane %v922, 4
      %v925 = vshll.u32 %v661, 16
      %v927 = vrot.slane %v925, 5
      %v928 = vor.u32 %v924, %v927
      %v929 = vrot.slane %v928, 4
      %v931 = vshll.u32 %v662, 16
      %v933 = vrot.slane %v931, 5
      %v934 = vsel %vm256, %v929, %v933
      %v935 = vshrl.u32 %v662, 16
      %v937 = vrot.slane %v935, 4
      %v938 = vor.u32 %v937, %v933
      %v939 = vrot.slane %v938, 4
      %v941 = vshll.u32 %v721, 16
      %v943 = vrot.slane %v941, 5
      %v944 = vsel %vm256, %v939, %v943
      %v946 = vshrl.u32 %v663, 16
      %v948 = vrot.slane %v946, 4
      %v949 = vshll.u32 %v663, 16
      %v951 = vrot.slane %v949, 5
      %v952 = vor.u32 %v948, %v951
      %v953 = vrot.slane %v952, 4
      %v955 = vshll.u32 %v664, 16
      %v957 = vrot.slane %v955, 5
      %v958 = vsel %vm256, %v953, %v957
      %v959 = vshrl.u32 %v664, 16
      %v961 = vrot.slane %v959, 4
      %v962 = vor.u32 %v961, %v957
      %v963 = vrot.slane %v962, 4
      %v965 = vshll.u32 %v722, 16
      %v967 = vrot.slane %v965, 5
      %v968 = vsel %vm256, %v963, %v967
      %v970 = vshrl.u32 %v665, 16
      %v972 = vrot.slane %v970, 4
      %v973 = vshll.u32 %v665, 16
      %v975 = vrot.slane %v973, 5
      %v976 = vor.u32 %v972, %v975
      %v977 = vrot.slane %v976, 4
      %v979 = vshll.u32 %v666, 16
      %v981 = vrot.slane %v979, 5
      %v982 = vsel %vm256, %v977, %v981
      %v983 = vshrl.u32 %v666, 16
      %v985 = vrot.slane %v983, 4
      %v986 = vor.u32 %v985, %v981
      %v987 = vrot.slane %v986, 4
      %v989 = vshll.u32 %v723, 16
      %v991 = vrot.slane %v989, 5
      %v992 = vsel %vm256, %v987, %v991
      %v994 = vshrl.u32 %v667, 16
      %v996 = vrot.slane %v994, 4
      %v997 = vshll.u32 %v667, 16
      %v999 = vrot.slane %v997, 5
      %v1000 = vor.u32 %v996, %v999
      %v1001 = vrot.slane %v1000, 4
      %v1003 = vshll.u32 %v668, 16
      %v1005 = vrot.slane %v1003, 5
      %v1006 = vsel %vm256, %v1001, %v1005
      %v1007 = vshrl.u32 %v668, 16
      %v1009 = vrot.slane %v1007, 4
      %v1010 = vor.u32 %v1009, %v1005
      %v1011 = vrot.slane %v1010, 4
      %v1013 = vshll.u32 %v724, 16
      %v1015 = vrot.slane %v1013, 5
      %v1016 = vsel %vm256, %v1011, %v1015
      %v1018 = vshrl.u32 %v669, 16
      %v1020 = vrot.slane %v1018, 4
      %v1021 = vshll.u32 %v669, 16
      %v1023 = vrot.slane %v1021, 5
      %v1024 = vor.u32 %v1020, %v1023
      %v1025 = vrot.slane %v1024, 4
      %v1027 = vshll.u32 %v670, 16
      %v1029 = vrot.slane %v1027, 5
      %v1030 = vsel %vm256, %v1025, %v1029
      %v1031 = vshrl.u32 %v670, 16
      %v1033 = vrot.slane %v1031, 4
      %v1034 = vor.u32 %v1033, %v1029
      %v1035 = vrot.slane %v1034, 4
      %v1037 = vshll.u32 %v725, 16
      %v1039 = vrot.slane %v1037, 5
      %v1040 = vsel %vm256, %v1035, %v1039
      %v1042 = vshrl.u32 %v671, 16
      %v1044 = vrot.slane %v1042, 4
      %v1045 = vshll.u32 %v671, 16
      %v1047 = vrot.slane %v1045, 5
      %v1048 = vor.u32 %v1044, %v1047
      %v1049 = vrot.slane %v1048, 4
      %v1051 = vshll.u32 %v672, 16
      %v1053 = vrot.slane %v1051, 5
      %v1054 = vsel %vm256, %v1049, %v1053
      %v1055 = vshrl.u32 %v672, 16
      %v1057 = vrot.slane %v1055, 4
      %v1058 = vor.u32 %v1057, %v1053
      %v1059 = vrot.slane %v1058, 4
      %v1061 = vshll.u32 %v726, 16
      %v1063 = vrot.slane %v1061, 5
      %v1064 = vsel %vm256, %v1059, %v1063
      %v1066 = vshrl.u32 %v673, 16
      %v1068 = vrot.slane %v1066, 4
      %v1069 = vshll.u32 %v673, 16
      %v1071 = vrot.slane %v1069, 5
      %v1072 = vor.u32 %v1068, %v1071
      %v1073 = vrot.slane %v1072, 4
      %v1075 = vshll.u32 %v674, 16
      %v1077 = vrot.slane %v1075, 5
      %v1078 = vsel %vm256, %v1073, %v1077
      %v1079 = vshrl.u32 %v674, 16
      %v1081 = vrot.slane %v1079, 4
      %v1082 = vor.u32 %v1081, %v1077
      %v1083 = vrot.slane %v1082, 4
      %v1085 = vshll.u32 %v727, 16
      %v1087 = vrot.slane %v1085, 5
      %v1088 = vsel %vm256, %v1083, %v1087
      %v1090 = vshrl.u32 %v675, 16
      %v1092 = vrot.slane %v1090, 4
      %v1093 = vshll.u32 %v675, 16
      %v1095 = vrot.slane %v1093, 5
      %v1096 = vor.u32 %v1092, %v1095
      %v1097 = vrot.slane %v1096, 4
      %v1099 = vshll.u32 %v676, 16
      %v1101 = vrot.slane %v1099, 5
      %v1102 = vsel %vm256, %v1097, %v1101
      %v1103 = vshrl.u32 %v676, 16
      %v1105 = vrot.slane %v1103, 4
      %v1106 = vor.u32 %v1105, %v1101
      %v1107 = vrot.slane %v1106, 4
      %v1109 = vshll.u32 %v728, 16
      %v1111 = vrot.slane %v1109, 5
      %v1112 = vsel %vm256, %v1107, %v1111
      %s1113 = sadd.s32 %s166, 1
      %s1114 = smul.u32 %s1113, 3
      %s1115 = smul.addr %s1114, 4
      %s1116 = scalar_lea.vmem %s155, %s1115
      %v1117 = vld [vmem:[%s1116] sm:$0xf]
      %v1118 = vld [vmem:[%s1116 + $0x4] sm:$0xf]
      %v1119 = vld [vmem:[%s1116 + $0xc] sm:$0xf]
      %v1120 = vld [vmem:[%s1116 + $0x10] sm:$0xf]
      %v1121 = vld [vmem:[%s1116 + $0x18] sm:$0xf]
      %v1122 = vld [vmem:[%s1116 + $0x1c] sm:$0xf]
      %v1123 = vld [vmem:[%s1116 + $0x24] sm:$0xf]
      %v1124 = vld [vmem:[%s1116 + $0x28] sm:$0xf]
      %v1125 = vld [vmem:[%s1116 + $0x30] sm:$0xf]
      %v1126 = vld [vmem:[%s1116 + $0x34] sm:$0xf]
      %v1127 = vld [vmem:[%s1116 + $0x3c] sm:$0xf]
      %v1128 = vld [vmem:[%s1116 + $0x40] sm:$0xf]
      %v1129 = vld [vmem:[%s1116 + $0x48] sm:$0xf]
      %v1130 = vld [vmem:[%s1116 + $0x4c] sm:$0xf]
      %v1131 = vld [vmem:[%s1116 + $0x54] sm:$0xf]
      %v1132 = vld [vmem:[%s1116 + $0x58] sm:$0xf]
      %v1133 = vld [vmem:[%s1116 + $0x60] sm:$0xf]
      %v1134 = vld [vmem:[%s1116 + $0x64] sm:$0xf]
      %v1135 = vld [vmem:[%s1116 + $0x6c] sm:$0xf]
      %v1136 = vld [vmem:[%s1116 + $0x70] sm:$0xf]
      %v1137 = vld [vmem:[%s1116 + $0x78] sm:$0xf]
      %v1138 = vld [vmem:[%s1116 + $0x7c] sm:$0xf]
      %v1139 = vld [vmem:[%s1116 + $0x84] sm:$0xf]
      %v1140 = vld [vmem:[%s1116 + $0x88] sm:$0xf]
      %v1141 = vld [vmem:[%s1116 + $0x90] sm:$0xf]
      %v1142 = vld [vmem:[%s1116 + $0x94] sm:$0xf]
      %v1143 = vld [vmem:[%s1116 + $0x9c] sm:$0xf]
      %v1144 = vld [vmem:[%s1116 + $0xa0] sm:$0xf]
      %v1145 = vld [vmem:[%s1116 + $0xa8] sm:$0xf]
      %v1146 = vld [vmem:[%s1116 + $0xac] sm:$0xf]
      %v1147 = vld [vmem:[%s1116 + $0xb4] sm:$0xf]
      %v1148 = vld [vmem:[%s1116 + $0xb8] sm:$0xf]
      %s1149 = sadd.s32 %s166, 18
      %s1150 = smul.u32 %s1149, 3
      %s1151 = smul.addr %s1150, 4
      %s1152 = scalar_lea.vmem %s155, %s1151
      %v1153 = vld [vmem:[%s1152] sm:$0xf]
      %v1154 = vld [vmem:[%s1152 + $0x4] sm:$0xf]
      %v1155 = vld [vmem:[%s1152 + $0xc] sm:$0xf]
      %v1156 = vld [vmem:[%s1152 + $0x10] sm:$0xf]
      %v1157 = vld [vmem:[%s1152 + $0x18] sm:$0xf]
      %v1158 = vld [vmem:[%s1152 + $0x1c] sm:$0xf]
      %v1159 = vld [vmem:[%s1152 + $0x24] sm:$0xf]
      %v1160 = vld [vmem:[%s1152 + $0x28] sm:$0xf]
      %v1161 = vld [vmem:[%s1152 + $0x30] sm:$0xf]
      %v1162 = vld [vmem:[%s1152 + $0x34] sm:$0xf]
      %v1163 = vld [vmem:[%s1152 + $0x3c] sm:$0xf]
      %v1164 = vld [vmem:[%s1152 + $0x40] sm:$0xf]
      %v1165 = vld [vmem:[%s1152 + $0x48] sm:$0xf]
      %v1166 = vld [vmem:[%s1152 + $0x4c] sm:$0xf]
      %v1167 = vld [vmem:[%s1152 + $0x54] sm:$0xf]
      %v1168 = vld [vmem:[%s1152 + $0x58] sm:$0xf]
      %v1169 = vld [vmem:[%s1152 + $0x60] sm:$0xf]
      %v1170 = vld [vmem:[%s1152 + $0x64] sm:$0xf]
      %v1171 = vld [vmem:[%s1152 + $0x6c] sm:$0xf]
      %v1172 = vld [vmem:[%s1152 + $0x70] sm:$0xf]
      %v1173 = vld [vmem:[%s1152 + $0x78] sm:$0xf]
      %v1174 = vld [vmem:[%s1152 + $0x7c] sm:$0xf]
      %v1175 = vld [vmem:[%s1152 + $0x84] sm:$0xf]
      %v1176 = vld [vmem:[%s1152 + $0x88] sm:$0xf]
      %v1177 = vld [vmem:[%s1152 + $0x90] sm:$0xf]
      %v1178 = vld [vmem:[%s1152 + $0x94] sm:$0xf]
      %v1179 = vld [vmem:[%s1152 + $0x9c] sm:$0xf]
      %v1180 = vld [vmem:[%s1152 + $0xa0] sm:$0xf]
      %v1181 = vld [vmem:[%s1152 + $0xa8] sm:$0xf]
      %v1182 = vld [vmem:[%s1152 + $0xac] sm:$0xf]
      %v1183 = vld [vmem:[%s1152 + $0xb4] sm:$0xf]
      %v1184 = vld [vmem:[%s1152 + $0xb8] sm:$0xf]
      %v1185 = vld [vmem:[%s1116 + $0x8] sm:$0x1]
      %v1186 = vld [vmem:[%s1116 + $0x14] sm:$0x1]
      %v1187 = vld [vmem:[%s1116 + $0x20] sm:$0x1]
      %v1188 = vld [vmem:[%s1116 + $0x2c] sm:$0x1]
      %v1189 = vld [vmem:[%s1116 + $0x38] sm:$0x1]
      %v1190 = vld [vmem:[%s1116 + $0x44] sm:$0x1]
      %v1191 = vld [vmem:[%s1116 + $0x50] sm:$0x1]
      %v1192 = vld [vmem:[%s1116 + $0x5c] sm:$0x1]
      %v1193 = vld [vmem:[%s1116 + $0x68] sm:$0x1]
      %v1194 = vld [vmem:[%s1116 + $0x74] sm:$0x1]
      %v1195 = vld [vmem:[%s1116 + $0x80] sm:$0x1]
      %v1196 = vld [vmem:[%s1116 + $0x8c] sm:$0x1]
      %v1197 = vld [vmem:[%s1116 + $0x98] sm:$0x1]
      %v1198 = vld [vmem:[%s1116 + $0xa4] sm:$0x1]
      %v1199 = vld [vmem:[%s1116 + $0xb0] sm:$0x1]
      %v1200 = vld [vmem:[%s1116 + $0xbc] sm:$0x1]
      %v1202 = vshrl.u32 %v1117, 16
      %v1204 = vrot.slane %v1202, 4
      %v1205 = vshll.u32 %v1117, 16
      %v1207 = vrot.slane %v1205, 5
      %v1208 = vor.u32 %v1204, %v1207
      %v1209 = vrot.slane %v1208, 4
      %v1211 = vshll.u32 %v1118, 16
      %v1213 = vrot.slane %v1211, 5
      %v1214 = vsel %vm256, %v1209, %v1213
      %v1215 = vshrl.u32 %v1118, 16
      %v1217 = vrot.slane %v1215, 4
      %v1218 = vor.u32 %v1217, %v1213
      %v1219 = vrot.slane %v1218, 4
      %v1221 = vshll.u32 %v1185, 16
      %v1223 = vrot.slane %v1221, 5
      %v1224 = vsel %vm256, %v1219, %v1223
      %v1226 = vshrl.u32 %v1119, 16
      %v1228 = vrot.slane %v1226, 4
      %v1229 = vshll.u32 %v1119, 16
      %v1231 = vrot.slane %v1229, 5
      %v1232 = vor.u32 %v1228, %v1231
      %v1233 = vrot.slane %v1232, 4
      %v1235 = vshll.u32 %v1120, 16
      %v1237 = vrot.slane %v1235, 5
      %v1238 = vsel %vm256, %v1233, %v1237
      %v1239 = vshrl.u32 %v1120, 16
      %v1241 = vrot.slane %v1239, 4
      %v1242 = vor.u32 %v1241, %v1237
      %v1243 = vrot.slane %v1242, 4
      %v1245 = vshll.u32 %v1186, 16
      %v1247 = vrot.slane %v1245, 5
      %v1248 = vsel %vm256, %v1243, %v1247
      %v1250 = vshrl.u32 %v1121, 16
      %v1252 = vrot.slane %v1250, 4
      %v1253 = vshll.u32 %v1121, 16
      %v1255 = vrot.slane %v1253, 5
      %v1256 = vor.u32 %v1252, %v1255
      %v1257 = vrot.slane %v1256, 4
      %v1259 = vshll.u32 %v1122, 16
      %v1261 = vrot.slane %v1259, 5
      %v1262 = vsel %vm256, %v1257, %v1261
      %v1263 = vshrl.u32 %v1122, 16
      %v1265 = vrot.slane %v1263, 4
      %v1266 = vor.u32 %v1265, %v1261
      %v1267 = vrot.slane %v1266, 4
      %v1269 = vshll.u32 %v1187, 16
      %v1271 = vrot.slane %v1269, 5
      %v1272 = vsel %vm256, %v1267, %v1271
      %v1274 = vshrl.u32 %v1123, 16
      %v1276 = vrot.slane %v1274, 4
      %v1277 = vshll.u32 %v1123, 16
      %v1279 = vrot.slane %v1277, 5
      %v1280 = vor.u32 %v1276, %v1279
      %v1281 = vrot.slane %v1280, 4
      %v1283 = vshll.u32 %v1124, 16
      %v1285 = vrot.slane %v1283, 5
      %v1286 = vsel %vm256, %v1281, %v1285
      %v1287 = vshrl.u32 %v1124, 16
      %v1289 = vrot.slane %v1287, 4
      %v1290 = vor.u32 %v1289, %v1285
      %v1291 = vrot.slane %v1290, 4
      %v1293 = vshll.u32 %v1188, 16
      %v1295 = vrot.slane %v1293, 5
      %v1296 = vsel %vm256, %v1291, %v1295
      %v1298 = vshrl.u32 %v1125, 16
      %v1300 = vrot.slane %v1298, 4
      %v1301 = vshll.u32 %v1125, 16
      %v1303 = vrot.slane %v1301, 5
      %v1304 = vor.u32 %v1300, %v1303
      %v1305 = vrot.slane %v1304, 4
      %v1307 = vshll.u32 %v1126, 16
      %v1309 = vrot.slane %v1307, 5
      %v1310 = vsel %vm256, %v1305, %v1309
      %v1311 = vshrl.u32 %v1126, 16
      %v1313 = vrot.slane %v1311, 4
      %v1314 = vor.u32 %v1313, %v1309
      %v1315 = vrot.slane %v1314, 4
      %v1317 = vshll.u32 %v1189, 16
      %v1319 = vrot.slane %v1317, 5
      %v1320 = vsel %vm256, %v1315, %v1319
      %v1322 = vshrl.u32 %v1127, 16
      %v1324 = vrot.slane %v1322, 4
      %v1325 = vshll.u32 %v1127, 16
      %v1327 = vrot.slane %v1325, 5
      %v1328 = vor.u32 %v1324, %v1327
      %v1329 = vrot.slane %v1328, 4
      %v1331 = vshll.u32 %v1128, 16
      %v1333 = vrot.slane %v1331, 5
      %v1334 = vsel %vm256, %v1329, %v1333
      %v1335 = vshrl.u32 %v1128, 16
      %v1337 = vrot.slane %v1335, 4
      %v1338 = vor.u32 %v1337, %v1333
      %v1339 = vrot.slane %v1338, 4
      %v1341 = vshll.u32 %v1190, 16
      %v1343 = vrot.slane %v1341, 5
      %v1344 = vsel %vm256, %v1339, %v1343
      %v1346 = vshrl.u32 %v1129, 16
      %v1348 = vrot.slane %v1346, 4
      %v1349 = vshll.u32 %v1129, 16
      %v1351 = vrot.slane %v1349, 5
      %v1352 = vor.u32 %v1348, %v1351
      %v1353 = vrot.slane %v1352, 4
      %v1355 = vshll.u32 %v1130, 16
      %v1357 = vrot.slane %v1355, 5
      %v1358 = vsel %vm256, %v1353, %v1357
      %v1359 = vshrl.u32 %v1130, 16
      %v1361 = vrot.slane %v1359, 4
      %v1362 = vor.u32 %v1361, %v1357
      %v1363 = vrot.slane %v1362, 4
      %v1365 = vshll.u32 %v1191, 16
      %v1367 = vrot.slane %v1365, 5
      %v1368 = vsel %vm256, %v1363, %v1367
      %v1370 = vshrl.u32 %v1131, 16
      %v1372 = vrot.slane %v1370, 4
      %v1373 = vshll.u32 %v1131, 16
      %v1375 = vrot.slane %v1373, 5
      %v1376 = vor.u32 %v1372, %v1375
      %v1377 = vrot.slane %v1376, 4
      %v1379 = vshll.u32 %v1132, 16
      %v1381 = vrot.slane %v1379, 5
      %v1382 = vsel %vm256, %v1377, %v1381
      %v1383 = vshrl.u32 %v1132, 16
      %v1385 = vrot.slane %v1383, 4
      %v1386 = vor.u32 %v1385, %v1381
      %v1387 = vrot.slane %v1386, 4
      %v1389 = vshll.u32 %v1192, 16
      %v1391 = vrot.slane %v1389, 5
      %v1392 = vsel %vm256, %v1387, %v1391
      %v1394 = vshrl.u32 %v1133, 16
      %v1396 = vrot.slane %v1394, 4
      %v1397 = vshll.u32 %v1133, 16
      %v1399 = vrot.slane %v1397, 5
      %v1400 = vor.u32 %v1396, %v1399
      %v1401 = vrot.slane %v1400, 4
      %v1403 = vshll.u32 %v1134, 16
      %v1405 = vrot.slane %v1403, 5
      %v1406 = vsel %vm256, %v1401, %v1405
      %v1407 = vshrl.u32 %v1134, 16
      %v1409 = vrot.slane %v1407, 4
      %v1410 = vor.u32 %v1409, %v1405
      %v1411 = vrot.slane %v1410, 4
      %v1413 = vshll.u32 %v1193, 16
      %v1415 = vrot.slane %v1413, 5
      %v1416 = vsel %vm256, %v1411, %v1415
      %v1418 = vshrl.u32 %v1135, 16
      %v1420 = vrot.slane %v1418, 4
      %v1421 = vshll.u32 %v1135, 16
      %v1423 = vrot.slane %v1421, 5
      %v1424 = vor.u32 %v1420, %v1423
      %v1425 = vrot.slane %v1424, 4
      %v1427 = vshll.u32 %v1136, 16
      %v1429 = vrot.slane %v1427, 5
      %v1430 = vsel %vm256, %v1425, %v1429
      %v1431 = vshrl.u32 %v1136, 16
      %v1433 = vrot.slane %v1431, 4
      %v1434 = vor.u32 %v1433, %v1429
      %v1435 = vrot.slane %v1434, 4
      %v1437 = vshll.u32 %v1194, 16
      %v1439 = vrot.slane %v1437, 5
      %v1440 = vsel %vm256, %v1435, %v1439
      %v1442 = vshrl.u32 %v1137, 16
      %v1444 = vrot.slane %v1442, 4
      %v1445 = vshll.u32 %v1137, 16
      %v1447 = vrot.slane %v1445, 5
      %v1448 = vor.u32 %v1444, %v1447
      %v1449 = vrot.slane %v1448, 4
      %v1451 = vshll.u32 %v1138, 16
      %v1453 = vrot.slane %v1451, 5
      %v1454 = vsel %vm256, %v1449, %v1453
      %v1455 = vshrl.u32 %v1138, 16
      %v1457 = vrot.slane %v1455, 4
      %v1458 = vor.u32 %v1457, %v1453
      %v1459 = vrot.slane %v1458, 4
      %v1461 = vshll.u32 %v1195, 16
      %v1463 = vrot.slane %v1461, 5
      %v1464 = vsel %vm256, %v1459, %v1463
      %v1466 = vshrl.u32 %v1139, 16
      %v1468 = vrot.slane %v1466, 4
      %v1469 = vshll.u32 %v1139, 16
      %v1471 = vrot.slane %v1469, 5
      %v1472 = vor.u32 %v1468, %v1471
      %v1473 = vrot.slane %v1472, 4
      %v1475 = vshll.u32 %v1140, 16
      %v1477 = vrot.slane %v1475, 5
      %v1478 = vsel %vm256, %v1473, %v1477
      %v1479 = vshrl.u32 %v1140, 16
      %v1481 = vrot.slane %v1479, 4
      %v1482 = vor.u32 %v1481, %v1477
      %v1483 = vrot.slane %v1482, 4
      %v1485 = vshll.u32 %v1196, 16
      %v1487 = vrot.slane %v1485, 5
      %v1488 = vsel %vm256, %v1483, %v1487
      %v1490 = vshrl.u32 %v1141, 16
      %v1492 = vrot.slane %v1490, 4
      %v1493 = vshll.u32 %v1141, 16
      %v1495 = vrot.slane %v1493, 5
      %v1496 = vor.u32 %v1492, %v1495
      %v1497 = vrot.slane %v1496, 4
      %v1499 = vshll.u32 %v1142, 16
      %v1501 = vrot.slane %v1499, 5
      %v1502 = vsel %vm256, %v1497, %v1501
      %v1503 = vshrl.u32 %v1142, 16
      %v1505 = vrot.slane %v1503, 4
      %v1506 = vor.u32 %v1505, %v1501
      %v1507 = vrot.slane %v1506, 4
      %v1509 = vshll.u32 %v1197, 16
      %v1511 = vrot.slane %v1509, 5
      %v1512 = vsel %vm256, %v1507, %v1511
      %v1514 = vshrl.u32 %v1143, 16
      %v1516 = vrot.slane %v1514, 4
      %v1517 = vshll.u32 %v1143, 16
      %v1519 = vrot.slane %v1517, 5
      %v1520 = vor.u32 %v1516, %v1519
      %v1521 = vrot.slane %v1520, 4
      %v1523 = vshll.u32 %v1144, 16
      %v1525 = vrot.slane %v1523, 5
      %v1526 = vsel %vm256, %v1521, %v1525
      %v1527 = vshrl.u32 %v1144, 16
      %v1529 = vrot.slane %v1527, 4
      %v1530 = vor.u32 %v1529, %v1525
      %v1531 = vrot.slane %v1530, 4
      %v1533 = vshll.u32 %v1198, 16
      %v1535 = vrot.slane %v1533, 5
      %v1536 = vsel %vm256, %v1531, %v1535
      %v1538 = vshrl.u32 %v1145, 16
      %v1540 = vrot.slane %v1538, 4
      %v1541 = vshll.u32 %v1145, 16
      %v1543 = vrot.slane %v1541, 5
      %v1544 = vor.u32 %v1540, %v1543
      %v1545 = vrot.slane %v1544, 4
      %v1547 = vshll.u32 %v1146, 16
      %v1549 = vrot.slane %v1547, 5
      %v1550 = vsel %vm256, %v1545, %v1549
      %v1551 = vshrl.u32 %v1146, 16
      %v1553 = vrot.slane %v1551, 4
      %v1554 = vor.u32 %v1553, %v1549
      %v1555 = vrot.slane %v1554, 4
      %v1557 = vshll.u32 %v1199, 16
      %v1559 = vrot.slane %v1557, 5
      %v1560 = vsel %vm256, %v1555, %v1559
      %v1562 = vshrl.u32 %v1147, 16
      %v1564 = vrot.slane %v1562, 4
      %v1565 = vshll.u32 %v1147, 16
      %v1567 = vrot.slane %v1565, 5
      %v1568 = vor.u32 %v1564, %v1567
      %v1569 = vrot.slane %v1568, 4
      %v1571 = vshll.u32 %v1148, 16
      %v1573 = vrot.slane %v1571, 5
      %v1574 = vsel %vm256, %v1569, %v1573
      %v1575 = vshrl.u32 %v1148, 16
      %v1577 = vrot.slane %v1575, 4
      %v1578 = vor.u32 %v1577, %v1573
      %v1579 = vrot.slane %v1578, 4
      %v1581 = vshll.u32 %v1200, 16
      %v1583 = vrot.slane %v1581, 5
      %v1584 = vsel %vm256, %v1579, %v1583
      %v1617 = vunpack.c.l.b16 %v170
      %v1618 = vunpack.c.l.b16 %v171
      %v1619 = vunpack.c.l.b16 %v172
      %v1620 = vunpack.c.l.b16 %v173
      %v1621 = vunpack.c.l.b16 %v174
      %v1622 = vunpack.c.l.b16 %v175
      %v1623 = vunpack.c.l.b16 %v176
      %v1624 = vunpack.c.l.b16 %v177
      %v1625 = vunpack.c.l.b16 %v178
      %v1626 = vunpack.c.l.b16 %v179
      %v1627 = vunpack.c.l.b16 %v180
      %v1628 = vunpack.c.l.b16 %v181
      %v1629 = vunpack.c.l.b16 %v182
      %v1630 = vunpack.c.l.b16 %v183
      %v1631 = vunpack.c.l.b16 %v184
      %v1632 = vunpack.c.l.b16 %v185
      %v1633 = vunpack.c.l.b16 %v186
      %v1634 = vunpack.c.l.b16 %v187
      %v1635 = vunpack.c.l.b16 %v188
      %v1636 = vunpack.c.l.b16 %v189
      %v1637 = vunpack.c.l.b16 %v190
      %v1638 = vunpack.c.l.b16 %v191
      %v1639 = vunpack.c.l.b16 %v192
      %v1640 = vunpack.c.l.b16 %v193
      %v1641 = vunpack.c.l.b16 %v194
      %v1642 = vunpack.c.l.b16 %v195
      %v1643 = vunpack.c.l.b16 %v196
      %v1644 = vunpack.c.l.b16 %v197
      %v1645 = vunpack.c.l.b16 %v198
      %v1646 = vunpack.c.l.b16 %v199
      %v1647 = vunpack.c.l.b16 %v200
      %v1648 = vunpack.c.l.b16 %v201
      %v1649 = vpack.c.b16 %v1618, %v1617
      %v1650 = vpack.c.b16 %v1620, %v1619
      %v1651 = vpack.c.b16 %v1622, %v1621
      %v1652 = vpack.c.b16 %v1624, %v1623
      %v1653 = vpack.c.b16 %v1626, %v1625
      %v1654 = vpack.c.b16 %v1628, %v1627
      %v1655 = vpack.c.b16 %v1630, %v1629
      %v1656 = vpack.c.b16 %v1632, %v1631
      %v1657 = vpack.c.b16 %v1634, %v1633
      %v1658 = vpack.c.b16 %v1636, %v1635
      %v1659 = vpack.c.b16 %v1638, %v1637
      %v1660 = vpack.c.b16 %v1640, %v1639
      %v1661 = vpack.c.b16 %v1642, %v1641
      %v1662 = vpack.c.b16 %v1644, %v1643
      %v1663 = vpack.c.b16 %v1646, %v1645
      %v1664 = vpack.c.b16 %v1648, %v1647
      %v1697 = vunpack.c.l.b16 %v206
      %v1698 = vunpack.c.l.b16 %v207
      %v1699 = vunpack.c.l.b16 %v208
      %v1700 = vunpack.c.l.b16 %v209
      %v1701 = vunpack.c.l.b16 %v210
      %v1702 = vunpack.c.l.b16 %v211
      %v1703 = vunpack.c.l.b16 %v212
      %v1704 = vunpack.c.l.b16 %v213
      %v1705 = vunpack.c.l.b16 %v214
      %v1706 = vunpack.c.l.b16 %v215
      %v1707 = vunpack.c.l.b16 %v216
      %v1708 = vunpack.c.l.b16 %v217
      %v1709 = vunpack.c.l.b16 %v218
      %v1710 = vunpack.c.l.b16 %v219
      %v1711 = vunpack.c.l.b16 %v220
      %v1712 = vunpack.c.l.b16 %v221
      %v1713 = vunpack.c.l.b16 %v222
      %v1714 = vunpack.c.l.b16 %v223
      %v1715 = vunpack.c.l.b16 %v224
      %v1716 = vunpack.c.l.b16 %v225
      %v1717 = vunpack.c.l.b16 %v226
      %v1718 = vunpack.c.l.b16 %v227
      %v1719 = vunpack.c.l.b16 %v228
      %v1720 = vunpack.c.l.b16 %v229
      %v1721 = vunpack.c.l.b16 %v230
      %v1722 = vunpack.c.l.b16 %v231
      %v1723 = vunpack.c.l.b16 %v232
      %v1724 = vunpack.c.l.b16 %v233
      %v1725 = vunpack.c.l.b16 %v234
      %v1726 = vunpack.c.l.b16 %v235
      %v1727 = vunpack.c.l.b16 %v236
      %v1728 = vunpack.c.l.b16 %v237
      %v1729 = vpack.c.b16 %v1698, %v1697
      %v1730 = vpack.c.b16 %v1700, %v1699
      %v1731 = vpack.c.b16 %v1702, %v1701
      %v1732 = vpack.c.b16 %v1704, %v1703
      %v1733 = vpack.c.b16 %v1706, %v1705
      %v1734 = vpack.c.b16 %v1708, %v1707
      %v1735 = vpack.c.b16 %v1710, %v1709
      %v1736 = vpack.c.b16 %v1712, %v1711
      %v1737 = vpack.c.b16 %v1714, %v1713
      %v1738 = vpack.c.b16 %v1716, %v1715
      %v1739 = vpack.c.b16 %v1718, %v1717
      %v1740 = vpack.c.b16 %v1720, %v1719
      %v1741 = vpack.c.b16 %v1722, %v1721
      %v1742 = vpack.c.b16 %v1724, %v1723
      %v1743 = vpack.c.b16 %v1726, %v1725
      %v1744 = vpack.c.b16 %v1728, %v1727
      %1745 = vrot.lane.b32.xlu0 %v1729, 2
      %v1746 = vpop.permute.xlu0 %1745
      %1747 = vrot.lane.b32.xlu0 %v1730, 2
      %v1748 = vpop.permute.xlu0 %1747
      %1749 = vrot.lane.b32.xlu0 %v1731, 2
      %v1750 = vpop.permute.xlu0 %1749
      %1751 = vrot.lane.b32.xlu0 %v1732, 2
      %v1752 = vpop.permute.xlu0 %1751
      %1753 = vrot.lane.b32.xlu0 %v1733, 2
      %v1754 = vpop.permute.xlu0 %1753
      %1755 = vrot.lane.b32.xlu0 %v1734, 2
      %v1756 = vpop.permute.xlu0 %1755
      %1757 = vrot.lane.b32.xlu0 %v1735, 2
      %v1758 = vpop.permute.xlu0 %1757
      %1759 = vrot.lane.b32.xlu0 %v1736, 2
      %v1760 = vpop.permute.xlu0 %1759
      %1761 = vrot.lane.b32.xlu0 %v1737, 2
      %v1762 = vpop.permute.xlu0 %1761
      %1763 = vrot.lane.b32.xlu0 %v1738, 2
      %v1764 = vpop.permute.xlu0 %1763
      %1765 = vrot.lane.b32.xlu0 %v1739, 2
      %v1766 = vpop.permute.xlu0 %1765
      %1767 = vrot.lane.b32.xlu0 %v1740, 2
      %v1768 = vpop.permute.xlu0 %1767
      %1769 = vrot.lane.b32.xlu0 %v1741, 2
      %v1770 = vpop.permute.xlu0 %1769
      %1771 = vrot.lane.b32.xlu0 %v1742, 2
      %v1772 = vpop.permute.xlu0 %1771
      %1773 = vrot.lane.b32.xlu0 %v1743, 2
      %v1774 = vpop.permute.xlu0 %1773
      %1775 = vrot.lane.b32.xlu0 %v1744, 2
      %v1776 = vpop.permute.xlu0 %1775
      %v1777 = vunpack.c.l.b16 %v270
      %v1778 = vunpack.c.l.b16 %v280
      %v1779 = vunpack.c.l.b16 %v294
      %v1780 = vunpack.c.l.b16 %v304
      %v1781 = vunpack.c.l.b16 %v318
      %v1782 = vunpack.c.l.b16 %v328
      %v1783 = vunpack.c.l.b16 %v342
      %v1784 = vunpack.c.l.b16 %v352
      %v1785 = vunpack.c.l.b16 %v366
      %v1786 = vunpack.c.l.b16 %v376
      %v1787 = vunpack.c.l.b16 %v390
      %v1788 = vunpack.c.l.b16 %v400
      %v1789 = vunpack.c.l.b16 %v414
      %v1790 = vunpack.c.l.b16 %v424
      %v1791 = vunpack.c.l.b16 %v438
      %v1792 = vunpack.c.l.b16 %v448
      %v1793 = vunpack.c.l.b16 %v462
      %v1794 = vunpack.c.l.b16 %v472
      %v1795 = vunpack.c.l.b16 %v486
      %v1796 = vunpack.c.l.b16 %v496
      %v1797 = vunpack.c.l.b16 %v510
      %v1798 = vunpack.c.l.b16 %v520
      %v1799 = vunpack.c.l.b16 %v534
      %v1800 = vunpack.c.l.b16 %v544
      %v1801 = vunpack.c.l.b16 %v558
      %v1802 = vunpack.c.l.b16 %v568
      %v1803 = vunpack.c.l.b16 %v582
      %v1804 = vunpack.c.l.b16 %v592
      %v1805 = vunpack.c.l.b16 %v606
      %v1806 = vunpack.c.l.b16 %v616
      %v1807 = vunpack.c.l.b16 %v630
      %v1808 = vunpack.c.l.b16 %v640
      %v1809 = vpack.c.b16 %v1778, %v1777
      %v1810 = vpack.c.b16 %v1780, %v1779
      %v1811 = vpack.c.b16 %v1782, %v1781
      %v1812 = vpack.c.b16 %v1784, %v1783
      %v1813 = vpack.c.b16 %v1786, %v1785
      %v1814 = vpack.c.b16 %v1788, %v1787
      %v1815 = vpack.c.b16 %v1790, %v1789
      %v1816 = vpack.c.b16 %v1792, %v1791
      %v1817 = vpack.c.b16 %v1794, %v1793
      %v1818 = vpack.c.b16 %v1796, %v1795
      %v1819 = vpack.c.b16 %v1798, %v1797
      %v1820 = vpack.c.b16 %v1800, %v1799
      %v1821 = vpack.c.b16 %v1802, %v1801
      %v1822 = vpack.c.b16 %v1804, %v1803
      %v1823 = vpack.c.b16 %v1806, %v1805
      %v1824 = vpack.c.b16 %v1808, %v1807
      %1825 = vrot.lane.b32.xlu0 %v1809, 4
      %v1826 = vpop.permute.xlu0 %1825
      %1827 = vrot.lane.b32.xlu0 %v1810, 4
      %v1828 = vpop.permute.xlu0 %1827
      %1829 = vrot.lane.b32.xlu0 %v1811, 4
      %v1830 = vpop.permute.xlu0 %1829
      %1831 = vrot.lane.b32.xlu0 %v1812, 4
      %v1832 = vpop.permute.xlu0 %1831
      %1833 = vrot.lane.b32.xlu0 %v1813, 4
      %v1834 = vpop.permute.xlu0 %1833
      %1835 = vrot.lane.b32.xlu0 %v1814, 4
      %v1836 = vpop.permute.xlu0 %1835
      %1837 = vrot.lane.b32.xlu0 %v1815, 4
      %v1838 = vpop.permute.xlu0 %1837
      %1839 = vrot.lane.b32.xlu0 %v1816, 4
      %v1840 = vpop.permute.xlu0 %1839
      %1841 = vrot.lane.b32.xlu0 %v1817, 4
      %v1842 = vpop.permute.xlu0 %1841
      %1843 = vrot.lane.b32.xlu0 %v1818, 4
      %v1844 = vpop.permute.xlu0 %1843
      %1845 = vrot.lane.b32.xlu0 %v1819, 4
      %v1846 = vpop.permute.xlu0 %1845
      %1847 = vrot.lane.b32.xlu0 %v1820, 4
      %v1848 = vpop.permute.xlu0 %1847
      %1849 = vrot.lane.b32.xlu0 %v1821, 4
      %v1850 = vpop.permute.xlu0 %1849
      %1851 = vrot.lane.b32.xlu0 %v1822, 4
      %v1852 = vpop.permute.xlu0 %1851
      %1853 = vrot.lane.b32.xlu0 %v1823, 4
      %v1854 = vpop.permute.xlu0 %1853
      %1855 = vrot.lane.b32.xlu0 %v1824, 4
      %v1856 = vpop.permute.xlu0 %1855
      %v1889 = vunpack.c.l.b16 %v645
      %v1890 = vunpack.c.l.b16 %v646
      %v1891 = vunpack.c.l.b16 %v647
      %v1892 = vunpack.c.l.b16 %v648
      %v1893 = vunpack.c.l.b16 %v649
      %v1894 = vunpack.c.l.b16 %v650
      %v1895 = vunpack.c.l.b16 %v651
      %v1896 = vunpack.c.l.b16 %v652
      %v1897 = vunpack.c.l.b16 %v653
      %v1898 = vunpack.c.l.b16 %v654
      %v1899 = vunpack.c.l.b16 %v655
      %v1900 = vunpack.c.l.b16 %v656
      %v1901 = vunpack.c.l.b16 %v657
      %v1902 = vunpack.c.l.b16 %v658
      %v1903 = vunpack.c.l.b16 %v659
      %v1904 = vunpack.c.l.b16 %v660
      %v1905 = vunpack.c.l.b16 %v661
      %v1906 = vunpack.c.l.b16 %v662
      %v1907 = vunpack.c.l.b16 %v663
      %v1908 = vunpack.c.l.b16 %v664
      %v1909 = vunpack.c.l.b16 %v665
      %v1910 = vunpack.c.l.b16 %v666
      %v1911 = vunpack.c.l.b16 %v667
      %v1912 = vunpack.c.l.b16 %v668
      %v1913 = vunpack.c.l.b16 %v669
      %v1914 = vunpack.c.l.b16 %v670
      %v1915 = vunpack.c.l.b16 %v671
      %v1916 = vunpack.c.l.b16 %v672
      %v1917 = vunpack.c.l.b16 %v673
      %v1918 = vunpack.c.l.b16 %v674
      %v1919 = vunpack.c.l.b16 %v675
      %v1920 = vunpack.c.l.b16 %v676
      %v1921 = vpack.c.b16 %v1890, %v1889
      %v1922 = vpack.c.b16 %v1892, %v1891
      %v1923 = vpack.c.b16 %v1894, %v1893
      %v1924 = vpack.c.b16 %v1896, %v1895
      %v1925 = vpack.c.b16 %v1898, %v1897
      %v1926 = vpack.c.b16 %v1900, %v1899
      %v1927 = vpack.c.b16 %v1902, %v1901
      %v1928 = vpack.c.b16 %v1904, %v1903
      %v1929 = vpack.c.b16 %v1906, %v1905
      %v1930 = vpack.c.b16 %v1908, %v1907
      %v1931 = vpack.c.b16 %v1910, %v1909
      %v1932 = vpack.c.b16 %v1912, %v1911
      %v1933 = vpack.c.b16 %v1914, %v1913
      %v1934 = vpack.c.b16 %v1916, %v1915
      %v1935 = vpack.c.b16 %v1918, %v1917
      %v1936 = vpack.c.b16 %v1920, %v1919
      %1937 = vrot.lane.b32.xlu0 %v1921, 6
      %v1938 = vpop.permute.xlu0 %1937
      %1939 = vrot.lane.b32.xlu0 %v1922, 6
      %v1940 = vpop.permute.xlu0 %1939
      %1941 = vrot.lane.b32.xlu0 %v1923, 6
      %v1942 = vpop.permute.xlu0 %1941
      %1943 = vrot.lane.b32.xlu0 %v1924, 6
      %v1944 = vpop.permute.xlu0 %1943
      %1945 = vrot.lane.b32.xlu0 %v1925, 6
      %v1946 = vpop.permute.xlu0 %1945
      %1947 = vrot.lane.b32.xlu0 %v1926, 6
      %v1948 = vpop.permute.xlu0 %1947
      %1949 = vrot.lane.b32.xlu0 %v1927, 6
      %v1950 = vpop.permute.xlu0 %1949
      %1951 = vrot.lane.b32.xlu0 %v1928, 6
      %v1952 = vpop.permute.xlu0 %1951
      %1953 = vrot.lane.b32.xlu0 %v1929, 6
      %v1954 = vpop.permute.xlu0 %1953
      %1955 = vrot.lane.b32.xlu0 %v1930, 6
      %v1956 = vpop.permute.xlu0 %1955
      %1957 = vrot.lane.b32.xlu0 %v1931, 6
      %v1958 = vpop.permute.xlu0 %1957
      %1959 = vrot.lane.b32.xlu0 %v1932, 6
      %v1960 = vpop.permute.xlu0 %1959
      %1961 = vrot.lane.b32.xlu0 %v1933, 6
      %v1962 = vpop.permute.xlu0 %1961
      %1963 = vrot.lane.b32.xlu0 %v1934, 6
      %v1964 = vpop.permute.xlu0 %1963
      %1965 = vrot.lane.b32.xlu0 %v1935, 6
      %v1966 = vpop.permute.xlu0 %1965
      %1967 = vrot.lane.b32.xlu0 %v1936, 6
      %v1968 = vpop.permute.xlu0 %1967
      %v2001 = vunpack.c.l.b16 %v681
      %v2002 = vunpack.c.l.b16 %v682
      %v2003 = vunpack.c.l.b16 %v683
      %v2004 = vunpack.c.l.b16 %v684
      %v2005 = vunpack.c.l.b16 %v685
      %v2006 = vunpack.c.l.b16 %v686
      %v2007 = vunpack.c.l.b16 %v687
      %v2008 = vunpack.c.l.b16 %v688
      %v2009 = vunpack.c.l.b16 %v689
      %v2010 = vunpack.c.l.b16 %v690
      %v2011 = vunpack.c.l.b16 %v691
      %v2012 = vunpack.c.l.b16 %v692
      %v2013 = vunpack.c.l.b16 %v693
      %v2014 = vunpack.c.l.b16 %v694
      %v2015 = vunpack.c.l.b16 %v695
      %v2016 = vunpack.c.l.b16 %v696
      %v2017 = vunpack.c.l.b16 %v697
      %v2018 = vunpack.c.l.b16 %v698
      %v2019 = vunpack.c.l.b16 %v699
      %v2020 = vunpack.c.l.b16 %v700
      %v2021 = vunpack.c.l.b16 %v701
      %v2022 = vunpack.c.l.b16 %v702
      %v2023 = vunpack.c.l.b16 %v703
      %v2024 = vunpack.c.l.b16 %v704
      %v2025 = vunpack.c.l.b16 %v705
      %v2026 = vunpack.c.l.b16 %v706
      %v2027 = vunpack.c.l.b16 %v707
      %v2028 = vunpack.c.l.b16 %v708
      %v2029 = vunpack.c.l.b16 %v709
      %v2030 = vunpack.c.l.b16 %v710
      %v2031 = vunpack.c.l.b16 %v711
      %v2032 = vunpack.c.l.b16 %v712
      %v2033 = vpack.c.b16 %v2002, %v2001
      %v2034 = vpack.c.b16 %v2004, %v2003
      %v2035 = vpack.c.b16 %v2006, %v2005
      %v2036 = vpack.c.b16 %v2008, %v2007
      %v2037 = vpack.c.b16 %v2010, %v2009
      %v2038 = vpack.c.b16 %v2012, %v2011
      %v2039 = vpack.c.b16 %v2014, %v2013
      %v2040 = vpack.c.b16 %v2016, %v2015
      %v2041 = vpack.c.b16 %v2018, %v2017
      %v2042 = vpack.c.b16 %v2020, %v2019
      %v2043 = vpack.c.b16 %v2022, %v2021
      %v2044 = vpack.c.b16 %v2024, %v2023
      %v2045 = vpack.c.b16 %v2026, %v2025
      %v2046 = vpack.c.b16 %v2028, %v2027
      %v2047 = vpack.c.b16 %v2030, %v2029
      %v2048 = vpack.c.b16 %v2032, %v2031
      %2049 = vrot.lane.b32.xlu0 %v2033, 8
      %v2050 = vpop.permute.xlu0 %2049
      %2051 = vrot.lane.b32.xlu0 %v2034, 8
      %v2052 = vpop.permute.xlu0 %2051
      %2053 = vrot.lane.b32.xlu0 %v2035, 8
      %v2054 = vpop.permute.xlu0 %2053
      %2055 = vrot.lane.b32.xlu0 %v2036, 8
      %v2056 = vpop.permute.xlu0 %2055
      %2057 = vrot.lane.b32.xlu0 %v2037, 8
      %v2058 = vpop.permute.xlu0 %2057
      %2059 = vrot.lane.b32.xlu0 %v2038, 8
      %v2060 = vpop.permute.xlu0 %2059
      %2061 = vrot.lane.b32.xlu0 %v2039, 8
      %v2062 = vpop.permute.xlu0 %2061
      %2063 = vrot.lane.b32.xlu0 %v2040, 8
      %v2064 = vpop.permute.xlu0 %2063
      %2065 = vrot.lane.b32.xlu0 %v2041, 8
      %v2066 = vpop.permute.xlu0 %2065
      %2067 = vrot.lane.b32.xlu0 %v2042, 8
      %v2068 = vpop.permute.xlu0 %2067
      %2069 = vrot.lane.b32.xlu0 %v2043, 8
      %v2070 = vpop.permute.xlu0 %2069
      %2071 = vrot.lane.b32.xlu0 %v2044, 8
      %v2072 = vpop.permute.xlu0 %2071
      %2073 = vrot.lane.b32.xlu0 %v2045, 8
      %v2074 = vpop.permute.xlu0 %2073
      %2075 = vrot.lane.b32.xlu0 %v2046, 8
      %v2076 = vpop.permute.xlu0 %2075
      %2077 = vrot.lane.b32.xlu0 %v2047, 8
      %v2078 = vpop.permute.xlu0 %2077
      %2079 = vrot.lane.b32.xlu0 %v2048, 8
      %v2080 = vpop.permute.xlu0 %2079
      %v2081 = vunpack.c.l.b16 %v742
      %v2082 = vunpack.c.l.b16 %v752
      %v2083 = vunpack.c.l.b16 %v766
      %v2084 = vunpack.c.l.b16 %v776
      %v2085 = vunpack.c.l.b16 %v790
      %v2086 = vunpack.c.l.b16 %v800
      %v2087 = vunpack.c.l.b16 %v814
      %v2088 = vunpack.c.l.b16 %v824
      %v2089 = vunpack.c.l.b16 %v838
      %v2090 = vunpack.c.l.b16 %v848
      %v2091 = vunpack.c.l.b16 %v862
      %v2092 = vunpack.c.l.b16 %v872
      %v2093 = vunpack.c.l.b16 %v886
      %v2094 = vunpack.c.l.b16 %v896
      %v2095 = vunpack.c.l.b16 %v910
      %v2096 = vunpack.c.l.b16 %v920
      %v2097 = vunpack.c.l.b16 %v934
      %v2098 = vunpack.c.l.b16 %v944
      %v2099 = vunpack.c.l.b16 %v958
      %v2100 = vunpack.c.l.b16 %v968
      %v2101 = vunpack.c.l.b16 %v982
      %v2102 = vunpack.c.l.b16 %v992
      %v2103 = vunpack.c.l.b16 %v1006
      %v2104 = vunpack.c.l.b16 %v1016
      %v2105 = vunpack.c.l.b16 %v1030
      %v2106 = vunpack.c.l.b16 %v1040
      %v2107 = vunpack.c.l.b16 %v1054
      %v2108 = vunpack.c.l.b16 %v1064
      %v2109 = vunpack.c.l.b16 %v1078
      %v2110 = vunpack.c.l.b16 %v1088
      %v2111 = vunpack.c.l.b16 %v1102
      %v2112 = vunpack.c.l.b16 %v1112
      %v2113 = vpack.c.b16 %v2082, %v2081
      %v2114 = vpack.c.b16 %v2084, %v2083
      %v2115 = vpack.c.b16 %v2086, %v2085
      %v2116 = vpack.c.b16 %v2088, %v2087
      %v2117 = vpack.c.b16 %v2090, %v2089
      %v2118 = vpack.c.b16 %v2092, %v2091
      %v2119 = vpack.c.b16 %v2094, %v2093
      %v2120 = vpack.c.b16 %v2096, %v2095
      %v2121 = vpack.c.b16 %v2098, %v2097
      %v2122 = vpack.c.b16 %v2100, %v2099
      %v2123 = vpack.c.b16 %v2102, %v2101
      %v2124 = vpack.c.b16 %v2104, %v2103
      %v2125 = vpack.c.b16 %v2106, %v2105
      %v2126 = vpack.c.b16 %v2108, %v2107
      %v2127 = vpack.c.b16 %v2110, %v2109
      %v2128 = vpack.c.b16 %v2112, %v2111
      %2129 = vrot.lane.b32.xlu0 %v2113, 10
      %v2130 = vpop.permute.xlu0 %2129
      %2131 = vrot.lane.b32.xlu0 %v2114, 10
      %v2132 = vpop.permute.xlu0 %2131
      %2133 = vrot.lane.b32.xlu0 %v2115, 10
      %v2134 = vpop.permute.xlu0 %2133
      %2135 = vrot.lane.b32.xlu0 %v2116, 10
      %v2136 = vpop.permute.xlu0 %2135
      %2137 = vrot.lane.b32.xlu0 %v2117, 10
      %v2138 = vpop.permute.xlu0 %2137
      %2139 = vrot.lane.b32.xlu0 %v2118, 10
      %v2140 = vpop.permute.xlu0 %2139
      %2141 = vrot.lane.b32.xlu0 %v2119, 10
      %v2142 = vpop.permute.xlu0 %2141
      %2143 = vrot.lane.b32.xlu0 %v2120, 10
      %v2144 = vpop.permute.xlu0 %2143
      %2145 = vrot.lane.b32.xlu0 %v2121, 10
      %v2146 = vpop.permute.xlu0 %2145
      %2147 = vrot.lane.b32.xlu0 %v2122, 10
      %v2148 = vpop.permute.xlu0 %2147
      %2149 = vrot.lane.b32.xlu0 %v2123, 10
      %v2150 = vpop.permute.xlu0 %2149
      %2151 = vrot.lane.b32.xlu0 %v2124, 10
      %v2152 = vpop.permute.xlu0 %2151
      %2153 = vrot.lane.b32.xlu0 %v2125, 10
      %v2154 = vpop.permute.xlu0 %2153
      %2155 = vrot.lane.b32.xlu0 %v2126, 10
      %v2156 = vpop.permute.xlu0 %2155
      %2157 = vrot.lane.b32.xlu0 %v2127, 10
      %v2158 = vpop.permute.xlu0 %2157
      %2159 = vrot.lane.b32.xlu0 %v2128, 10
      %v2160 = vpop.permute.xlu0 %2159
      %v2193 = vunpack.c.l.b16 %v1117
      %v2194 = vunpack.c.l.b16 %v1118
      %v2195 = vunpack.c.l.b16 %v1119
      %v2196 = vunpack.c.l.b16 %v1120
      %v2197 = vunpack.c.l.b16 %v1121
      %v2198 = vunpack.c.l.b16 %v1122
      %v2199 = vunpack.c.l.b16 %v1123
      %v2200 = vunpack.c.l.b16 %v1124
      %v2201 = vunpack.c.l.b16 %v1125
      %v2202 = vunpack.c.l.b16 %v1126
      %v2203 = vunpack.c.l.b16 %v1127
      %v2204 = vunpack.c.l.b16 %v1128
      %v2205 = vunpack.c.l.b16 %v1129
      %v2206 = vunpack.c.l.b16 %v1130
      %v2207 = vunpack.c.l.b16 %v1131
      %v2208 = vunpack.c.l.b16 %v1132
      %v2209 = vunpack.c.l.b16 %v1133
      %v2210 = vunpack.c.l.b16 %v1134
      %v2211 = vunpack.c.l.b16 %v1135
      %v2212 = vunpack.c.l.b16 %v1136
      %v2213 = vunpack.c.l.b16 %v1137
      %v2214 = vunpack.c.l.b16 %v1138
      %v2215 = vunpack.c.l.b16 %v1139
      %v2216 = vunpack.c.l.b16 %v1140
      %v2217 = vunpack.c.l.b16 %v1141
      %v2218 = vunpack.c.l.b16 %v1142
      %v2219 = vunpack.c.l.b16 %v1143
      %v2220 = vunpack.c.l.b16 %v1144
      %v2221 = vunpack.c.l.b16 %v1145
      %v2222 = vunpack.c.l.b16 %v1146
      %v2223 = vunpack.c.l.b16 %v1147
      %v2224 = vunpack.c.l.b16 %v1148
      %v2225 = vpack.c.b16 %v2194, %v2193
      %v2226 = vpack.c.b16 %v2196, %v2195
      %v2227 = vpack.c.b16 %v2198, %v2197
      %v2228 = vpack.c.b16 %v2200, %v2199
      %v2229 = vpack.c.b16 %v2202, %v2201
      %v2230 = vpack.c.b16 %v2204, %v2203
      %v2231 = vpack.c.b16 %v2206, %v2205
      %v2232 = vpack.c.b16 %v2208, %v2207
      %v2233 = vpack.c.b16 %v2210, %v2209
      %v2234 = vpack.c.b16 %v2212, %v2211
      %v2235 = vpack.c.b16 %v2214, %v2213
      %v2236 = vpack.c.b16 %v2216, %v2215
      %v2237 = vpack.c.b16 %v2218, %v2217
      %v2238 = vpack.c.b16 %v2220, %v2219
      %v2239 = vpack.c.b16 %v2222, %v2221
      %v2240 = vpack.c.b16 %v2224, %v2223
      %2241 = vrot.lane.b32.xlu0 %v2225, 12
      %v2242 = vpop.permute.xlu0 %2241
      %2243 = vrot.lane.b32.xlu0 %v2226, 12
      %v2244 = vpop.permute.xlu0 %2243
      %2245 = vrot.lane.b32.xlu0 %v2227, 12
      %v2246 = vpop.permute.xlu0 %2245
      %2247 = vrot.lane.b32.xlu0 %v2228, 12
      %v2248 = vpop.permute.xlu0 %2247
      %2249 = vrot.lane.b32.xlu0 %v2229, 12
      %v2250 = vpop.permute.xlu0 %2249
      %2251 = vrot.lane.b32.xlu0 %v2230, 12
      %v2252 = vpop.permute.xlu0 %2251
      %2253 = vrot.lane.b32.xlu0 %v2231, 12
      %v2254 = vpop.permute.xlu0 %2253
      %2255 = vrot.lane.b32.xlu0 %v2232, 12
      %v2256 = vpop.permute.xlu0 %2255
      %2257 = vrot.lane.b32.xlu0 %v2233, 12
      %v2258 = vpop.permute.xlu0 %2257
      %2259 = vrot.lane.b32.xlu0 %v2234, 12
      %v2260 = vpop.permute.xlu0 %2259
      %2261 = vrot.lane.b32.xlu0 %v2235, 12
      %v2262 = vpop.permute.xlu0 %2261
      %2263 = vrot.lane.b32.xlu0 %v2236, 12
      %v2264 = vpop.permute.xlu0 %2263
      %2265 = vrot.lane.b32.xlu0 %v2237, 12
      %v2266 = vpop.permute.xlu0 %2265
      %2267 = vrot.lane.b32.xlu0 %v2238, 12
      %v2268 = vpop.permute.xlu0 %2267
      %2269 = vrot.lane.b32.xlu0 %v2239, 12
      %v2270 = vpop.permute.xlu0 %2269
      %2271 = vrot.lane.b32.xlu0 %v2240, 12
      %v2272 = vpop.permute.xlu0 %2271
      %v2305 = vunpack.c.l.b16 %v1153
      %v2306 = vunpack.c.l.b16 %v1154
      %v2307 = vunpack.c.l.b16 %v1155
      %v2308 = vunpack.c.l.b16 %v1156
      %v2309 = vunpack.c.l.b16 %v1157
      %v2310 = vunpack.c.l.b16 %v1158
      %v2311 = vunpack.c.l.b16 %v1159
      %v2312 = vunpack.c.l.b16 %v1160
      %v2313 = vunpack.c.l.b16 %v1161
      %v2314 = vunpack.c.l.b16 %v1162
      %v2315 = vunpack.c.l.b16 %v1163
      %v2316 = vunpack.c.l.b16 %v1164
      %v2317 = vunpack.c.l.b16 %v1165
      %v2318 = vunpack.c.l.b16 %v1166
      %v2319 = vunpack.c.l.b16 %v1167
      %v2320 = vunpack.c.l.b16 %v1168
      %v2321 = vunpack.c.l.b16 %v1169
      %v2322 = vunpack.c.l.b16 %v1170
      %v2323 = vunpack.c.l.b16 %v1171
      %v2324 = vunpack.c.l.b16 %v1172
      %v2325 = vunpack.c.l.b16 %v1173
      %v2326 = vunpack.c.l.b16 %v1174
      %v2327 = vunpack.c.l.b16 %v1175
      %v2328 = vunpack.c.l.b16 %v1176
      %v2329 = vunpack.c.l.b16 %v1177
      %v2330 = vunpack.c.l.b16 %v1178
      %v2331 = vunpack.c.l.b16 %v1179
      %v2332 = vunpack.c.l.b16 %v1180
      %v2333 = vunpack.c.l.b16 %v1181
      %v2334 = vunpack.c.l.b16 %v1182
      %v2335 = vunpack.c.l.b16 %v1183
      %v2336 = vunpack.c.l.b16 %v1184
      %v2337 = vpack.c.b16 %v2306, %v2305
      %v2338 = vpack.c.b16 %v2308, %v2307
      %v2339 = vpack.c.b16 %v2310, %v2309
      %v2340 = vpack.c.b16 %v2312, %v2311
      %v2341 = vpack.c.b16 %v2314, %v2313
      %v2342 = vpack.c.b16 %v2316, %v2315
      %v2343 = vpack.c.b16 %v2318, %v2317
      %v2344 = vpack.c.b16 %v2320, %v2319
      %v2345 = vpack.c.b16 %v2322, %v2321
      %v2346 = vpack.c.b16 %v2324, %v2323
      %v2347 = vpack.c.b16 %v2326, %v2325
      %v2348 = vpack.c.b16 %v2328, %v2327
      %v2349 = vpack.c.b16 %v2330, %v2329
      %v2350 = vpack.c.b16 %v2332, %v2331
      %v2351 = vpack.c.b16 %v2334, %v2333
      %v2352 = vpack.c.b16 %v2336, %v2335
      %2353 = vrot.lane.b32.xlu0 %v2337, 14
      %v2354 = vpop.permute.xlu0 %2353
      %2355 = vrot.lane.b32.xlu0 %v2338, 14
      %v2356 = vpop.permute.xlu0 %2355
      %2357 = vrot.lane.b32.xlu0 %v2339, 14
      %v2358 = vpop.permute.xlu0 %2357
      %2359 = vrot.lane.b32.xlu0 %v2340, 14
      %v2360 = vpop.permute.xlu0 %2359
      %2361 = vrot.lane.b32.xlu0 %v2341, 14
      %v2362 = vpop.permute.xlu0 %2361
      %2363 = vrot.lane.b32.xlu0 %v2342, 14
      %v2364 = vpop.permute.xlu0 %2363
      %2365 = vrot.lane.b32.xlu0 %v2343, 14
      %v2366 = vpop.permute.xlu0 %2365
      %2367 = vrot.lane.b32.xlu0 %v2344, 14
      %v2368 = vpop.permute.xlu0 %2367
      %2369 = vrot.lane.b32.xlu0 %v2345, 14
      %v2370 = vpop.permute.xlu0 %2369
      %2371 = vrot.lane.b32.xlu0 %v2346, 14
      %v2372 = vpop.permute.xlu0 %2371
      %2373 = vrot.lane.b32.xlu0 %v2347, 14
      %v2374 = vpop.permute.xlu0 %2373
      %2375 = vrot.lane.b32.xlu0 %v2348, 14
      %v2376 = vpop.permute.xlu0 %2375
      %2377 = vrot.lane.b32.xlu0 %v2349, 14
      %v2378 = vpop.permute.xlu0 %2377
      %2379 = vrot.lane.b32.xlu0 %v2350, 14
      %v2380 = vpop.permute.xlu0 %2379
      %2381 = vrot.lane.b32.xlu0 %v2351, 14
      %v2382 = vpop.permute.xlu0 %2381
      %2383 = vrot.lane.b32.xlu0 %v2352, 14
      %v2384 = vpop.permute.xlu0 %2383
      %v2385 = vunpack.c.l.b16 %v1214
      %v2386 = vunpack.c.l.b16 %v1224
      %v2387 = vunpack.c.l.b16 %v1238
      %v2388 = vunpack.c.l.b16 %v1248
      %v2389 = vunpack.c.l.b16 %v1262
      %v2390 = vunpack.c.l.b16 %v1272
      %v2391 = vunpack.c.l.b16 %v1286
      %v2392 = vunpack.c.l.b16 %v1296
      %v2393 = vunpack.c.l.b16 %v1310
      %v2394 = vunpack.c.l.b16 %v1320
      %v2395 = vunpack.c.l.b16 %v1334
      %v2396 = vunpack.c.l.b16 %v1344
      %v2397 = vunpack.c.l.b16 %v1358
      %v2398 = vunpack.c.l.b16 %v1368
      %v2399 = vunpack.c.l.b16 %v1382
      %v2400 = vunpack.c.l.b16 %v1392
      %v2401 = vunpack.c.l.b16 %v1406
      %v2402 = vunpack.c.l.b16 %v1416
      %v2403 = vunpack.c.l.b16 %v1430
      %v2404 = vunpack.c.l.b16 %v1440
      %v2405 = vunpack.c.l.b16 %v1454
      %v2406 = vunpack.c.l.b16 %v1464
      %v2407 = vunpack.c.l.b16 %v1478
      %v2408 = vunpack.c.l.b16 %v1488
      %v2409 = vunpack.c.l.b16 %v1502
      %v2410 = vunpack.c.l.b16 %v1512
      %v2411 = vunpack.c.l.b16 %v1526
      %v2412 = vunpack.c.l.b16 %v1536
      %v2413 = vunpack.c.l.b16 %v1550
      %v2414 = vunpack.c.l.b16 %v1560
      %v2415 = vunpack.c.l.b16 %v1574
      %v2416 = vunpack.c.l.b16 %v1584
      %v2417 = vpack.c.b16 %v2386, %v2385
      %v2418 = vpack.c.b16 %v2388, %v2387
      %v2419 = vpack.c.b16 %v2390, %v2389
      %v2420 = vpack.c.b16 %v2392, %v2391
      %v2421 = vpack.c.b16 %v2394, %v2393
      %v2422 = vpack.c.b16 %v2396, %v2395
      %v2423 = vpack.c.b16 %v2398, %v2397
      %v2424 = vpack.c.b16 %v2400, %v2399
      %v2425 = vpack.c.b16 %v2402, %v2401
      %v2426 = vpack.c.b16 %v2404, %v2403
      %v2427 = vpack.c.b16 %v2406, %v2405
      %v2428 = vpack.c.b16 %v2408, %v2407
      %v2429 = vpack.c.b16 %v2410, %v2409
      %v2430 = vpack.c.b16 %v2412, %v2411
      %v2431 = vpack.c.b16 %v2414, %v2413
      %v2432 = vpack.c.b16 %v2416, %v2415
      %2433 = vrot.lane.b32.xlu0 %v2417, 16
      %v2434 = vpop.permute.xlu0 %2433
      %2435 = vrot.lane.b32.xlu0 %v2418, 16
      %v2436 = vpop.permute.xlu0 %2435
      %2437 = vrot.lane.b32.xlu0 %v2419, 16
      %v2438 = vpop.permute.xlu0 %2437
      %2439 = vrot.lane.b32.xlu0 %v2420, 16
      %v2440 = vpop.permute.xlu0 %2439
      %2441 = vrot.lane.b32.xlu0 %v2421, 16
      %v2442 = vpop.permute.xlu0 %2441
      %2443 = vrot.lane.b32.xlu0 %v2422, 16
      %v2444 = vpop.permute.xlu0 %2443
      %2445 = vrot.lane.b32.xlu0 %v2423, 16
      %v2446 = vpop.permute.xlu0 %2445
      %2447 = vrot.lane.b32.xlu0 %v2424, 16
      %v2448 = vpop.permute.xlu0 %2447
      %2449 = vrot.lane.b32.xlu0 %v2425, 16
      %v2450 = vpop.permute.xlu0 %2449
      %2451 = vrot.lane.b32.xlu0 %v2426, 16
      %v2452 = vpop.permute.xlu0 %2451
      %2453 = vrot.lane.b32.xlu0 %v2427, 16
      %v2454 = vpop.permute.xlu0 %2453
      %2455 = vrot.lane.b32.xlu0 %v2428, 16
      %v2456 = vpop.permute.xlu0 %2455
      %2457 = vrot.lane.b32.xlu0 %v2429, 16
      %v2458 = vpop.permute.xlu0 %2457
      %2459 = vrot.lane.b32.xlu0 %v2430, 16
      %v2460 = vpop.permute.xlu0 %2459
      %2461 = vrot.lane.b32.xlu0 %v2431, 16
      %v2462 = vpop.permute.xlu0 %2461
      %2463 = vrot.lane.b32.xlu0 %v2432, 16
      %v2464 = vpop.permute.xlu0 %2463
      %vm2465 = vcmask 15360
      %v2468 = vsel %vm2465, %v1649, %v1746
      %v2471 = vsel %vm2465, %v1650, %v1748
      %v2474 = vsel %vm2465, %v1651, %v1750
      %v2477 = vsel %vm2465, %v1652, %v1752
      %v2480 = vsel %vm2465, %v1653, %v1754
      %v2483 = vsel %vm2465, %v1654, %v1756
      %v2486 = vsel %vm2465, %v1655, %v1758
      %v2489 = vsel %vm2465, %v1656, %v1760
      %v2492 = vsel %vm2465, %v1657, %v1762
      %v2495 = vsel %vm2465, %v1658, %v1764
      %v2498 = vsel %vm2465, %v1659, %v1766
      %v2501 = vsel %vm2465, %v1660, %v1768
      %v2504 = vsel %vm2465, %v1661, %v1770
      %v2507 = vsel %vm2465, %v1662, %v1772
      %v2510 = vsel %vm2465, %v1663, %v1774
      %v2513 = vsel %vm2465, %v1664, %v1776
      %vm2514 = vcmask 31744
      %v2516 = vsel %vm2514, %v2468, %v1826
      %v2518 = vsel %vm2514, %v2471, %v1828
      %v2520 = vsel %vm2514, %v2474, %v1830
      %v2522 = vsel %vm2514, %v2477, %v1832
      %v2524 = vsel %vm2514, %v2480, %v1834
      %v2526 = vsel %vm2514, %v2483, %v1836
      %v2528 = vsel %vm2514, %v2486, %v1838
      %v2530 = vsel %vm2514, %v2489, %v1840
      %v2532 = vsel %vm2514, %v2492, %v1842
      %v2534 = vsel %vm2514, %v2495, %v1844
      %v2536 = vsel %vm2514, %v2498, %v1846
      %v2538 = vsel %vm2514, %v2501, %v1848
      %v2540 = vsel %vm2514, %v2504, %v1850
      %v2542 = vsel %vm2514, %v2507, %v1852
      %v2544 = vsel %vm2514, %v2510, %v1854
      %v2546 = vsel %vm2514, %v2513, %v1856
      %vm2547 = vcmask 48128
      %v2549 = vsel %vm2547, %v2516, %v1938
      %v2551 = vsel %vm2547, %v2518, %v1940
      %v2553 = vsel %vm2547, %v2520, %v1942
      %v2555 = vsel %vm2547, %v2522, %v1944
      %v2557 = vsel %vm2547, %v2524, %v1946
      %v2559 = vsel %vm2547, %v2526, %v1948
      %v2561 = vsel %vm2547, %v2528, %v1950
      %v2563 = vsel %vm2547, %v2530, %v1952
      %v2565 = vsel %vm2547, %v2532, %v1954
      %v2567 = vsel %vm2547, %v2534, %v1956
      %v2569 = vsel %vm2547, %v2536, %v1958
      %v2571 = vsel %vm2547, %v2538, %v1960
      %v2573 = vsel %vm2547, %v2540, %v1962
      %v2575 = vsel %vm2547, %v2542, %v1964
      %v2577 = vsel %vm2547, %v2544, %v1966
      %v2579 = vsel %vm2547, %v2546, %v1968
      %vm2580 = vcmask 64512
      %v2582 = vsel %vm2580, %v2549, %v2050
      %v2584 = vsel %vm2580, %v2551, %v2052
      %v2586 = vsel %vm2580, %v2553, %v2054
      %v2588 = vsel %vm2580, %v2555, %v2056
      %v2590 = vsel %vm2580, %v2557, %v2058
      %v2592 = vsel %vm2580, %v2559, %v2060
      %v2594 = vsel %vm2580, %v2561, %v2062
      %v2596 = vsel %vm2580, %v2563, %v2064
      %v2598 = vsel %vm2580, %v2565, %v2066
      %v2600 = vsel %vm2580, %v2567, %v2068
      %v2602 = vsel %vm2580, %v2569, %v2070
      %v2604 = vsel %vm2580, %v2571, %v2072
      %v2606 = vsel %vm2580, %v2573, %v2074
      %v2608 = vsel %vm2580, %v2575, %v2076
      %v2610 = vsel %vm2580, %v2577, %v2078
      %v2612 = vsel %vm2580, %v2579, %v2080
      %vm2613 = vcmask 80896
      %v2615 = vsel %vm2613, %v2582, %v2130
      %v2617 = vsel %vm2613, %v2584, %v2132
      %v2619 = vsel %vm2613, %v2586, %v2134
      %v2621 = vsel %vm2613, %v2588, %v2136
      %v2623 = vsel %vm2613, %v2590, %v2138
      %v2625 = vsel %vm2613, %v2592, %v2140
      %v2627 = vsel %vm2613, %v2594, %v2142
      %v2629 = vsel %vm2613, %v2596, %v2144
      %v2631 = vsel %vm2613, %v2598, %v2146
      %v2633 = vsel %vm2613, %v2600, %v2148
      %v2635 = vsel %vm2613, %v2602, %v2150
      %v2637 = vsel %vm2613, %v2604, %v2152
      %v2639 = vsel %vm2613, %v2606, %v2154
      %v2641 = vsel %vm2613, %v2608, %v2156
      %v2643 = vsel %vm2613, %v2610, %v2158
      %v2645 = vsel %vm2613, %v2612, %v2160
      %vm2646 = vcmask 97280
      %v2648 = vsel %vm2646, %v2615, %v2242
      %v2650 = vsel %vm2646, %v2617, %v2244
      %v2652 = vsel %vm2646, %v2619, %v2246
      %v2654 = vsel %vm2646, %v2621, %v2248
      %v2656 = vsel %vm2646, %v2623, %v2250
      %v2658 = vsel %vm2646, %v2625, %v2252
      %v2660 = vsel %vm2646, %v2627, %v2254
      %v2662 = vsel %vm2646, %v2629, %v2256
      %v2664 = vsel %vm2646, %v2631, %v2258
      %v2666 = vsel %vm2646, %v2633, %v2260
      %v2668 = vsel %vm2646, %v2635, %v2262
      %v2670 = vsel %vm2646, %v2637, %v2264
      %v2672 = vsel %vm2646, %v2639, %v2266
      %v2674 = vsel %vm2646, %v2641, %v2268
      %v2676 = vsel %vm2646, %v2643, %v2270
      %v2678 = vsel %vm2646, %v2645, %v2272
      %vm2679 = vcmask 113664
      %v2681 = vsel %vm2679, %v2648, %v2354
      %v2683 = vsel %vm2679, %v2650, %v2356
      %v2685 = vsel %vm2679, %v2652, %v2358
      %v2687 = vsel %vm2679, %v2654, %v2360
      %v2689 = vsel %vm2679, %v2656, %v2362
      %v2691 = vsel %vm2679, %v2658, %v2364
      %v2693 = vsel %vm2679, %v2660, %v2366
      %v2695 = vsel %vm2679, %v2662, %v2368
      %v2697 = vsel %vm2679, %v2664, %v2370
      %v2699 = vsel %vm2679, %v2666, %v2372
      %v2701 = vsel %vm2679, %v2668, %v2374
      %v2703 = vsel %vm2679, %v2670, %v2376
      %v2705 = vsel %vm2679, %v2672, %v2378
      %v2707 = vsel %vm2679, %v2674, %v2380
      %v2709 = vsel %vm2679, %v2676, %v2382
      %v2711 = vsel %vm2679, %v2678, %v2384
      %vm2712 = vcmask 130048
      %v2714 = vsel %vm2712, %v2681, %v2434
      %v2716 = vsel %vm2712, %v2683, %v2436
      %v2718 = vsel %vm2712, %v2685, %v2438
      %v2720 = vsel %vm2712, %v2687, %v2440
      %v2722 = vsel %vm2712, %v2689, %v2442
      %v2724 = vsel %vm2712, %v2691, %v2444
      %v2726 = vsel %vm2712, %v2693, %v2446
      %v2728 = vsel %vm2712, %v2695, %v2448
      %v2730 = vsel %vm2712, %v2697, %v2450
      %v2732 = vsel %vm2712, %v2699, %v2452
      %v2734 = vsel %vm2712, %v2701, %v2454
      %v2736 = vsel %vm2712, %v2703, %v2456
      %v2738 = vsel %vm2712, %v2705, %v2458
      %v2740 = vsel %vm2712, %v2707, %v2460
      %v2742 = vsel %vm2712, %v2709, %v2462
      %v2744 = vsel %vm2712, %v2711, %v2464
      %v2745 = vld [vmem:[%s1] sm:$0xf]
      %v2746 = vld [vmem:[%s1 + $0x4] sm:$0xf]
      %v2747 = vld [vmem:[%s1 + $0x8] sm:$0x1]
      %v2751 = vunpack.c.l.b16 %v2745
      %v2752 = vunpack.c.l.b16 %v2746
      %v2753 = vunpack.c.l.b16 %v2747
      %v2754 = vpack.c.b16 %v2752, %v2751
      %v2755 = vpack.c.b16 %v2753, %v2753
      %vm2757 = vcmask 146432
      %v2758 = vsel %vm2757, %v2714, 0
      %v2760 = vsel %vm2757, %v2716, 0
      %v2762 = vsel %vm2757, %v2718, 0
      %v2764 = vsel %vm2757, %v2720, 0
      %v2766 = vsel %vm2757, %v2722, 0
      %v2768 = vsel %vm2757, %v2724, 0
      %v2770 = vsel %vm2757, %v2726, 0
      %v2772 = vsel %vm2757, %v2728, 0
      %v2774 = vsel %vm2757, %v2730, 0
      %v2776 = vsel %vm2757, %v2732, 0
      %v2778 = vsel %vm2757, %v2734, 0
      %v2780 = vsel %vm2757, %v2736, 0
      %v2782 = vsel %vm2757, %v2738, 0
      %v2784 = vsel %vm2757, %v2740, 0
      %v2786 = vsel %vm2757, %v2742, 0
      %v2788 = vsel %vm2757, %v2744, 0
      %vm2790 = vcmask 1040384
      %v2792 = vsel %vm2790, %v2755, 0
      %2794 = vmatpush.bf16.msra.mxu0 0
      %2795 = vmatpush.bf16.msra.mxu0 0
      %2796 = vmatpush.bf16.msra.mxu0 0
      %2797 = vmatpush.bf16.msra.mxu0 0
      %2798 = vmatpush.bf16.msra.mxu0 0
      %2799 = vmatpush.bf16.msra.mxu0 0
      %2800 = vmatpush.bf16.msra.mxu0 %v2792
      %2801 = vmatpush.bf16.msra.mxu0 %v2754
      %2802 = vmatmul.bf16.gmra.mxu0 %v2758
      %v2803 = vpop.f32.mrf.mxu0
      %v2804 = vadd.f32 0.0, %v2803
      %v2805 = vpop.f32.mrf.mxu0
      %v2806 = vadd.f32 0.0, %v2805
      %2807 = vmatmul.bf16.gmra.mxu0 %v2760
      %v2808 = vpop.f32.mrf.mxu0
      %v2809 = vadd.f32 0.0, %v2808
      %v2810 = vpop.f32.mrf.mxu0
      %v2811 = vadd.f32 0.0, %v2810
      %2812 = vmatmul.bf16.gmra.mxu0 %v2762
      %v2813 = vpop.f32.mrf.mxu0
      %v2814 = vadd.f32 0.0, %v2813
      %v2815 = vpop.f32.mrf.mxu0
      %v2816 = vadd.f32 0.0, %v2815
      %2817 = vmatmul.bf16.gmra.mxu0 %v2764
      %v2818 = vpop.f32.mrf.mxu0
      %v2819 = vadd.f32 0.0, %v2818
      %v2820 = vpop.f32.mrf.mxu0
      %v2821 = vadd.f32 0.0, %v2820
      %2822 = vmatmul.bf16.gmra.mxu0 %v2766
      %v2823 = vpop.f32.mrf.mxu0
      %v2824 = vadd.f32 0.0, %v2823
      %v2825 = vpop.f32.mrf.mxu0
      %v2826 = vadd.f32 0.0, %v2825
      %2827 = vmatmul.bf16.gmra.mxu0 %v2768
      %v2828 = vpop.f32.mrf.mxu0
      %v2829 = vadd.f32 0.0, %v2828
      %v2830 = vpop.f32.mrf.mxu0
      %v2831 = vadd.f32 0.0, %v2830
      %2832 = vmatmul.bf16.gmra.mxu0 %v2770
      %v2833 = vpop.f32.mrf.mxu0
      %v2834 = vadd.f32 0.0, %v2833
      %v2835 = vpop.f32.mrf.mxu0
      %v2836 = vadd.f32 0.0, %v2835
      %2837 = vmatmul.bf16.gmra.mxu0 %v2772
      %v2838 = vpop.f32.mrf.mxu0
      %v2839 = vadd.f32 0.0, %v2838
      %v2840 = vpop.f32.mrf.mxu0
      %v2841 = vadd.f32 0.0, %v2840
      %2842 = vmatmul.bf16.gmra.mxu0 %v2774
      %v2843 = vpop.f32.mrf.mxu0
      %v2844 = vadd.f32 0.0, %v2843
      %v2845 = vpop.f32.mrf.mxu0
      %v2846 = vadd.f32 0.0, %v2845
      %2847 = vmatmul.bf16.gmra.mxu0 %v2776
      %v2848 = vpop.f32.mrf.mxu0
      %v2849 = vadd.f32 0.0, %v2848
      %v2850 = vpop.f32.mrf.mxu0
      %v2851 = vadd.f32 0.0, %v2850
      %2852 = vmatmul.bf16.gmra.mxu0 %v2778
      %v2853 = vpop.f32.mrf.mxu0
      %v2854 = vadd.f32 0.0, %v2853
      %v2855 = vpop.f32.mrf.mxu0
      %v2856 = vadd.f32 0.0, %v2855
      %2857 = vmatmul.bf16.gmra.mxu0 %v2780
      %v2858 = vpop.f32.mrf.mxu0
      %v2859 = vadd.f32 0.0, %v2858
      %v2860 = vpop.f32.mrf.mxu0
      %v2861 = vadd.f32 0.0, %v2860
      %2862 = vmatmul.bf16.gmra.mxu0 %v2782
      %v2863 = vpop.f32.mrf.mxu0
      %v2864 = vadd.f32 0.0, %v2863
      %v2865 = vpop.f32.mrf.mxu0
      %v2866 = vadd.f32 0.0, %v2865
      %2867 = vmatmul.bf16.gmra.mxu0 %v2784
      %v2868 = vpop.f32.mrf.mxu0
      %v2869 = vadd.f32 0.0, %v2868
      %v2870 = vpop.f32.mrf.mxu0
      %v2871 = vadd.f32 0.0, %v2870
      %2872 = vmatmul.bf16.gmra.mxu0 %v2786
      %v2873 = vpop.f32.mrf.mxu0
      %v2874 = vadd.f32 0.0, %v2873
      %v2875 = vpop.f32.mrf.mxu0
      %v2876 = vadd.f32 0.0, %v2875
      %2877 = vmatmul.bf16.gmra.mxu0 %v2788
      %v2878 = vpop.f32.mrf.mxu0
      %v2879 = vadd.f32 0.0, %v2878
      %v2880 = vpop.f32.mrf.mxu0
      %v2881 = vadd.f32 0.0, %v2880
      %2882 = vdwg.mxu0
      %vm2883 = vcmp.gt.f32.partialorder %v2804, 0.0
      %vm2884 = vcmp.gt.f32.partialorder %v2806, 0.0
      %vm2885 = vcmp.gt.f32.partialorder %v2809, 0.0
      %vm2886 = vcmp.gt.f32.partialorder %v2811, 0.0
      %vm2887 = vcmp.gt.f32.partialorder %v2814, 0.0
      %vm2888 = vcmp.gt.f32.partialorder %v2816, 0.0
      %vm2889 = vcmp.gt.f32.partialorder %v2819, 0.0
      %vm2890 = vcmp.gt.f32.partialorder %v2821, 0.0
      %vm2891 = vcmp.gt.f32.partialorder %v2824, 0.0
      %vm2892 = vcmp.gt.f32.partialorder %v2826, 0.0
      %vm2893 = vcmp.gt.f32.partialorder %v2829, 0.0
      %vm2894 = vcmp.gt.f32.partialorder %v2831, 0.0
      %vm2895 = vcmp.gt.f32.partialorder %v2834, 0.0
      %vm2896 = vcmp.gt.f32.partialorder %v2836, 0.0
      %vm2897 = vcmp.gt.f32.partialorder %v2839, 0.0
      %vm2898 = vcmp.gt.f32.partialorder %v2841, 0.0
      %vm2899 = vcmp.gt.f32.partialorder %v2844, 0.0
      %vm2900 = vcmp.gt.f32.partialorder %v2846, 0.0
      %vm2901 = vcmp.gt.f32.partialorder %v2849, 0.0
      %vm2902 = vcmp.gt.f32.partialorder %v2851, 0.0
      %vm2903 = vcmp.gt.f32.partialorder %v2854, 0.0
      %vm2904 = vcmp.gt.f32.partialorder %v2856, 0.0
      %vm2905 = vcmp.gt.f32.partialorder %v2859, 0.0
      %vm2906 = vcmp.gt.f32.partialorder %v2861, 0.0
      %vm2907 = vcmp.gt.f32.partialorder %v2864, 0.0
      %vm2908 = vcmp.gt.f32.partialorder %v2866, 0.0
      %vm2909 = vcmp.gt.f32.partialorder %v2869, 0.0
      %vm2910 = vcmp.gt.f32.partialorder %v2871, 0.0
      %vm2911 = vcmp.gt.f32.partialorder %v2874, 0.0
      %vm2912 = vcmp.gt.f32.partialorder %v2876, 0.0
      %vm2913 = vcmp.gt.f32.partialorder %v2879, 0.0
      %vm2914 = vcmp.gt.f32.partialorder %v2881, 0.0
      %v2915 = vmul.f32 %v2804, 0.2
      %v2916 = vmul.f32 %v2806, 0.2
      %v2917 = vmul.f32 %v2809, 0.2
      %v2918 = vmul.f32 %v2811, 0.2
      %v2919 = vmul.f32 %v2814, 0.2
      %v2920 = vmul.f32 %v2816, 0.2
      %v2921 = vmul.f32 %v2819, 0.2
      %v2922 = vmul.f32 %v2821, 0.2
      %v2923 = vmul.f32 %v2824, 0.2
      %v2924 = vmul.f32 %v2826, 0.2
      %v2925 = vmul.f32 %v2829, 0.2
      %v2926 = vmul.f32 %v2831, 0.2
      %v2927 = vmul.f32 %v2834, 0.2
      %v2928 = vmul.f32 %v2836, 0.2
      %v2929 = vmul.f32 %v2839, 0.2
      %v2930 = vmul.f32 %v2841, 0.2
      %v2931 = vmul.f32 %v2844, 0.2
      %v2932 = vmul.f32 %v2846, 0.2
      %v2933 = vmul.f32 %v2849, 0.2
      %v2934 = vmul.f32 %v2851, 0.2
      %v2935 = vmul.f32 %v2854, 0.2
      %v2936 = vmul.f32 %v2856, 0.2
      %v2937 = vmul.f32 %v2859, 0.2
      %v2938 = vmul.f32 %v2861, 0.2
      %v2939 = vmul.f32 %v2864, 0.2
      %v2940 = vmul.f32 %v2866, 0.2
      %v2941 = vmul.f32 %v2869, 0.2
      %v2942 = vmul.f32 %v2871, 0.2
      %v2943 = vmul.f32 %v2874, 0.2
      %v2944 = vmul.f32 %v2876, 0.2
      %v2945 = vmul.f32 %v2879, 0.2
      %v2946 = vmul.f32 %v2881, 0.2
      %v2947 = vsel %vm2883, %v2804, %v2915
      %v2948 = vsel %vm2884, %v2806, %v2916
      %v2949 = vsel %vm2885, %v2809, %v2917
      %v2950 = vsel %vm2886, %v2811, %v2918
      %v2951 = vsel %vm2887, %v2814, %v2919
      %v2952 = vsel %vm2888, %v2816, %v2920
      %v2953 = vsel %vm2889, %v2819, %v2921
      %v2954 = vsel %vm2890, %v2821, %v2922
      %v2955 = vsel %vm2891, %v2824, %v2923
      %v2956 = vsel %vm2892, %v2826, %v2924
      %v2957 = vsel %vm2893, %v2829, %v2925
      %v2958 = vsel %vm2894, %v2831, %v2926
      %v2959 = vsel %vm2895, %v2834, %v2927
      %v2960 = vsel %vm2896, %v2836, %v2928
      %v2961 = vsel %vm2897, %v2839, %v2929
      %v2962 = vsel %vm2898, %v2841, %v2930
      %v2963 = vsel %vm2899, %v2844, %v2931
      %v2964 = vsel %vm2900, %v2846, %v2932
      %v2965 = vsel %vm2901, %v2849, %v2933
      %v2966 = vsel %vm2902, %v2851, %v2934
      %v2967 = vsel %vm2903, %v2854, %v2935
      %v2968 = vsel %vm2904, %v2856, %v2936
      %v2969 = vsel %vm2905, %v2859, %v2937
      %v2970 = vsel %vm2906, %v2861, %v2938
      %v2971 = vsel %vm2907, %v2864, %v2939
      %v2972 = vsel %vm2908, %v2866, %v2940
      %v2973 = vsel %vm2909, %v2869, %v2941
      %v2974 = vsel %vm2910, %v2871, %v2942
      %v2975 = vsel %vm2911, %v2874, %v2943
      %v2976 = vsel %vm2912, %v2876, %v2944
      %v2977 = vsel %vm2913, %v2879, %v2945
      %v2978 = vsel %vm2914, %v2881, %v2946
      %v2995 = vrot.slane %v2947, 1
      %v2996 = vrot.slane %v2949, 1
      %v2997 = vrot.slane %v2951, 1
      %v2998 = vrot.slane %v2953, 1
      %v2999 = vrot.slane %v2955, 1
      %v3000 = vrot.slane %v2957, 1
      %v3001 = vrot.slane %v2959, 1
      %v3002 = vrot.slane %v2961, 1
      %v3003 = vrot.slane %v2963, 1
      %v3004 = vrot.slane %v2965, 1
      %v3005 = vrot.slane %v2967, 1
      %v3006 = vrot.slane %v2969, 1
      %v3007 = vrot.slane %v2971, 1
      %v3008 = vrot.slane %v2973, 1
      %v3009 = vrot.slane %v2975, 1
      %v3010 = vrot.slane %v2977, 1
      %3011 = vrot.lane.b32.xlu0 %v2995, 8
      %v3012 = vpop.permute.xlu0 %3011
      %3013 = vrot.lane.b32.xlu0 %v2996, 8
      %v3014 = vpop.permute.xlu0 %3013
      %3015 = vrot.lane.b32.xlu0 %v2997, 8
      %v3016 = vpop.permute.xlu0 %3015
      %3017 = vrot.lane.b32.xlu0 %v2998, 8
      %v3018 = vpop.permute.xlu0 %3017
      %3019 = vrot.lane.b32.xlu0 %v2999, 8
      %v3020 = vpop.permute.xlu0 %3019
      %3021 = vrot.lane.b32.xlu0 %v3000, 8
      %v3022 = vpop.permute.xlu0 %3021
      %3023 = vrot.lane.b32.xlu0 %v3001, 8
      %v3024 = vpop.permute.xlu0 %3023
      %3025 = vrot.lane.b32.xlu0 %v3002, 8
      %v3026 = vpop.permute.xlu0 %3025
      %3027 = vrot.lane.b32.xlu0 %v3003, 8
      %v3028 = vpop.permute.xlu0 %3027
      %3029 = vrot.lane.b32.xlu0 %v3004, 8
      %v3030 = vpop.permute.xlu0 %3029
      %3031 = vrot.lane.b32.xlu0 %v3005, 8
      %v3032 = vpop.permute.xlu0 %3031
      %3033 = vrot.lane.b32.xlu0 %v3006, 8
      %v3034 = vpop.permute.xlu0 %3033
      %3035 = vrot.lane.b32.xlu0 %v3007, 8
      %v3036 = vpop.permute.xlu0 %3035
      %3037 = vrot.lane.b32.xlu0 %v3008, 8
      %v3038 = vpop.permute.xlu0 %3037
      %3039 = vrot.lane.b32.xlu0 %v3009, 8
      %v3040 = vpop.permute.xlu0 %3039
      %3041 = vrot.lane.b32.xlu0 %v3010, 8
      %v3042 = vpop.permute.xlu0 %3041
      %v3059 = vrot.slane %v2947, 2
      %v3060 = vrot.slane %v2949, 2
      %v3061 = vrot.slane %v2951, 2
      %v3062 = vrot.slane %v2953, 2
      %v3063 = vrot.slane %v2955, 2
      %v3064 = vrot.slane %v2957, 2
      %v3065 = vrot.slane %v2959, 2
      %v3066 = vrot.slane %v2961, 2
      %v3067 = vrot.slane %v2963, 2
      %v3068 = vrot.slane %v2965, 2
      %v3069 = vrot.slane %v2967, 2
      %v3070 = vrot.slane %v2969, 2
      %v3071 = vrot.slane %v2971, 2
      %v3072 = vrot.slane %v2973, 2
      %v3073 = vrot.slane %v2975, 2
      %v3074 = vrot.slane %v2977, 2
      %3075 = vrot.lane.b32.xlu0 %v3059, 16
      %v3076 = vpop.permute.xlu0 %3075
      %3077 = vrot.lane.b32.xlu0 %v3060, 16
      %v3078 = vpop.permute.xlu0 %3077
      %3079 = vrot.lane.b32.xlu0 %v3061, 16
      %v3080 = vpop.permute.xlu0 %3079
      %3081 = vrot.lane.b32.xlu0 %v3062, 16
      %v3082 = vpop.permute.xlu0 %3081
      %3083 = vrot.lane.b32.xlu0 %v3063, 16
      %v3084 = vpop.permute.xlu0 %3083
      %3085 = vrot.lane.b32.xlu0 %v3064, 16
      %v3086 = vpop.permute.xlu0 %3085
      %3087 = vrot.lane.b32.xlu0 %v3065, 16
      %v3088 = vpop.permute.xlu0 %3087
      %3089 = vrot.lane.b32.xlu0 %v3066, 16
      %v3090 = vpop.permute.xlu0 %3089
      %3091 = vrot.lane.b32.xlu0 %v3067, 16
      %v3092 = vpop.permute.xlu0 %3091
      %3093 = vrot.lane.b32.xlu0 %v3068, 16
      %v3094 = vpop.permute.xlu0 %3093
      %3095 = vrot.lane.b32.xlu0 %v3069, 16
      %v3096 = vpop.permute.xlu0 %3095
      %3097 = vrot.lane.b32.xlu0 %v3070, 16
      %v3098 = vpop.permute.xlu0 %3097
      %3099 = vrot.lane.b32.xlu0 %v3071, 16
      %v3100 = vpop.permute.xlu0 %3099
      %3101 = vrot.lane.b32.xlu0 %v3072, 16
      %v3102 = vpop.permute.xlu0 %3101
      %3103 = vrot.lane.b32.xlu0 %v3073, 16
      %v3104 = vpop.permute.xlu0 %3103
      %3105 = vrot.lane.b32.xlu0 %v3074, 16
      %v3106 = vpop.permute.xlu0 %3105
      %v3123 = vrot.slane %v2947, 3
      %v3124 = vrot.slane %v2949, 3
      %v3125 = vrot.slane %v2951, 3
      %v3126 = vrot.slane %v2953, 3
      %v3127 = vrot.slane %v2955, 3
      %v3128 = vrot.slane %v2957, 3
      %v3129 = vrot.slane %v2959, 3
      %v3130 = vrot.slane %v2961, 3
      %v3131 = vrot.slane %v2963, 3
      %v3132 = vrot.slane %v2965, 3
      %v3133 = vrot.slane %v2967, 3
      %v3134 = vrot.slane %v2969, 3
      %v3135 = vrot.slane %v2971, 3
      %v3136 = vrot.slane %v2973, 3
      %v3137 = vrot.slane %v2975, 3
      %v3138 = vrot.slane %v2977, 3
      %3139 = vrot.lane.b32.xlu0 %v3123, 24
      %v3140 = vpop.permute.xlu0 %3139
      %3141 = vrot.lane.b32.xlu0 %v3124, 24
      %v3142 = vpop.permute.xlu0 %3141
      %3143 = vrot.lane.b32.xlu0 %v3125, 24
      %v3144 = vpop.permute.xlu0 %3143
      %3145 = vrot.lane.b32.xlu0 %v3126, 24
      %v3146 = vpop.permute.xlu0 %3145
      %3147 = vrot.lane.b32.xlu0 %v3127, 24
      %v3148 = vpop.permute.xlu0 %3147
      %3149 = vrot.lane.b32.xlu0 %v3128, 24
      %v3150 = vpop.permute.xlu0 %3149
      %3151 = vrot.lane.b32.xlu0 %v3129, 24
      %v3152 = vpop.permute.xlu0 %3151
      %3153 = vrot.lane.b32.xlu0 %v3130, 24
      %v3154 = vpop.permute.xlu0 %3153
      %3155 = vrot.lane.b32.xlu0 %v3131, 24
      %v3156 = vpop.permute.xlu0 %3155
      %3157 = vrot.lane.b32.xlu0 %v3132, 24
      %v3158 = vpop.permute.xlu0 %3157
      %3159 = vrot.lane.b32.xlu0 %v3133, 24
      %v3160 = vpop.permute.xlu0 %3159
      %3161 = vrot.lane.b32.xlu0 %v3134, 24
      %v3162 = vpop.permute.xlu0 %3161
      %3163 = vrot.lane.b32.xlu0 %v3135, 24
      %v3164 = vpop.permute.xlu0 %3163
      %3165 = vrot.lane.b32.xlu0 %v3136, 24
      %v3166 = vpop.permute.xlu0 %3165
      %3167 = vrot.lane.b32.xlu0 %v3137, 24
      %v3168 = vpop.permute.xlu0 %3167
      %3169 = vrot.lane.b32.xlu0 %v3138, 24
      %v3170 = vpop.permute.xlu0 %3169
      %v3187 = vrot.slane %v2947, 4
      %v3188 = vrot.slane %v2949, 4
      %v3189 = vrot.slane %v2951, 4
      %v3190 = vrot.slane %v2953, 4
      %v3191 = vrot.slane %v2955, 4
      %v3192 = vrot.slane %v2957, 4
      %v3193 = vrot.slane %v2959, 4
      %v3194 = vrot.slane %v2961, 4
      %v3195 = vrot.slane %v2963, 4
      %v3196 = vrot.slane %v2965, 4
      %v3197 = vrot.slane %v2967, 4
      %v3198 = vrot.slane %v2969, 4
      %v3199 = vrot.slane %v2971, 4
      %v3200 = vrot.slane %v2973, 4
      %v3201 = vrot.slane %v2975, 4
      %v3202 = vrot.slane %v2977, 4
      %3203 = vrot.lane.b32.xlu0 %v3187, 32
      %v3204 = vpop.permute.xlu0 %3203
      %3205 = vrot.lane.b32.xlu0 %v3188, 32
      %v3206 = vpop.permute.xlu0 %3205
      %3207 = vrot.lane.b32.xlu0 %v3189, 32
      %v3208 = vpop.permute.xlu0 %3207
      %3209 = vrot.lane.b32.xlu0 %v3190, 32
      %v3210 = vpop.permute.xlu0 %3209
      %3211 = vrot.lane.b32.xlu0 %v3191, 32
      %v3212 = vpop.permute.xlu0 %3211
      %3213 = vrot.lane.b32.xlu0 %v3192, 32
      %v3214 = vpop.permute.xlu0 %3213
      %3215 = vrot.lane.b32.xlu0 %v3193, 32
      %v3216 = vpop.permute.xlu0 %3215
      %3217 = vrot.lane.b32.xlu0 %v3194, 32
      %v3218 = vpop.permute.xlu0 %3217
      %3219 = vrot.lane.b32.xlu0 %v3195, 32
      %v3220 = vpop.permute.xlu0 %3219
      %3221 = vrot.lane.b32.xlu0 %v3196, 32
      %v3222 = vpop.permute.xlu0 %3221
      %3223 = vrot.lane.b32.xlu0 %v3197, 32
      %v3224 = vpop.permute.xlu0 %3223
      %3225 = vrot.lane.b32.xlu0 %v3198, 32
      %v3226 = vpop.permute.xlu0 %3225
      %3227 = vrot.lane.b32.xlu0 %v3199, 32
      %v3228 = vpop.permute.xlu0 %3227
      %3229 = vrot.lane.b32.xlu0 %v3200, 32
      %v3230 = vpop.permute.xlu0 %3229
      %3231 = vrot.lane.b32.xlu0 %v3201, 32
      %v3232 = vpop.permute.xlu0 %3231
      %3233 = vrot.lane.b32.xlu0 %v3202, 32
      %v3234 = vpop.permute.xlu0 %3233
      %v3251 = vrot.slane %v2947, 5
      %v3252 = vrot.slane %v2949, 5
      %v3253 = vrot.slane %v2951, 5
      %v3254 = vrot.slane %v2953, 5
      %v3255 = vrot.slane %v2955, 5
      %v3256 = vrot.slane %v2957, 5
      %v3257 = vrot.slane %v2959, 5
      %v3258 = vrot.slane %v2961, 5
      %v3259 = vrot.slane %v2963, 5
      %v3260 = vrot.slane %v2965, 5
      %v3261 = vrot.slane %v2967, 5
      %v3262 = vrot.slane %v2969, 5
      %v3263 = vrot.slane %v2971, 5
      %v3264 = vrot.slane %v2973, 5
      %v3265 = vrot.slane %v2975, 5
      %v3266 = vrot.slane %v2977, 5
      %3267 = vrot.lane.b32.xlu0 %v3251, 40
      %v3268 = vpop.permute.xlu0 %3267
      %3269 = vrot.lane.b32.xlu0 %v3252, 40
      %v3270 = vpop.permute.xlu0 %3269
      %3271 = vrot.lane.b32.xlu0 %v3253, 40
      %v3272 = vpop.permute.xlu0 %3271
      %3273 = vrot.lane.b32.xlu0 %v3254, 40
      %v3274 = vpop.permute.xlu0 %3273
      %3275 = vrot.lane.b32.xlu0 %v3255, 40
      %v3276 = vpop.permute.xlu0 %3275
      %3277 = vrot.lane.b32.xlu0 %v3256, 40
      %v3278 = vpop.permute.xlu0 %3277
      %3279 = vrot.lane.b32.xlu0 %v3257, 40
      %v3280 = vpop.permute.xlu0 %3279
      %3281 = vrot.lane.b32.xlu0 %v3258, 40
      %v3282 = vpop.permute.xlu0 %3281
      %3283 = vrot.lane.b32.xlu0 %v3259, 40
      %v3284 = vpop.permute.xlu0 %3283
      %3285 = vrot.lane.b32.xlu0 %v3260, 40
      %v3286 = vpop.permute.xlu0 %3285
      %3287 = vrot.lane.b32.xlu0 %v3261, 40
      %v3288 = vpop.permute.xlu0 %3287
      %3289 = vrot.lane.b32.xlu0 %v3262, 40
      %v3290 = vpop.permute.xlu0 %3289
      %3291 = vrot.lane.b32.xlu0 %v3263, 40
      %v3292 = vpop.permute.xlu0 %3291
      %3293 = vrot.lane.b32.xlu0 %v3264, 40
      %v3294 = vpop.permute.xlu0 %3293
      %3295 = vrot.lane.b32.xlu0 %v3265, 40
      %v3296 = vpop.permute.xlu0 %3295
      %3297 = vrot.lane.b32.xlu0 %v3266, 40
      %v3298 = vpop.permute.xlu0 %3297
      %v3315 = vrot.slane %v2947, 6
      %v3316 = vrot.slane %v2949, 6
      %v3317 = vrot.slane %v2951, 6
      %v3318 = vrot.slane %v2953, 6
      %v3319 = vrot.slane %v2955, 6
      %v3320 = vrot.slane %v2957, 6
      %v3321 = vrot.slane %v2959, 6
      %v3322 = vrot.slane %v2961, 6
      %v3323 = vrot.slane %v2963, 6
      %v3324 = vrot.slane %v2965, 6
      %v3325 = vrot.slane %v2967, 6
      %v3326 = vrot.slane %v2969, 6
      %v3327 = vrot.slane %v2971, 6
      %v3328 = vrot.slane %v2973, 6
      %v3329 = vrot.slane %v2975, 6
      %v3330 = vrot.slane %v2977, 6
      %3331 = vrot.lane.b32.xlu0 %v3315, 48
      %v3332 = vpop.permute.xlu0 %3331
      %3333 = vrot.lane.b32.xlu0 %v3316, 48
      %v3334 = vpop.permute.xlu0 %3333
      %3335 = vrot.lane.b32.xlu0 %v3317, 48
      %v3336 = vpop.permute.xlu0 %3335
      %3337 = vrot.lane.b32.xlu0 %v3318, 48
      %v3338 = vpop.permute.xlu0 %3337
      %3339 = vrot.lane.b32.xlu0 %v3319, 48
      %v3340 = vpop.permute.xlu0 %3339
      %3341 = vrot.lane.b32.xlu0 %v3320, 48
      %v3342 = vpop.permute.xlu0 %3341
      %3343 = vrot.lane.b32.xlu0 %v3321, 48
      %v3344 = vpop.permute.xlu0 %3343
      %3345 = vrot.lane.b32.xlu0 %v3322, 48
      %v3346 = vpop.permute.xlu0 %3345
      %3347 = vrot.lane.b32.xlu0 %v3323, 48
      %v3348 = vpop.permute.xlu0 %3347
      %3349 = vrot.lane.b32.xlu0 %v3324, 48
      %v3350 = vpop.permute.xlu0 %3349
      %3351 = vrot.lane.b32.xlu0 %v3325, 48
      %v3352 = vpop.permute.xlu0 %3351
      %3353 = vrot.lane.b32.xlu0 %v3326, 48
      %v3354 = vpop.permute.xlu0 %3353
      %3355 = vrot.lane.b32.xlu0 %v3327, 48
      %v3356 = vpop.permute.xlu0 %3355
      %3357 = vrot.lane.b32.xlu0 %v3328, 48
      %v3358 = vpop.permute.xlu0 %3357
      %3359 = vrot.lane.b32.xlu0 %v3329, 48
      %v3360 = vpop.permute.xlu0 %3359
      %3361 = vrot.lane.b32.xlu0 %v3330, 48
      %v3362 = vpop.permute.xlu0 %3361
      %v3379 = vrot.slane %v2947, 7
      %v3380 = vrot.slane %v2949, 7
      %v3381 = vrot.slane %v2951, 7
      %v3382 = vrot.slane %v2953, 7
      %v3383 = vrot.slane %v2955, 7
      %v3384 = vrot.slane %v2957, 7
      %v3385 = vrot.slane %v2959, 7
      %v3386 = vrot.slane %v2961, 7
      %v3387 = vrot.slane %v2963, 7
      %v3388 = vrot.slane %v2965, 7
      %v3389 = vrot.slane %v2967, 7
      %v3390 = vrot.slane %v2969, 7
      %v3391 = vrot.slane %v2971, 7
      %v3392 = vrot.slane %v2973, 7
      %v3393 = vrot.slane %v2975, 7
      %v3394 = vrot.slane %v2977, 7
      %3395 = vrot.lane.b32.xlu0 %v3379, 56
      %v3396 = vpop.permute.xlu0 %3395
      %3397 = vrot.lane.b32.xlu0 %v3380, 56
      %v3398 = vpop.permute.xlu0 %3397
      %3399 = vrot.lane.b32.xlu0 %v3381, 56
      %v3400 = vpop.permute.xlu0 %3399
      %3401 = vrot.lane.b32.xlu0 %v3382, 56
      %v3402 = vpop.permute.xlu0 %3401
      %3403 = vrot.lane.b32.xlu0 %v3383, 56
      %v3404 = vpop.permute.xlu0 %3403
      %3405 = vrot.lane.b32.xlu0 %v3384, 56
      %v3406 = vpop.permute.xlu0 %3405
      %3407 = vrot.lane.b32.xlu0 %v3385, 56
      %v3408 = vpop.permute.xlu0 %3407
      %3409 = vrot.lane.b32.xlu0 %v3386, 56
      %v3410 = vpop.permute.xlu0 %3409
      %3411 = vrot.lane.b32.xlu0 %v3387, 56
      %v3412 = vpop.permute.xlu0 %3411
      %3413 = vrot.lane.b32.xlu0 %v3388, 56
      %v3414 = vpop.permute.xlu0 %3413
      %3415 = vrot.lane.b32.xlu0 %v3389, 56
      %v3416 = vpop.permute.xlu0 %3415
      %3417 = vrot.lane.b32.xlu0 %v3390, 56
      %v3418 = vpop.permute.xlu0 %3417
      %3419 = vrot.lane.b32.xlu0 %v3391, 56
      %v3420 = vpop.permute.xlu0 %3419
      %3421 = vrot.lane.b32.xlu0 %v3392, 56
      %v3422 = vpop.permute.xlu0 %3421
      %3423 = vrot.lane.b32.xlu0 %v3393, 56
      %v3424 = vpop.permute.xlu0 %3423
      %3425 = vrot.lane.b32.xlu0 %v3394, 56
      %v3426 = vpop.permute.xlu0 %3425
      %3459 = vrot.lane.b32.xlu0 %v2948, 64
      %v3460 = vpop.permute.xlu0 %3459
      %3461 = vrot.lane.b32.xlu0 %v2950, 64
      %v3462 = vpop.permute.xlu0 %3461
      %3463 = vrot.lane.b32.xlu0 %v2952, 64
      %v3464 = vpop.permute.xlu0 %3463
      %3465 = vrot.lane.b32.xlu0 %v2954, 64
      %v3466 = vpop.permute.xlu0 %3465
      %3467 = vrot.lane.b32.xlu0 %v2956, 64
      %v3468 = vpop.permute.xlu0 %3467
      %3469 = vrot.lane.b32.xlu0 %v2958, 64
      %v3470 = vpop.permute.xlu0 %3469
      %3471 = vrot.lane.b32.xlu0 %v2960, 64
      %v3472 = vpop.permute.xlu0 %3471
      %3473 = vrot.lane.b32.xlu0 %v2962, 64
      %v3474 = vpop.permute.xlu0 %3473
      %3475 = vrot.lane.b32.xlu0 %v2964, 64
      %v3476 = vpop.permute.xlu0 %3475
      %3477 = vrot.lane.b32.xlu0 %v2966, 64
      %v3478 = vpop.permute.xlu0 %3477
      %3479 = vrot.lane.b32.xlu0 %v2968, 64
      %v3480 = vpop.permute.xlu0 %3479
      %3481 = vrot.lane.b32.xlu0 %v2970, 64
      %v3482 = vpop.permute.xlu0 %3481
      %3483 = vrot.lane.b32.xlu0 %v2972, 64
      %v3484 = vpop.permute.xlu0 %3483
      %3485 = vrot.lane.b32.xlu0 %v2974, 64
      %v3486 = vpop.permute.xlu0 %3485
      %3487 = vrot.lane.b32.xlu0 %v2976, 64
      %v3488 = vpop.permute.xlu0 %3487
      %3489 = vrot.lane.b32.xlu0 %v2978, 64
      %v3490 = vpop.permute.xlu0 %3489
      %v3507 = vrot.slane %v2948, 1
      %v3508 = vrot.slane %v2950, 1
      %v3509 = vrot.slane %v2952, 1
      %v3510 = vrot.slane %v2954, 1
      %v3511 = vrot.slane %v2956, 1
      %v3512 = vrot.slane %v2958, 1
      %v3513 = vrot.slane %v2960, 1
      %v3514 = vrot.slane %v2962, 1
      %v3515 = vrot.slane %v2964, 1
      %v3516 = vrot.slane %v2966, 1
      %v3517 = vrot.slane %v2968, 1
      %v3518 = vrot.slane %v2970, 1
      %v3519 = vrot.slane %v2972, 1
      %v3520 = vrot.slane %v2974, 1
      %v3521 = vrot.slane %v2976, 1
      %v3522 = vrot.slane %v2978, 1
      %3523 = vrot.lane.b32.xlu0 %v3507, 72
      %v3524 = vpop.permute.xlu0 %3523
      %3525 = vrot.lane.b32.xlu0 %v3508, 72
      %v3526 = vpop.permute.xlu0 %3525
      %3527 = vrot.lane.b32.xlu0 %v3509, 72
      %v3528 = vpop.permute.xlu0 %3527
      %3529 = vrot.lane.b32.xlu0 %v3510, 72
      %v3530 = vpop.permute.xlu0 %3529
      %3531 = vrot.lane.b32.xlu0 %v3511, 72
      %v3532 = vpop.permute.xlu0 %3531
      %3533 = vrot.lane.b32.xlu0 %v3512, 72
      %v3534 = vpop.permute.xlu0 %3533
      %3535 = vrot.lane.b32.xlu0 %v3513, 72
      %v3536 = vpop.permute.xlu0 %3535
      %3537 = vrot.lane.b32.xlu0 %v3514, 72
      %v3538 = vpop.permute.xlu0 %3537
      %3539 = vrot.lane.b32.xlu0 %v3515, 72
      %v3540 = vpop.permute.xlu0 %3539
      %3541 = vrot.lane.b32.xlu0 %v3516, 72
      %v3542 = vpop.permute.xlu0 %3541
      %3543 = vrot.lane.b32.xlu0 %v3517, 72
      %v3544 = vpop.permute.xlu0 %3543
      %3545 = vrot.lane.b32.xlu0 %v3518, 72
      %v3546 = vpop.permute.xlu0 %3545
      %3547 = vrot.lane.b32.xlu0 %v3519, 72
      %v3548 = vpop.permute.xlu0 %3547
      %3549 = vrot.lane.b32.xlu0 %v3520, 72
      %v3550 = vpop.permute.xlu0 %3549
      %3551 = vrot.lane.b32.xlu0 %v3521, 72
      %v3552 = vpop.permute.xlu0 %3551
      %3553 = vrot.lane.b32.xlu0 %v3522, 72
      %v3554 = vpop.permute.xlu0 %3553
      %v3571 = vrot.slane %v2948, 2
      %v3572 = vrot.slane %v2950, 2
      %v3573 = vrot.slane %v2952, 2
      %v3574 = vrot.slane %v2954, 2
      %v3575 = vrot.slane %v2956, 2
      %v3576 = vrot.slane %v2958, 2
      %v3577 = vrot.slane %v2960, 2
      %v3578 = vrot.slane %v2962, 2
      %v3579 = vrot.slane %v2964, 2
      %v3580 = vrot.slane %v2966, 2
      %v3581 = vrot.slane %v2968, 2
      %v3582 = vrot.slane %v2970, 2
      %v3583 = vrot.slane %v2972, 2
      %v3584 = vrot.slane %v2974, 2
      %v3585 = vrot.slane %v2976, 2
      %v3586 = vrot.slane %v2978, 2
      %3587 = vrot.lane.b32.xlu0 %v3571, 80
      %v3588 = vpop.permute.xlu0 %3587
      %3589 = vrot.lane.b32.xlu0 %v3572, 80
      %v3590 = vpop.permute.xlu0 %3589
      %3591 = vrot.lane.b32.xlu0 %v3573, 80
      %v3592 = vpop.permute.xlu0 %3591
      %3593 = vrot.lane.b32.xlu0 %v3574, 80
      %v3594 = vpop.permute.xlu0 %3593
      %3595 = vrot.lane.b32.xlu0 %v3575, 80
      %v3596 = vpop.permute.xlu0 %3595
      %3597 = vrot.lane.b32.xlu0 %v3576, 80
      %v3598 = vpop.permute.xlu0 %3597
      %3599 = vrot.lane.b32.xlu0 %v3577, 80
      %v3600 = vpop.permute.xlu0 %3599
      %3601 = vrot.lane.b32.xlu0 %v3578, 80
      %v3602 = vpop.permute.xlu0 %3601
      %3603 = vrot.lane.b32.xlu0 %v3579, 80
      %v3604 = vpop.permute.xlu0 %3603
      %3605 = vrot.lane.b32.xlu0 %v3580, 80
      %v3606 = vpop.permute.xlu0 %3605
      %3607 = vrot.lane.b32.xlu0 %v3581, 80
      %v3608 = vpop.permute.xlu0 %3607
      %3609 = vrot.lane.b32.xlu0 %v3582, 80
      %v3610 = vpop.permute.xlu0 %3609
      %3611 = vrot.lane.b32.xlu0 %v3583, 80
      %v3612 = vpop.permute.xlu0 %3611
      %3613 = vrot.lane.b32.xlu0 %v3584, 80
      %v3614 = vpop.permute.xlu0 %3613
      %3615 = vrot.lane.b32.xlu0 %v3585, 80
      %v3616 = vpop.permute.xlu0 %3615
      %3617 = vrot.lane.b32.xlu0 %v3586, 80
      %v3618 = vpop.permute.xlu0 %3617
      %v3635 = vrot.slane %v2948, 3
      %v3636 = vrot.slane %v2950, 3
      %v3637 = vrot.slane %v2952, 3
      %v3638 = vrot.slane %v2954, 3
      %v3639 = vrot.slane %v2956, 3
      %v3640 = vrot.slane %v2958, 3
      %v3641 = vrot.slane %v2960, 3
      %v3642 = vrot.slane %v2962, 3
      %v3643 = vrot.slane %v2964, 3
      %v3644 = vrot.slane %v2966, 3
      %v3645 = vrot.slane %v2968, 3
      %v3646 = vrot.slane %v2970, 3
      %v3647 = vrot.slane %v2972, 3
      %v3648 = vrot.slane %v2974, 3
      %v3649 = vrot.slane %v2976, 3
      %v3650 = vrot.slane %v2978, 3
      %3651 = vrot.lane.b32.xlu0 %v3635, 88
      %v3652 = vpop.permute.xlu0 %3651
      %3653 = vrot.lane.b32.xlu0 %v3636, 88
      %v3654 = vpop.permute.xlu0 %3653
      %3655 = vrot.lane.b32.xlu0 %v3637, 88
      %v3656 = vpop.permute.xlu0 %3655
      %3657 = vrot.lane.b32.xlu0 %v3638, 88
      %v3658 = vpop.permute.xlu0 %3657
      %3659 = vrot.lane.b32.xlu0 %v3639, 88
      %v3660 = vpop.permute.xlu0 %3659
      %3661 = vrot.lane.b32.xlu0 %v3640, 88
      %v3662 = vpop.permute.xlu0 %3661
      %3663 = vrot.lane.b32.xlu0 %v3641, 88
      %v3664 = vpop.permute.xlu0 %3663
      %3665 = vrot.lane.b32.xlu0 %v3642, 88
      %v3666 = vpop.permute.xlu0 %3665
      %3667 = vrot.lane.b32.xlu0 %v3643, 88
      %v3668 = vpop.permute.xlu0 %3667
      %3669 = vrot.lane.b32.xlu0 %v3644, 88
      %v3670 = vpop.permute.xlu0 %3669
      %3671 = vrot.lane.b32.xlu0 %v3645, 88
      %v3672 = vpop.permute.xlu0 %3671
      %3673 = vrot.lane.b32.xlu0 %v3646, 88
      %v3674 = vpop.permute.xlu0 %3673
      %3675 = vrot.lane.b32.xlu0 %v3647, 88
      %v3676 = vpop.permute.xlu0 %3675
      %3677 = vrot.lane.b32.xlu0 %v3648, 88
      %v3678 = vpop.permute.xlu0 %3677
      %3679 = vrot.lane.b32.xlu0 %v3649, 88
      %v3680 = vpop.permute.xlu0 %3679
      %3681 = vrot.lane.b32.xlu0 %v3650, 88
      %v3682 = vpop.permute.xlu0 %3681
      %v3699 = vrot.slane %v2948, 4
      %v3700 = vrot.slane %v2950, 4
      %v3701 = vrot.slane %v2952, 4
      %v3702 = vrot.slane %v2954, 4
      %v3703 = vrot.slane %v2956, 4
      %v3704 = vrot.slane %v2958, 4
      %v3705 = vrot.slane %v2960, 4
      %v3706 = vrot.slane %v2962, 4
      %v3707 = vrot.slane %v2964, 4
      %v3708 = vrot.slane %v2966, 4
      %v3709 = vrot.slane %v2968, 4
      %v3710 = vrot.slane %v2970, 4
      %v3711 = vrot.slane %v2972, 4
      %v3712 = vrot.slane %v2974, 4
      %v3713 = vrot.slane %v2976, 4
      %v3714 = vrot.slane %v2978, 4
      %3715 = vrot.lane.b32.xlu0 %v3699, 96
      %v3716 = vpop.permute.xlu0 %3715
      %3717 = vrot.lane.b32.xlu0 %v3700, 96
      %v3718 = vpop.permute.xlu0 %3717
      %3719 = vrot.lane.b32.xlu0 %v3701, 96
      %v3720 = vpop.permute.xlu0 %3719
      %3721 = vrot.lane.b32.xlu0 %v3702, 96
      %v3722 = vpop.permute.xlu0 %3721
      %3723 = vrot.lane.b32.xlu0 %v3703, 96
      %v3724 = vpop.permute.xlu0 %3723
      %3725 = vrot.lane.b32.xlu0 %v3704, 96
      %v3726 = vpop.permute.xlu0 %3725
      %3727 = vrot.lane.b32.xlu0 %v3705, 96
      %v3728 = vpop.permute.xlu0 %3727
      %3729 = vrot.lane.b32.xlu0 %v3706, 96
      %v3730 = vpop.permute.xlu0 %3729
      %3731 = vrot.lane.b32.xlu0 %v3707, 96
      %v3732 = vpop.permute.xlu0 %3731
      %3733 = vrot.lane.b32.xlu0 %v3708, 96
      %v3734 = vpop.permute.xlu0 %3733
      %3735 = vrot.lane.b32.xlu0 %v3709, 96
      %v3736 = vpop.permute.xlu0 %3735
      %3737 = vrot.lane.b32.xlu0 %v3710, 96
      %v3738 = vpop.permute.xlu0 %3737
      %3739 = vrot.lane.b32.xlu0 %v3711, 96
      %v3740 = vpop.permute.xlu0 %3739
      %3741 = vrot.lane.b32.xlu0 %v3712, 96
      %v3742 = vpop.permute.xlu0 %3741
      %3743 = vrot.lane.b32.xlu0 %v3713, 96
      %v3744 = vpop.permute.xlu0 %3743
      %3745 = vrot.lane.b32.xlu0 %v3714, 96
      %v3746 = vpop.permute.xlu0 %3745
      %v3763 = vrot.slane %v2948, 5
      %v3764 = vrot.slane %v2950, 5
      %v3765 = vrot.slane %v2952, 5
      %v3766 = vrot.slane %v2954, 5
      %v3767 = vrot.slane %v2956, 5
      %v3768 = vrot.slane %v2958, 5
      %v3769 = vrot.slane %v2960, 5
      %v3770 = vrot.slane %v2962, 5
      %v3771 = vrot.slane %v2964, 5
      %v3772 = vrot.slane %v2966, 5
      %v3773 = vrot.slane %v2968, 5
      %v3774 = vrot.slane %v2970, 5
      %v3775 = vrot.slane %v2972, 5
      %v3776 = vrot.slane %v2974, 5
      %v3777 = vrot.slane %v2976, 5
      %v3778 = vrot.slane %v2978, 5
      %3779 = vrot.lane.b32.xlu0 %v3763, 104
      %v3780 = vpop.permute.xlu0 %3779
      %3781 = vrot.lane.b32.xlu0 %v3764, 104
      %v3782 = vpop.permute.xlu0 %3781
      %3783 = vrot.lane.b32.xlu0 %v3765, 104
      %v3784 = vpop.permute.xlu0 %3783
      %3785 = vrot.lane.b32.xlu0 %v3766, 104
      %v3786 = vpop.permute.xlu0 %3785
      %3787 = vrot.lane.b32.xlu0 %v3767, 104
      %v3788 = vpop.permute.xlu0 %3787
      %3789 = vrot.lane.b32.xlu0 %v3768, 104
      %v3790 = vpop.permute.xlu0 %3789
      %3791 = vrot.lane.b32.xlu0 %v3769, 104
      %v3792 = vpop.permute.xlu0 %3791
      %3793 = vrot.lane.b32.xlu0 %v3770, 104
      %v3794 = vpop.permute.xlu0 %3793
      %3795 = vrot.lane.b32.xlu0 %v3771, 104
      %v3796 = vpop.permute.xlu0 %3795
      %3797 = vrot.lane.b32.xlu0 %v3772, 104
      %v3798 = vpop.permute.xlu0 %3797
      %3799 = vrot.lane.b32.xlu0 %v3773, 104
      %v3800 = vpop.permute.xlu0 %3799
      %3801 = vrot.lane.b32.xlu0 %v3774, 104
      %v3802 = vpop.permute.xlu0 %3801
      %3803 = vrot.lane.b32.xlu0 %v3775, 104
      %v3804 = vpop.permute.xlu0 %3803
      %3805 = vrot.lane.b32.xlu0 %v3776, 104
      %v3806 = vpop.permute.xlu0 %3805
      %3807 = vrot.lane.b32.xlu0 %v3777, 104
      %v3808 = vpop.permute.xlu0 %3807
      %3809 = vrot.lane.b32.xlu0 %v3778, 104
      %v3810 = vpop.permute.xlu0 %3809
      %v3827 = vrot.slane %v2948, 6
      %v3828 = vrot.slane %v2950, 6
      %v3829 = vrot.slane %v2952, 6
      %v3830 = vrot.slane %v2954, 6
      %v3831 = vrot.slane %v2956, 6
      %v3832 = vrot.slane %v2958, 6
      %v3833 = vrot.slane %v2960, 6
      %v3834 = vrot.slane %v2962, 6
      %v3835 = vrot.slane %v2964, 6
      %v3836 = vrot.slane %v2966, 6
      %v3837 = vrot.slane %v2968, 6
      %v3838 = vrot.slane %v2970, 6
      %v3839 = vrot.slane %v2972, 6
      %v3840 = vrot.slane %v2974, 6
      %v3841 = vrot.slane %v2976, 6
      %v3842 = vrot.slane %v2978, 6
      %3843 = vrot.lane.b32.xlu0 %v3827, 112
      %v3844 = vpop.permute.xlu0 %3843
      %3845 = vrot.lane.b32.xlu0 %v3828, 112
      %v3846 = vpop.permute.xlu0 %3845
      %3847 = vrot.lane.b32.xlu0 %v3829, 112
      %v3848 = vpop.permute.xlu0 %3847
      %3849 = vrot.lane.b32.xlu0 %v3830, 112
      %v3850 = vpop.permute.xlu0 %3849
      %3851 = vrot.lane.b32.xlu0 %v3831, 112
      %v3852 = vpop.permute.xlu0 %3851
      %3853 = vrot.lane.b32.xlu0 %v3832, 112
      %v3854 = vpop.permute.xlu0 %3853
      %3855 = vrot.lane.b32.xlu0 %v3833, 112
      %v3856 = vpop.permute.xlu0 %3855
      %3857 = vrot.lane.b32.xlu0 %v3834, 112
      %v3858 = vpop.permute.xlu0 %3857
      %3859 = vrot.lane.b32.xlu0 %v3835, 112
      %v3860 = vpop.permute.xlu0 %3859
      %3861 = vrot.lane.b32.xlu0 %v3836, 112
      %v3862 = vpop.permute.xlu0 %3861
      %3863 = vrot.lane.b32.xlu0 %v3837, 112
      %v3864 = vpop.permute.xlu0 %3863
      %3865 = vrot.lane.b32.xlu0 %v3838, 112
      %v3866 = vpop.permute.xlu0 %3865
      %3867 = vrot.lane.b32.xlu0 %v3839, 112
      %v3868 = vpop.permute.xlu0 %3867
      %3869 = vrot.lane.b32.xlu0 %v3840, 112
      %v3870 = vpop.permute.xlu0 %3869
      %3871 = vrot.lane.b32.xlu0 %v3841, 112
      %v3872 = vpop.permute.xlu0 %3871
      %3873 = vrot.lane.b32.xlu0 %v3842, 112
      %v3874 = vpop.permute.xlu0 %3873
      %v3891 = vrot.slane %v2948, 7
      %v3892 = vrot.slane %v2950, 7
      %v3893 = vrot.slane %v2952, 7
      %v3894 = vrot.slane %v2954, 7
      %v3895 = vrot.slane %v2956, 7
      %v3896 = vrot.slane %v2958, 7
      %v3897 = vrot.slane %v2960, 7
      %v3898 = vrot.slane %v2962, 7
      %v3899 = vrot.slane %v2964, 7
      %v3900 = vrot.slane %v2966, 7
      %v3901 = vrot.slane %v2968, 7
      %v3902 = vrot.slane %v2970, 7
      %v3903 = vrot.slane %v2972, 7
      %v3904 = vrot.slane %v2974, 7
      %v3905 = vrot.slane %v2976, 7
      %v3906 = vrot.slane %v2978, 7
      %3907 = vrot.lane.b32.xlu0 %v3891, 120
      %v3908 = vpop.permute.xlu0 %3907
      %3909 = vrot.lane.b32.xlu0 %v3892, 120
      %v3910 = vpop.permute.xlu0 %3909
      %3911 = vrot.lane.b32.xlu0 %v3893, 120
      %v3912 = vpop.permute.xlu0 %3911
      %3913 = vrot.lane.b32.xlu0 %v3894, 120
      %v3914 = vpop.permute.xlu0 %3913
      %3915 = vrot.lane.b32.xlu0 %v3895, 120
      %v3916 = vpop.permute.xlu0 %3915
      %3917 = vrot.lane.b32.xlu0 %v3896, 120
      %v3918 = vpop.permute.xlu0 %3917
      %3919 = vrot.lane.b32.xlu0 %v3897, 120
      %v3920 = vpop.permute.xlu0 %3919
      %3921 = vrot.lane.b32.xlu0 %v3898, 120
      %v3922 = vpop.permute.xlu0 %3921
      %3923 = vrot.lane.b32.xlu0 %v3899, 120
      %v3924 = vpop.permute.xlu0 %3923
      %3925 = vrot.lane.b32.xlu0 %v3900, 120
      %v3926 = vpop.permute.xlu0 %3925
      %3927 = vrot.lane.b32.xlu0 %v3901, 120
      %v3928 = vpop.permute.xlu0 %3927
      %3929 = vrot.lane.b32.xlu0 %v3902, 120
      %v3930 = vpop.permute.xlu0 %3929
      %3931 = vrot.lane.b32.xlu0 %v3903, 120
      %v3932 = vpop.permute.xlu0 %3931
      %3933 = vrot.lane.b32.xlu0 %v3904, 120
      %v3934 = vpop.permute.xlu0 %3933
      %3935 = vrot.lane.b32.xlu0 %v3905, 120
      %v3936 = vpop.permute.xlu0 %3935
      %3937 = vrot.lane.b32.xlu0 %v3906, 120
      %v3938 = vpop.permute.xlu0 %3937
      %v3955 = vsel %vm2580, %v2947, %v3012
      %v3956 = vsel %vm2580, %v2949, %v3014
      %v3957 = vsel %vm2580, %v2951, %v3016
      %v3958 = vsel %vm2580, %v2953, %v3018
      %v3959 = vsel %vm2580, %v2955, %v3020
      %v3960 = vsel %vm2580, %v2957, %v3022
      %v3961 = vsel %vm2580, %v2959, %v3024
      %v3962 = vsel %vm2580, %v2961, %v3026
      %v3963 = vsel %vm2580, %v2963, %v3028
      %v3964 = vsel %vm2580, %v2965, %v3030
      %v3965 = vsel %vm2580, %v2967, %v3032
      %v3966 = vsel %vm2580, %v2969, %v3034
      %v3967 = vsel %vm2580, %v2971, %v3036
      %v3968 = vsel %vm2580, %v2973, %v3038
      %v3969 = vsel %vm2580, %v2975, %v3040
      %v3970 = vsel %vm2580, %v2977, %v3042
      %v3971 = vsel %vm2712, %v3955, %v3076
      %v3972 = vsel %vm2712, %v3956, %v3078
      %v3973 = vsel %vm2712, %v3957, %v3080
      %v3974 = vsel %vm2712, %v3958, %v3082
      %v3975 = vsel %vm2712, %v3959, %v3084
      %v3976 = vsel %vm2712, %v3960, %v3086
      %v3977 = vsel %vm2712, %v3961, %v3088
      %v3978 = vsel %vm2712, %v3962, %v3090
      %v3979 = vsel %vm2712, %v3963, %v3092
      %v3980 = vsel %vm2712, %v3964, %v3094
      %v3981 = vsel %vm2712, %v3965, %v3096
      %v3982 = vsel %vm2712, %v3966, %v3098
      %v3983 = vsel %vm2712, %v3967, %v3100
      %v3984 = vsel %vm2712, %v3968, %v3102
      %v3985 = vsel %vm2712, %v3969, %v3104
      %v3986 = vsel %vm2712, %v3970, %v3106
      %vm3987 = vcmask 195584
      %v3988 = vsel %vm3987, %v3971, %v3140
      %v3989 = vsel %vm3987, %v3972, %v3142
      %v3990 = vsel %vm3987, %v3973, %v3144
      %v3991 = vsel %vm3987, %v3974, %v3146
      %v3992 = vsel %vm3987, %v3975, %v3148
      %v3993 = vsel %vm3987, %v3976, %v3150
      %v3994 = vsel %vm3987, %v3977, %v3152
      %v3995 = vsel %vm3987, %v3978, %v3154
      %v3996 = vsel %vm3987, %v3979, %v3156
      %v3997 = vsel %vm3987, %v3980, %v3158
      %v3998 = vsel %vm3987, %v3981, %v3160
      %v3999 = vsel %vm3987, %v3982, %v3162
      %v4000 = vsel %vm3987, %v3983, %v3164
      %v4001 = vsel %vm3987, %v3984, %v3166
      %v4002 = vsel %vm3987, %v3985, %v3168
      %v4003 = vsel %vm3987, %v3986, %v3170
      %vm4004 = vcmask 261120
      %v4005 = vsel %vm4004, %v3988, %v3204
      %v4006 = vsel %vm4004, %v3989, %v3206
      %v4007 = vsel %vm4004, %v3990, %v3208
      %v4008 = vsel %vm4004, %v3991, %v3210
      %v4009 = vsel %vm4004, %v3992, %v3212
      %v4010 = vsel %vm4004, %v3993, %v3214
      %v4011 = vsel %vm4004, %v3994, %v3216
      %v4012 = vsel %vm4004, %v3995, %v3218
      %v4013 = vsel %vm4004, %v3996, %v3220
      %v4014 = vsel %vm4004, %v3997, %v3222
      %v4015 = vsel %vm4004, %v3998, %v3224
      %v4016 = vsel %vm4004, %v3999, %v3226
      %v4017 = vsel %vm4004, %v4000, %v3228
      %v4018 = vsel %vm4004, %v4001, %v3230
      %v4019 = vsel %vm4004, %v4002, %v3232
      %v4020 = vsel %vm4004, %v4003, %v3234
      %vm4021 = vcmask 326656
      %v4022 = vsel %vm4021, %v4005, %v3268
      %v4023 = vsel %vm4021, %v4006, %v3270
      %v4024 = vsel %vm4021, %v4007, %v3272
      %v4025 = vsel %vm4021, %v4008, %v3274
      %v4026 = vsel %vm4021, %v4009, %v3276
      %v4027 = vsel %vm4021, %v4010, %v3278
      %v4028 = vsel %vm4021, %v4011, %v3280
      %v4029 = vsel %vm4021, %v4012, %v3282
      %v4030 = vsel %vm4021, %v4013, %v3284
      %v4031 = vsel %vm4021, %v4014, %v3286
      %v4032 = vsel %vm4021, %v4015, %v3288
      %v4033 = vsel %vm4021, %v4016, %v3290
      %v4034 = vsel %vm4021, %v4017, %v3292
      %v4035 = vsel %vm4021, %v4018, %v3294
      %v4036 = vsel %vm4021, %v4019, %v3296
      %v4037 = vsel %vm4021, %v4020, %v3298
      %vm4038 = vcmask 392192
      %v4039 = vsel %vm4038, %v4022, %v3332
      %v4040 = vsel %vm4038, %v4023, %v3334
      %v4041 = vsel %vm4038, %v4024, %v3336
      %v4042 = vsel %vm4038, %v4025, %v3338
      %v4043 = vsel %vm4038, %v4026, %v3340
      %v4044 = vsel %vm4038, %v4027, %v3342
      %v4045 = vsel %vm4038, %v4028, %v3344
      %v4046 = vsel %vm4038, %v4029, %v3346
      %v4047 = vsel %vm4038, %v4030, %v3348
      %v4048 = vsel %vm4038, %v4031, %v3350
      %v4049 = vsel %vm4038, %v4032, %v3352
      %v4050 = vsel %vm4038, %v4033, %v3354
      %v4051 = vsel %vm4038, %v4034, %v3356
      %v4052 = vsel %vm4038, %v4035, %v3358
      %v4053 = vsel %vm4038, %v4036, %v3360
      %v4054 = vsel %vm4038, %v4037, %v3362
      %vm4055 = vcmask 457728
      %v4056 = vsel %vm4055, %v4039, %v3396
      %v4057 = vsel %vm4055, %v4040, %v3398
      %v4058 = vsel %vm4055, %v4041, %v3400
      %v4059 = vsel %vm4055, %v4042, %v3402
      %v4060 = vsel %vm4055, %v4043, %v3404
      %v4061 = vsel %vm4055, %v4044, %v3406
      %v4062 = vsel %vm4055, %v4045, %v3408
      %v4063 = vsel %vm4055, %v4046, %v3410
      %v4064 = vsel %vm4055, %v4047, %v3412
      %v4065 = vsel %vm4055, %v4048, %v3414
      %v4066 = vsel %vm4055, %v4049, %v3416
      %v4067 = vsel %vm4055, %v4050, %v3418
      %v4068 = vsel %vm4055, %v4051, %v3420
      %v4069 = vsel %vm4055, %v4052, %v3422
      %v4070 = vsel %vm4055, %v4053, %v3424
      %v4071 = vsel %vm4055, %v4054, %v3426
      %vm4072 = vcmask 523264
      %v4073 = vsel %vm4072, %v4056, %v3460
      %v4074 = vsel %vm4072, %v4057, %v3462
      %v4075 = vsel %vm4072, %v4058, %v3464
      %v4076 = vsel %vm4072, %v4059, %v3466
      %v4077 = vsel %vm4072, %v4060, %v3468
      %v4078 = vsel %vm4072, %v4061, %v3470
      %v4079 = vsel %vm4072, %v4062, %v3472
      %v4080 = vsel %vm4072, %v4063, %v3474
      %v4081 = vsel %vm4072, %v4064, %v3476
      %v4082 = vsel %vm4072, %v4065, %v3478
      %v4083 = vsel %vm4072, %v4066, %v3480
      %v4084 = vsel %vm4072, %v4067, %v3482
      %v4085 = vsel %vm4072, %v4068, %v3484
      %v4086 = vsel %vm4072, %v4069, %v3486
      %v4087 = vsel %vm4072, %v4070, %v3488
      %v4088 = vsel %vm4072, %v4071, %v3490
      %vm4089 = vcmask 588800
      %v4090 = vsel %vm4089, %v4073, %v3524
      %v4091 = vsel %vm4089, %v4074, %v3526
      %v4092 = vsel %vm4089, %v4075, %v3528
      %v4093 = vsel %vm4089, %v4076, %v3530
      %v4094 = vsel %vm4089, %v4077, %v3532
      %v4095 = vsel %vm4089, %v4078, %v3534
      %v4096 = vsel %vm4089, %v4079, %v3536
      %v4097 = vsel %vm4089, %v4080, %v3538
      %v4098 = vsel %vm4089, %v4081, %v3540
      %v4099 = vsel %vm4089, %v4082, %v3542
      %v4100 = vsel %vm4089, %v4083, %v3544
      %v4101 = vsel %vm4089, %v4084, %v3546
      %v4102 = vsel %vm4089, %v4085, %v3548
      %v4103 = vsel %vm4089, %v4086, %v3550
      %v4104 = vsel %vm4089, %v4087, %v3552
      %v4105 = vsel %vm4089, %v4088, %v3554
      %vm4106 = vcmask 654336
      %v4107 = vsel %vm4106, %v4090, %v3588
      %v4108 = vsel %vm4106, %v4091, %v3590
      %v4109 = vsel %vm4106, %v4092, %v3592
      %v4110 = vsel %vm4106, %v4093, %v3594
      %v4111 = vsel %vm4106, %v4094, %v3596
      %v4112 = vsel %vm4106, %v4095, %v3598
      %v4113 = vsel %vm4106, %v4096, %v3600
      %v4114 = vsel %vm4106, %v4097, %v3602
      %v4115 = vsel %vm4106, %v4098, %v3604
      %v4116 = vsel %vm4106, %v4099, %v3606
      %v4117 = vsel %vm4106, %v4100, %v3608
      %v4118 = vsel %vm4106, %v4101, %v3610
      %v4119 = vsel %vm4106, %v4102, %v3612
      %v4120 = vsel %vm4106, %v4103, %v3614
      %v4121 = vsel %vm4106, %v4104, %v3616
      %v4122 = vsel %vm4106, %v4105, %v3618
      %vm4123 = vcmask 719872
      %v4124 = vsel %vm4123, %v4107, %v3652
      %v4125 = vsel %vm4123, %v4108, %v3654
      %v4126 = vsel %vm4123, %v4109, %v3656
      %v4127 = vsel %vm4123, %v4110, %v3658
      %v4128 = vsel %vm4123, %v4111, %v3660
      %v4129 = vsel %vm4123, %v4112, %v3662
      %v4130 = vsel %vm4123, %v4113, %v3664
      %v4131 = vsel %vm4123, %v4114, %v3666
      %v4132 = vsel %vm4123, %v4115, %v3668
      %v4133 = vsel %vm4123, %v4116, %v3670
      %v4134 = vsel %vm4123, %v4117, %v3672
      %v4135 = vsel %vm4123, %v4118, %v3674
      %v4136 = vsel %vm4123, %v4119, %v3676
      %v4137 = vsel %vm4123, %v4120, %v3678
      %v4138 = vsel %vm4123, %v4121, %v3680
      %v4139 = vsel %vm4123, %v4122, %v3682
      %vm4140 = vcmask 785408
      %v4141 = vsel %vm4140, %v4124, %v3716
      %v4142 = vsel %vm4140, %v4125, %v3718
      %v4143 = vsel %vm4140, %v4126, %v3720
      %v4144 = vsel %vm4140, %v4127, %v3722
      %v4145 = vsel %vm4140, %v4128, %v3724
      %v4146 = vsel %vm4140, %v4129, %v3726
      %v4147 = vsel %vm4140, %v4130, %v3728
      %v4148 = vsel %vm4140, %v4131, %v3730
      %v4149 = vsel %vm4140, %v4132, %v3732
      %v4150 = vsel %vm4140, %v4133, %v3734
      %v4151 = vsel %vm4140, %v4134, %v3736
      %v4152 = vsel %vm4140, %v4135, %v3738
      %v4153 = vsel %vm4140, %v4136, %v3740
      %v4154 = vsel %vm4140, %v4137, %v3742
      %v4155 = vsel %vm4140, %v4138, %v3744
      %v4156 = vsel %vm4140, %v4139, %v3746
      %vm4157 = vcmask 850944
      %v4158 = vsel %vm4157, %v4141, %v3780
      %v4159 = vsel %vm4157, %v4142, %v3782
      %v4160 = vsel %vm4157, %v4143, %v3784
      %v4161 = vsel %vm4157, %v4144, %v3786
      %v4162 = vsel %vm4157, %v4145, %v3788
      %v4163 = vsel %vm4157, %v4146, %v3790
      %v4164 = vsel %vm4157, %v4147, %v3792
      %v4165 = vsel %vm4157, %v4148, %v3794
      %v4166 = vsel %vm4157, %v4149, %v3796
      %v4167 = vsel %vm4157, %v4150, %v3798
      %v4168 = vsel %vm4157, %v4151, %v3800
      %v4169 = vsel %vm4157, %v4152, %v3802
      %v4170 = vsel %vm4157, %v4153, %v3804
      %v4171 = vsel %vm4157, %v4154, %v3806
      %v4172 = vsel %vm4157, %v4155, %v3808
      %v4173 = vsel %vm4157, %v4156, %v3810
      %vm4174 = vcmask 916480
      %v4175 = vsel %vm4174, %v4158, %v3844
      %v4176 = vsel %vm4174, %v4159, %v3846
      %v4177 = vsel %vm4174, %v4160, %v3848
      %v4178 = vsel %vm4174, %v4161, %v3850
      %v4179 = vsel %vm4174, %v4162, %v3852
      %v4180 = vsel %vm4174, %v4163, %v3854
      %v4181 = vsel %vm4174, %v4164, %v3856
      %v4182 = vsel %vm4174, %v4165, %v3858
      %v4183 = vsel %vm4174, %v4166, %v3860
      %v4184 = vsel %vm4174, %v4167, %v3862
      %v4185 = vsel %vm4174, %v4168, %v3864
      %v4186 = vsel %vm4174, %v4169, %v3866
      %v4187 = vsel %vm4174, %v4170, %v3868
      %v4188 = vsel %vm4174, %v4171, %v3870
      %v4189 = vsel %vm4174, %v4172, %v3872
      %v4190 = vsel %vm4174, %v4173, %v3874
      %vm4191 = vcmask 982016
      %v4192 = vsel %vm4191, %v4175, %v3908
      %v4193 = vsel %vm4191, %v4176, %v3910
      %v4194 = vsel %vm4191, %v4177, %v3912
      %v4195 = vsel %vm4191, %v4178, %v3914
      %v4196 = vsel %vm4191, %v4179, %v3916
      %v4197 = vsel %vm4191, %v4180, %v3918
      %v4198 = vsel %vm4191, %v4181, %v3920
      %v4199 = vsel %vm4191, %v4182, %v3922
      %v4200 = vsel %vm4191, %v4183, %v3924
      %v4201 = vsel %vm4191, %v4184, %v3926
      %v4202 = vsel %vm4191, %v4185, %v3928
      %v4203 = vsel %vm4191, %v4186, %v3930
      %v4204 = vsel %vm4191, %v4187, %v3932
      %v4205 = vsel %vm4191, %v4188, %v3934
      %v4206 = vsel %vm4191, %v4189, %v3936
      %v4207 = vsel %vm4191, %v4190, %v3938
      %v4208 = vpack.c.bf16 %v4192, %v4192
      %v4209 = vpack.c.bf16 %v4193, %v4193
      %v4210 = vpack.c.bf16 %v4194, %v4194
      %v4211 = vpack.c.bf16 %v4195, %v4195
      %v4212 = vpack.c.bf16 %v4196, %v4196
      %v4213 = vpack.c.bf16 %v4197, %v4197
      %v4214 = vpack.c.bf16 %v4198, %v4198
      %v4215 = vpack.c.bf16 %v4199, %v4199
      %v4216 = vpack.c.bf16 %v4200, %v4200
      %v4217 = vpack.c.bf16 %v4201, %v4201
      %v4218 = vpack.c.bf16 %v4202, %v4202
      %v4219 = vpack.c.bf16 %v4203, %v4203
      %v4220 = vpack.c.bf16 %v4204, %v4204
      %v4221 = vpack.c.bf16 %v4205, %v4205
      %v4222 = vpack.c.bf16 %v4206, %v4206
      %v4223 = vpack.c.bf16 %v4207, %v4207
      %vm4224 = vcmask 1040384
      %vm4225 = vsmask.f32 256
      %vm4226 = vmand %vm4224, %vm4225
      %v4227 = vld [vmem:[%s163] sm:$0x1]
      %v4228 = vsel %vm4226, %v4208, %v4227
      %4229 = vst [vmem:[%s163] sm:$0x1] %v4228
      %v4230 = vld [vmem:[%s163 + $0x1] sm:$0x1]
      %v4231 = vsel %vm4226, %v4209, %v4230
      %4232 = vst [vmem:[%s163 + $0x1] sm:$0x1] %v4231
      %v4233 = vld [vmem:[%s163 + $0x2] sm:$0x1]
      %v4234 = vsel %vm4226, %v4210, %v4233
      %4235 = vst [vmem:[%s163 + $0x2] sm:$0x1] %v4234
      %v4236 = vld [vmem:[%s163 + $0x3] sm:$0x1]
      %v4237 = vsel %vm4226, %v4211, %v4236
      %4238 = vst [vmem:[%s163 + $0x3] sm:$0x1] %v4237
      %v4239 = vld [vmem:[%s163 + $0x4] sm:$0x1]
      %v4240 = vsel %vm4226, %v4212, %v4239
      %4241 = vst [vmem:[%s163 + $0x4] sm:$0x1] %v4240
      %v4242 = vld [vmem:[%s163 + $0x5] sm:$0x1]
      %v4243 = vsel %vm4226, %v4213, %v4242
      %4244 = vst [vmem:[%s163 + $0x5] sm:$0x1] %v4243
      %v4245 = vld [vmem:[%s163 + $0x6] sm:$0x1]
      %v4246 = vsel %vm4226, %v4214, %v4245
      %4247 = vst [vmem:[%s163 + $0x6] sm:$0x1] %v4246
      %v4248 = vld [vmem:[%s163 + $0x7] sm:$0x1]
      %v4249 = vsel %vm4226, %v4215, %v4248
      %4250 = vst [vmem:[%s163 + $0x7] sm:$0x1] %v4249
      %v4251 = vld [vmem:[%s163 + $0x8] sm:$0x1]
      %v4252 = vsel %vm4226, %v4216, %v4251
      %4253 = vst [vmem:[%s163 + $0x8] sm:$0x1] %v4252
      %v4254 = vld [vmem:[%s163 + $0x9] sm:$0x1]
      %v4255 = vsel %vm4226, %v4217, %v4254
      %4256 = vst [vmem:[%s163 + $0x9] sm:$0x1] %v4255
      %v4257 = vld [vmem:[%s163 + $0xa] sm:$0x1]
      %v4258 = vsel %vm4226, %v4218, %v4257
      %4259 = vst [vmem:[%s163 + $0xa] sm:$0x1] %v4258
      %v4260 = vld [vmem:[%s163 + $0xb] sm:$0x1]
      %v4261 = vsel %vm4226, %v4219, %v4260
      %4262 = vst [vmem:[%s163 + $0xb] sm:$0x1] %v4261
      %v4263 = vld [vmem:[%s163 + $0xc] sm:$0x1]
      %v4264 = vsel %vm4226, %v4220, %v4263
      %4265 = vst [vmem:[%s163 + $0xc] sm:$0x1] %v4264
      %v4266 = vld [vmem:[%s163 + $0xd] sm:$0x1]
      %v4267 = vsel %vm4226, %v4221, %v4266
      %4268 = vst [vmem:[%s163 + $0xd] sm:$0x1] %v4267
      %v4269 = vld [vmem:[%s163 + $0xe] sm:$0x1]
      %v4270 = vsel %vm4226, %v4222, %v4269
      %4271 = vst [vmem:[%s163 + $0xe] sm:$0x1] %v4270
      %v4272 = vld [vmem:[%s163 + $0xf] sm:$0x1]
      %v4273 = vsel %vm4226, %v4223, %v4272
      %4274 = vst [vmem:[%s163 + $0xf] sm:$0x1] %v4273
      %s4275 = smul.u32 16, %s18
      %p4276 = scmp.lt.s32.totalorder %s17, 1
      %s4277 = scalar_select %p4276, %s17, 1
      %p4278 = scmp.lt.s32.totalorder %s4275, 15
      %s4279 = scalar_select %p4278, %s4275, 15
      %s4280 = smul.addr %s4277, 16
      %s4281 = sadd.s32 %s4279, %s4280
      %s4282 = scalar_lea.vmem %s2, %s4281
      // Predicated region
      $region29: #{discriminator_forward.5} parent=27 // pred_check
        %p4283 = pneg %p92
      $region30: #{discriminator_forward.5} parent=27 // pred_check_branch
        %4285 = sbr.rel (%p4283) target = $region32
      $region31: #{discriminator_forward.5} parent=27 // pred_region
        %s4286 = smul.u32 16, %s18
      $region32: #{discriminator_forward.5} parent=27 // pred_fallthru
        _
    $region28: #{discriminator_forward.5} parent=5 // pred_fallthru
      _
    %p4287 = scmp.le.s32.totalorder 2, %s8
    // Predicated region
    $region33: #{discriminator_forward.5} parent=5 // pred_check
      %p4288 = pneg %p4287
    $region34: #{discriminator_forward.5} parent=5 // pred_check_branch
      %4290 = sbr.rel (%p4288) target = $region36
    $region35: #{discriminator_forward.5} parent=5 // pred_region
      %s4291 = ssub.s32 %s8, 2
      // Predicated region
      $region37: #{discriminator_forward.5} parent=35 // pred_check
        %p4292 = pneg %p98
      $region38: #{discriminator_forward.5} parent=35 // pred_check_branch
        %4294 = sbr.rel (%p4292) target = $region40
      $region39: #{discriminator_forward.5} parent=35 // pred_region
        %s4295 = smul.u32 16, %s20
        %p4296 = scmp.lt.s32.totalorder %s19, 1
        %s4297 = scalar_select %p4296, %s19, 1
        %p4298 = scmp.lt.s32.totalorder %s4295, 15
        %s4299 = scalar_select %p4298, %s4295, 15
        %s4300 = smul.addr %s4297, 16
        %s4301 = sadd.s32 %s4299, %s4300
        %s4302 = scalar_lea.vmem %s2, %s4301
      $region40: #{discriminator_forward.5} parent=35 // pred_fallthru
        _
    $region36: #{discriminator_forward.5} parent=5 // pred_fallthru
      _
  $region6: #{discriminator_forward.5} parent=0 // loop_footer
    %s12 = sadd.s32 1, %s8
  $region7: #{discriminator_forward.5} parent=0 // loop_footer_branch
    %7 = sbr.rel target = $region3
  $region8: #{discriminator_forward.5} parent=0 // loop_exit
    _

// kernel: discriminator_forward.7
$region0: #{discriminator_forward.7}
  #allocation0 [shape = 'u32[]', space=smem, size = 0x4, offset = 0x4, fixed_abs, tag = 'smem constant byte address 0x4 - core index']
  #allocation1 [shape = 'u32[72,128]{1,0:T(1,128)}', space=vmem, size = 0x9000, scoped, tag = 'internal scratch']
  %s0 = inlined_call_operand.vmem [shape: bf16[2,16,144], index: 0, kind: input, shape index: {}]
  %s1 = inlined_call_operand.vmem [shape: bf16[144,32], index: 1, kind: input, shape index: {}]
  %s2 = inlined_call_operand.vmem [shape: bf16[2,16,32], index: 2, kind: output, shape index: {0}]
  %s3 = inlined_call_operand.vmem [shape: f32[2,2,32], index: 3, kind: output, shape index: {1}]
  %4 = xla_tuple %s2, %s3
  %s5 = sld [smem:[#allocation0]]
  $region49: #{discriminator_forward.7} parent=0
    _
  %s7 = ssub.s32 1, %s5
  %s8 = scalar_select 0, %s7, %s5
  loop: start=0, step=1, limit=4
  $region2: #{discriminator_forward.7} parent=0 // loop_pre_header
    _
  $region3: #{discriminator_forward.7} parent=0 // loop_header
    %s10 = sphi 0, %s14
    %p11 = scmp.ge.s32.totalorder %s10, 4
    %s20 = sphi 0, %s22
    %s23 = sphi 0, %s20
    %s24 = sphi 0, %s23
    %s40 = sphi 0, %s24
    %s44 = sphi 0, %s44
    %s46 = sphi 0, %s44
    %s47 = sphi 0, %s46
    %s61 = sphi 0, %s47
    %s67 = sphi 0, %s69
    %s70 = sphi 0, %s67
    %s71 = sphi 0, %s70
    %s87 = sphi 0, %s71
    %s93 = sphi 0, %s95
    %s96 = sphi 0, %s93
    %s97 = sphi 0, %s96
    %s113 = sphi 0, %s97
  $region4: #{discriminator_forward.7} parent=0 // loop_header_branch
    %13 = sbr.rel (%p11) target = $region8
  $region5: #{discriminator_forward.7} parent=0 // loop_body
    %s15 = ssub.s32 %s10, 1
    %s16 = ssub.s32 %s10, 2
    %s17 = sadd.s32 %s10, 1
    %s18 = ssub.s32 %s10, %s17
    %p19 = scmp.eq.s32.totalorder %s18, 0
    %s21 = sadd.s32 %s20, 1
    %s22 = scalar_select %p19, %s20, %s21
    %p25 = pneg %p19
    %p26 = scmp.eq.s32.totalorder %s10, 1
    %p27 = por %p25, %p26
    %p28 = scmp.ne.s32.totalorder %s20, %s23
    %p29 = scmp.eq.s32.totalorder %s10, 0
    %p30 = por %p28, %p29
    %p31 = scmp.ne.s32.totalorder %s20, %s23
    %p32 = scmp.eq.s32.totalorder %s15, 1
    %p33 = por %p31, %p32
    %p34 = scmp.ne.s32.totalorder %s23, %s24
    %p35 = scmp.eq.s32.totalorder %s15, 0
    %p36 = por %p34, %p35
    %p37 = scmp.ne.s32.totalorder %s23, %s24
    %p38 = scmp.eq.s32.totalorder %s16, 1
    %p39 = por %p37, %p38
    %p41 = scmp.ne.s32.totalorder %s24, %s40
    %p42 = scmp.eq.s32.totalorder %s16, 0
    %p43 = por %p41, %p42
    %s45 = sadd.s32 %s44, 1
    %p48 = scmp.eq.s32.totalorder %s10, 1
    %p49 = scmp.ne.s32.totalorder %s44, %s46
    %p50 = scmp.eq.s32.totalorder %s10, 0
    %p51 = por %p49, %p50
    %p52 = scmp.ne.s32.totalorder %s44, %s46
    %p53 = scmp.eq.s32.totalorder %s15, 1
    %p54 = por %p52, %p53
    %p55 = scmp.ne.s32.totalorder %s46, %s47
    %p56 = scmp.eq.s32.totalorder %s15, 0
    %p57 = por %p55, %p56
    %p58 = scmp.ne.s32.totalorder %s46, %s47
    %p59 = scmp.eq.s32.totalorder %s16, 1
    %p60 = por %p58, %p59
    %p62 = scmp.ne.s32.totalorder %s47, %s61
    %p63 = scmp.eq.s32.totalorder %s16, 0
    %p64 = por %p62, %p63
    %s65 = ssub.s32 %s10, %s17
    %p66 = scmp.eq.s32.totalorder %s65, 0
    %s68 = sadd.s32 %s67, 1
    %s69 = scalar_select %p66, %s67, %s68
    %p72 = pneg %p66
    %p73 = scmp.eq.s32.totalorder %s10, 1
    %p74 = por %p72, %p73
    %p75 = scmp.ne.s32.totalorder %s67, %s70
    %p76 = scmp.eq.s32.totalorder %s10, 0
    %p77 = por %p75, %p76
    %p78 = scmp.ne.s32.totalorder %s67, %s70
    %p79 = scmp.eq.s32.totalorder %s15, 1
    %p80 = por %p78, %p79
    %p81 = scmp.ne.s32.totalorder %s70, %s71
    %p82 = scmp.eq.s32.totalorder %s15, 0
    %p83 = por %p81, %p82
    %p84 = scmp.ne.s32.totalorder %s70, %s71
    %p85 = scmp.eq.s32.totalorder %s16, 1
    %p86 = por %p84, %p85
    %p88 = scmp.ne.s32.totalorder %s71, %s87
    %p89 = scmp.eq.s32.totalorder %s16, 0
    %p90 = por %p88, %p89
    %s91 = ssub.s32 %s10, %s17
    %p92 = scmp.eq.s32.totalorder %s91, 0
    %s94 = sadd.s32 %s93, 1
    %s95 = scalar_select %p92, %s93, %s94
    %p98 = pneg %p92
    %p99 = scmp.eq.s32.totalorder %s10, 1
    %p100 = por %p98, %p99
    %p101 = scmp.ne.s32.totalorder %s93, %s96
    %p102 = scmp.eq.s32.totalorder %s10, 0
    %p103 = por %p101, %p102
    %p104 = scmp.ne.s32.totalorder %s93, %s96
    %p105 = scmp.eq.s32.totalorder %s15, 1
    %p106 = por %p104, %p105
    %p107 = scmp.ne.s32.totalorder %s96, %s97
    %p108 = scmp.eq.s32.totalorder %s15, 0
    %p109 = por %p107, %p108
    %p110 = scmp.ne.s32.totalorder %s96, %s97
    %p111 = scmp.eq.s32.totalorder %s16, 1
    %p112 = por %p110, %p111
    %p114 = scmp.ne.s32.totalorder %s97, %s113
    %p115 = scmp.eq.s32.totalorder %s16, 0
    %p116 = por %p114, %p115
    %p117 = scmp.le.s32.totalorder 1, %s10
    %p118 = scmp.lt.s32.totalorder %s10, 3
    %p119 = pnand %p117, %p118
    %p120 = pneg %p119
    // Predicated region
    $region9: #{discriminator_forward.7} parent=5 // pred_check
      _
    $region10: #{discriminator_forward.7} parent=5 // pred_check_branch
      %122 = sbr.rel (%p119) target = $region12
    $region11: #{discriminator_forward.7} parent=5 // pred_region
      %s123 = ssub.s32 %s10, 1
      // Predicated region
      $region13: #{discriminator_forward.7} parent=11 // pred_check
        %p124 = pneg %p57
      $region14: #{discriminator_forward.7} parent=11 // pred_check_branch
        %126 = sbr.rel (%p124) target = $region16
      $region15: #{discriminator_forward.7} parent=11 // pred_region
        _
      $region16: #{discriminator_forward.7} parent=11 // pred_fallthru
        _
    $region12: #{discriminator_forward.7} parent=5 // pred_fallthru
      _
    %p127 = scmp.lt.s32.totalorder %s10, 2
    // Predicated region
    $region17: #{discriminator_forward.7} parent=5 // pred_check
      %p128 = pneg %p127
    $region18: #{discriminator_forward.7} parent=5 // pred_check_branch
      %130 = sbr.rel (%p128) target = $region20
    $region19: #{discriminator_forward.7} parent=5 // pred_region
      // Predicated region
      $region21: #{discriminator_forward.7} parent=19 // pred_check
        %p131 = pneg %p30
      $region22: #{discriminator_forward.7} parent=19 // pred_check_branch
        %133 = sbr.rel (%p131) target = $region24
      $region23: #{discriminator_forward.7} parent=19 // pred_region
        %p134 = scmp.lt.s32.totalorder %s10, 1
        %s135 = scalar_select %p134, %s10, 1
        %s136 = smul.addr %s135, 4
        %s137 = smul.addr %s136, 4
        %s138 = scalar_lea.vmem %s0, %s137
      $region24: #{discriminator_forward.7} parent=19 // pred_fallthru
        _
    $region20: #{discriminator_forward.7} parent=5 // pred_fallthru
      _
    %p139 = scmp.le.s32.totalorder 1, %s10
    %p140 = scmp.lt.s32.totalorder %s10, 3
    %p141 = pnand %p139, %p140
    %p142 = pneg %p141
    // Predicated region
    $region25: #{discriminator_forward.7} parent=5 // pred_check
      _
    $region26: #{discriminator_forward.7} parent=5 // pred_check_branch
      %144 = sbr.rel (%p141) target = $region28
    $region27: #{discriminator_forward.7} parent=5 // pred_region
      %s145 = ssub.s32 %s10, 1
      %p146 = scmp.lt.s32.totalorder %s15, 1
      %s147 = scalar_select %p146, %s15, 1
      %s148 = smul.addr %s147, 4
      %s149 = smul.addr %s148, 4
      %s150 = scalar_lea.vmem %s0, %s149
      %p151 = pneg %p36
      %p152 = pneg %p33
      %p153 = pneg %p57
      %p154 = pneg %p54
      %p155 = pneg %p83
      %p156 = pneg %p80
      %p157 = scmp.lt.s32.totalorder %s15, 1
      %s158 = scalar_select %p157, %s15, 1
      %s159 = smul.addr %s158, 2
      %s160 = smul.addr %s159, 4
      %s161 = scalar_lea.vmem %s2, %s160
      %p162 = pneg %p109
      %p163 = pneg %p106
      %p164 = scmp.lt.s32.totalorder %s15, 1
      %s165 = scalar_select %p164, %s15, 1
      %s166 = smul.addr %s165, 2
      %s167 = scalar_lea.vmem %s3, %s166
      %p168 = scmp.lt.s32.totalorder %s15, 1
      %s169 = scalar_select %p168, %s15, 1
      %s170 = smul.addr %s169, 4
      %s171 = smul.addr %s170, 4
      %s172 = scalar_lea.vmem %s0, %s171
      %p173 = scmp.lt.s32.totalorder %s15, 1
      %s174 = scalar_select %p173, %s15, 1
      %s175 = smul.addr %s174, 2
      %s176 = smul.addr %s175, 4
      %s177 = scalar_lea.vmem %s2, %s176
      %p178 = scmp.lt.s32.totalorder %s15, 1
      %s179 = scalar_select %p178, %s15, 1
      %s180 = smul.addr %s179, 2
      %s181 = scalar_lea.vmem %s3, %s180
      %v183 = vld [vmem:[%s172] sm:$0xff]
      %v184 = vld [vmem:[%s172 + $0x8] sm:$0xff]
      %v185 = vld [vmem:[%s1] sm:$0xf]
      %v186 = vld [vmem:[%s1 + $0x4] sm:$0xf]
      %v187 = vld [vmem:[%s1 + $0x8] sm:$0xf]
      %v188 = vld [vmem:[%s1 + $0xc] sm:$0xf]
      %v189 = vld [vmem:[%s1 + $0x10] sm:$0xf]
      %v190 = vld [vmem:[%s1 + $0x14] sm:$0xf]
      %v191 = vld [vmem:[%s1 + $0x18] sm:$0xf]
      %v192 = vld [vmem:[%s1 + $0x1c] sm:$0xf]
      %v193 = vld [vmem:[%s1 + $0x20] sm:$0xf]
      %v194 = vld [vmem:[%s1 + $0x24] sm:$0xf]
      %v195 = vld [vmem:[%s1 + $0x28] sm:$0xf]
      %v196 = vld [vmem:[%s1 + $0x2c] sm:$0xf]
      %v197 = vld [vmem:[%s1 + $0x30] sm:$0xf]
      %v198 = vld [vmem:[%s1 + $0x34] sm:$0xf]
      %v199 = vld [vmem:[%s1 + $0x38] sm:$0xf]
      %v200 = vld [vmem:[%s1 + $0x3c] sm:$0xf]
      %v201 = vld [vmem:[%s1 + $0x40] sm:$0xf]
      %v202 = vld [vmem:[%s1 + $0x44] sm:$0xf]
      %v205 = vunpack.c.l.b16 %v183
      %v206 = vunpack.c.h.b16 %v183
      %v207 = vunpack.c.l.b16 %v184
      %v208 = vunpack.c.h.b16 %v184
      %v209 = vpack.c.b16 %v207, %v205
      %v210 = vpack.c.b16 %v208, %v206
      %v230 = vunpack.c.l.b16 %v185
      %v231 = vunpack.c.l.b16 %v186
      %v232 = vunpack.c.l.b16 %v187
      %v233 = vunpack.c.l.b16 %v188
      %v234 = vunpack.c.l.b16 %v189
      %v235 = vunpack.c.l.b16 %v190
      %v236 = vunpack.c.l.b16 %v191
      %v237 = vunpack.c.l.b16 %v192
      %v238 = vunpack.c.l.b16 %v193
      %v239 = vunpack.c.l.b16 %v194
      %v240 = vunpack.c.l.b16 %v195
      %v241 = vunpack.c.l.b16 %v196
      %v242 = vunpack.c.l.b16 %v197
      %v243 = vunpack.c.l.b16 %v198
      %v244 = vunpack.c.l.b16 %v199
      %v245 = vunpack.c.l.b16 %v200
      %v246 = vunpack.c.l.b16 %v201
      %v247 = vunpack.c.l.b16 %v202
      %v248 = vpack.c.b16 %v231, %v230
      %v249 = vpack.c.b16 %v233, %v232
      %v250 = vpack.c.b16 %v235, %v234
      %v251 = vpack.c.b16 %v237, %v236
      %v252 = vpack.c.b16 %v239, %v238
      %v253 = vpack.c.b16 %v241, %v240
      %v254 = vpack.c.b16 %v243, %v242
      %v255 = vpack.c.b16 %v245, %v244
      %v256 = vpack.c.b16 %v247, %v246
      %vm266 = vcmask 130048
      %v268 = vsel %vm266, %v210, 0
      %270 = vmatpush.bf16.msra.mxu0 %v255
      %271 = vmatpush.bf16.msra.mxu0 %v254
      %272 = vmatpush.bf16.msra.mxu0 %v253
      %273 = vmatpush.bf16.msra.mxu0 %v252
      %274 = vmatpush.bf16.msra.mxu0 %v251
      %275 = vmatpush.bf16.msra.mxu0 %v250
      %276 = vmatpush.bf16.msra.mxu0 %v249
      %277 = vmatpush.bf16.msra.mxu0 %v248
      %278 = vmatmul.bf16.gmra.mxu0 %v209
      %v279 = vpop.f32.mrf.mxu0
      %v280 = vadd.f32 0.0, %v279
      %v281 = vpop.f32.mrf.mxu0
      %v282 = vadd.f32 0.0, %v281
      %283 = vdwg.mxu0
      %284 = vmatpush.bf16.msra.mxu0 0
      %285 = vmatpush.bf16.msra.mxu0 0
      %286 = vmatpush.bf16.msra.mxu0 0
      %287 = vmatpush.bf16.msra.mxu0 0
      %288 = vmatpush.bf16.msra.mxu0 0
      %289 = vmatpush.bf16.msra.mxu0 0
      %290 = vmatpush.bf16.msra.mxu0 0
      %291 = vmatpush.bf16.msra.mxu0 %v256
      %292 = vmatmul.bf16.gmra.mxu0 %v268
      %v293 = vpop.f32.mrf.mxu0
      %v294 = vadd.f32 %v280, %v293
      %v295 = vpop.f32.mrf.mxu0
      %v296 = vadd.f32 %v282, %v295
      %297 = vdwg.mxu0
      %vm298 = vcmask 261120
      %v299 = vsel %vm298, %v294, 0.0
      %v300 = vsel %vm298, %v296, 0.0
      %v301 = vadd.f32 %v299, %v300
      %v302 = vrot.slane %v301, 4
      %v303 = vadd.f32 %v301, %v302
      %v304 = vrot.slane %v303, 2
      %v305 = vadd.f32 %v303, %v304
      %v306 = vrot.slane %v305, 1
      %v307 = vadd.f32 %v305, %v306
      %vm308 = vcmask 253952
      %309 = vst.msk [vmem:[%s181] sm:$0x1] %vm308, %v307
      %v310 = vmul.f32 %v294, %v294
      %v311 = vmul.f32 %v296, %v296
      %v312 = vsel %vm298, %v310, 0.0
      %v313 = vsel %vm298, %v311, 0.0
      %v314 = vadd.f32 %v312, %v313
      %v315 = vrot.slane %v314, 4
      %v316 = vadd.f32 %v314, %v315
      %v317 = vrot.slane %v316, 2
      %v318 = vadd.f32 %v316, %v317
      %v319 = vrot.slane %v318, 1
      %v320 = vadd.f32 %v318, %v319
      %321 = vst.msk [vmem:[%s181 + $0x1] sm:$0x1] %vm308, %v320
      %v322 = vpack.c.bf16 %v294, %v294
      %v323 = vpack.c.bf16 %v296, %v296
      %vm324 = vcmask 257024
      %325 = vst.msk [vmem:[%s177] sm:$0xf] %vm324, %v322
      %326 = vst.msk [vmem:[%s177 + $0x4] sm:$0xf] %vm324, %v323
      %p327 = scmp.lt.s32.totalorder %s15, 1
      %s328 = scalar_select %p327, %s15, 1
      %s329 = smul.addr %s328, 2
      %s330 = smul.addr %s329, 4
      %s331 = scalar_lea.vmem %s2, %s330
      %p332 = scmp.lt.s32.totalorder %s15, 1
      %s333 = scalar_select %p332, %s15, 1
      %s334 = smul.addr %s333, 2
      %s335 = scalar_lea.vmem %s3, %s334
      // Predicated region
      $region29: #{discriminator_forward.7} parent=27 // pred_check
        %p336 = pneg %p80
      $region30: #{discriminator_forward.7} parent=27 // pred_check_branch
        %338 = sbr.rel (%p336) target = $region32
      $region31: #{discriminator_forward.7} parent=27 // pred_region
        _
      $region32: #{discriminator_forward.7} parent=27 // pred_fallthru
        _
      // Predicated region
      $region33: #{discriminator_forward.7} parent=27 // pred_check
        %p339 = pneg %p106
      $region34: #{discriminator_forward.7} parent=27 // pred_check_branch
        %341 = sbr.rel (%p339) target = $region36
      $region35: #{discriminator_forward.7} parent=27 // pred_region
        _
      $region36: #{discriminator_forward.7} parent=27 // pred_fallthru
        _
    $region28: #{discriminator_forward.7} parent=5 // pred_fallthru
      _
    %p342 = scmp.le.s32.totalorder 2, %s10
    // Predicated region
    $region37: #{discriminator_forward.7} parent=5 // pred_check
      %p343 = pneg %p342
    $region38: #{discriminator_forward.7} parent=5 // pred_check_branch
      %345 = sbr.rel (%p343) target = $region40
    $region39: #{discriminator_forward.7} parent=5 // pred_region
      %s346 = ssub.s32 %s10, 2
      // Predicated region
      $region41: #{discriminator_forward.7} parent=39 // pred_check
        %p347 = pneg %p86
      $region42: #{discriminator_forward.7} parent=39 // pred_check_branch
        %349 = sbr.rel (%p347) target = $region44
      $region43: #{discriminator_forward.7} parent=39 // pred_region
        %p350 = scmp.lt.s32.totalorder %s16, 1
        %s351 = scalar_select %p350, %s16, 1
        %s352 = smul.addr %s351, 2
        %s353 = smul.addr %s352, 4
        %s354 = scalar_lea.vmem %s2, %s353
      $region44: #{discriminator_forward.7} parent=39 // pred_fallthru
        _
      // Predicated region
      $region45: #{discriminator_forward.7} parent=39 // pred_check
        %p355 = pneg %p112
      $region46: #{discriminator_forward.7} parent=39 // pred_check_branch
        %357 = sbr.rel (%p355) target = $region48
      $region47: #{discriminator_forward.7} parent=39 // pred_region
        %p358 = scmp.lt.s32.totalorder %s16, 1
        %s359 = scalar_select %p358, %s16, 1
        %s360 = smul.addr %s359, 2
        %s361 = scalar_lea.vmem %s3, %s360
      $region48: #{discriminator_forward.7} parent=39 // pred_fallthru
        _
    $region40: #{discriminator_forward.7} parent=5 // pred_fallthru
      _
  $region6: #{discriminator_forward.7} parent=0 // loop_footer
    %s14 = sadd.s32 1, %s10
  $region7: #{discriminator_forward.7} parent=0 // loop_footer_branch
    %9 = sbr.rel target = $region3
  $region8: #{discriminator_forward.7} parent=0 // loop_exit
    _

// kernel: discriminator_forward.8
$region0: #{discriminator_forward.8}
  #allocation0 [shape = 'u32[]', space=smem, size = 0x4, offset = 0x4, fixed_abs, tag = 'smem constant byte address 0x4 - core index']
  #allocation1 [shape = 'u32[72,128]{1,0:T(1,128)}', space=vmem, size = 0x9000, scoped, tag = 'internal scratch']
  %s0 = inlined_call_operand.vmem [shape: bf16[2,4,288], index: 0, kind: input, shape index: {}]
  %s1 = inlined_call_operand.vmem [shape: bf16[288,8], index: 1, kind: input, shape index: {}]
  %s2 = inlined_call_operand.vmem [shape: bf16[2,4,8], index: 2, kind: output, shape index: {0}]
  %s3 = inlined_call_operand.vmem [shape: f32[2,2,8], index: 3, kind: output, shape index: {1}]
  %4 = xla_tuple %s2, %s3
  %s5 = sld [smem:[#allocation0]]
  $region49: #{discriminator_forward.8} parent=0
    _
  %s7 = ssub.s32 1, %s5
  %s8 = scalar_select 0, %s7, %s5
  loop: start=0, step=1, limit=4
  $region2: #{discriminator_forward.8} parent=0 // loop_pre_header
    _
  $region3: #{discriminator_forward.8} parent=0 // loop_header
    %s10 = sphi 0, %s14
    %p11 = scmp.ge.s32.totalorder %s10, 4
    %s20 = sphi 0, %s22
    %s23 = sphi 0, %s20
    %s24 = sphi 0, %s23
    %s40 = sphi 0, %s24
    %s44 = sphi 0, %s44
    %s46 = sphi 0, %s44
    %s47 = sphi 0, %s46
    %s61 = sphi 0, %s47
    %s67 = sphi 0, %s69
    %s70 = sphi 0, %s67
    %s71 = sphi 0, %s70
    %s87 = sphi 0, %s71
    %s93 = sphi 0, %s95
    %s96 = sphi 0, %s93
    %s97 = sphi 0, %s96
    %s113 = sphi 0, %s97
  $region4: #{discriminator_forward.8} parent=0 // loop_header_branch
    %13 = sbr.rel (%p11) target = $region8
  $region5: #{discriminator_forward.8} parent=0 // loop_body
    %s15 = ssub.s32 %s10, 1
    %s16 = ssub.s32 %s10, 2
    %s17 = sadd.s32 %s10, 1
    %s18 = ssub.s32 %s10, %s17
    %p19 = scmp.eq.s32.totalorder %s18, 0
    %s21 = sadd.s32 %s20, 1
    %s22 = scalar_select %p19, %s20, %s21
    %p25 = pneg %p19
    %p26 = scmp.eq.s32.totalorder %s10, 1
    %p27 = por %p25, %p26
    %p28 = scmp.ne.s32.totalorder %s20, %s23
    %p29 = scmp.eq.s32.totalorder %s10, 0
    %p30 = por %p28, %p29
    %p31 = scmp.ne.s32.totalorder %s20, %s23
    %p32 = scmp.eq.s32.totalorder %s15, 1
    %p33 = por %p31, %p32
    %p34 = scmp.ne.s32.totalorder %s23, %s24
    %p35 = scmp.eq.s32.totalorder %s15, 0
    %p36 = por %p34, %p35
    %p37 = scmp.ne.s32.totalorder %s23, %s24
    %p38 = scmp.eq.s32.totalorder %s16, 1
    %p39 = por %p37, %p38
    %p41 = scmp.ne.s32.totalorder %s24, %s40
    %p42 = scmp.eq.s32.totalorder %s16, 0
    %p43 = por %p41, %p42
    %s45 = sadd.s32 %s44, 1
    %p48 = scmp.eq.s32.totalorder %s10, 1
    %p49 = scmp.ne.s32.totalorder %s44, %s46
    %p50 = scmp.eq.s32.totalorder %s10, 0
    %p51 = por %p49, %p50
    %p52 = scmp.ne.s32.totalorder %s44, %s46
    %p53 = scmp.eq.s32.totalorder %s15, 1
    %p54 = por %p52, %p53
    %p55 = scmp.ne.s32.totalorder %s46, %s47
    %p56 = scmp.eq.s32.totalorder %s15, 0
    %p57 = por %p55, %p56
    %p58 = scmp.ne.s32.totalorder %s46, %s47
    %p59 = scmp.eq.s32.totalorder %s16, 1
    %p60 = por %p58, %p59
    %p62 = scmp.ne.s32.totalorder %s47, %s61
    %p63 = scmp.eq.s32.totalorder %s16, 0
    %p64 = por %p62, %p63
    %s65 = ssub.s32 %s10, %s17
    %p66 = scmp.eq.s32.totalorder %s65, 0
    %s68 = sadd.s32 %s67, 1
    %s69 = scalar_select %p66, %s67, %s68
    %p72 = pneg %p66
    %p73 = scmp.eq.s32.totalorder %s10, 1
    %p74 = por %p72, %p73
    %p75 = scmp.ne.s32.totalorder %s67, %s70
    %p76 = scmp.eq.s32.totalorder %s10, 0
    %p77 = por %p75, %p76
    %p78 = scmp.ne.s32.totalorder %s67, %s70
    %p79 = scmp.eq.s32.totalorder %s15, 1
    %p80 = por %p78, %p79
    %p81 = scmp.ne.s32.totalorder %s70, %s71
    %p82 = scmp.eq.s32.totalorder %s15, 0
    %p83 = por %p81, %p82
    %p84 = scmp.ne.s32.totalorder %s70, %s71
    %p85 = scmp.eq.s32.totalorder %s16, 1
    %p86 = por %p84, %p85
    %p88 = scmp.ne.s32.totalorder %s71, %s87
    %p89 = scmp.eq.s32.totalorder %s16, 0
    %p90 = por %p88, %p89
    %s91 = ssub.s32 %s10, %s17
    %p92 = scmp.eq.s32.totalorder %s91, 0
    %s94 = sadd.s32 %s93, 1
    %s95 = scalar_select %p92, %s93, %s94
    %p98 = pneg %p92
    %p99 = scmp.eq.s32.totalorder %s10, 1
    %p100 = por %p98, %p99
    %p101 = scmp.ne.s32.totalorder %s93, %s96
    %p102 = scmp.eq.s32.totalorder %s10, 0
    %p103 = por %p101, %p102
    %p104 = scmp.ne.s32.totalorder %s93, %s96
    %p105 = scmp.eq.s32.totalorder %s15, 1
    %p106 = por %p104, %p105
    %p107 = scmp.ne.s32.totalorder %s96, %s97
    %p108 = scmp.eq.s32.totalorder %s15, 0
    %p109 = por %p107, %p108
    %p110 = scmp.ne.s32.totalorder %s96, %s97
    %p111 = scmp.eq.s32.totalorder %s16, 1
    %p112 = por %p110, %p111
    %p114 = scmp.ne.s32.totalorder %s97, %s113
    %p115 = scmp.eq.s32.totalorder %s16, 0
    %p116 = por %p114, %p115
    %p117 = scmp.le.s32.totalorder 1, %s10
    %p118 = scmp.lt.s32.totalorder %s10, 3
    %p119 = pnand %p117, %p118
    %p120 = pneg %p119
    // Predicated region
    $region9: #{discriminator_forward.8} parent=5 // pred_check
      _
    $region10: #{discriminator_forward.8} parent=5 // pred_check_branch
      %122 = sbr.rel (%p119) target = $region12
    $region11: #{discriminator_forward.8} parent=5 // pred_region
      %s123 = ssub.s32 %s10, 1
      // Predicated region
      $region13: #{discriminator_forward.8} parent=11 // pred_check
        %p124 = pneg %p57
      $region14: #{discriminator_forward.8} parent=11 // pred_check_branch
        %126 = sbr.rel (%p124) target = $region16
      $region15: #{discriminator_forward.8} parent=11 // pred_region
        _
      $region16: #{discriminator_forward.8} parent=11 // pred_fallthru
        _
    $region12: #{discriminator_forward.8} parent=5 // pred_fallthru
      _
    %p127 = scmp.lt.s32.totalorder %s10, 2
    // Predicated region
    $region17: #{discriminator_forward.8} parent=5 // pred_check
      %p128 = pneg %p127
    $region18: #{discriminator_forward.8} parent=5 // pred_check_branch
      %130 = sbr.rel (%p128) target = $region20
    $region19: #{discriminator_forward.8} parent=5 // pred_region
      // Predicated region
      $region21: #{discriminator_forward.8} parent=19 // pred_check
        %p131 = pneg %p30
      $region22: #{discriminator_forward.8} parent=19 // pred_check_branch
        %133 = sbr.rel (%p131) target = $region24
      $region23: #{discriminator_forward.8} parent=19 // pred_region
        %p134 = scmp.lt.s32.totalorder %s10, 1
        %s135 = scalar_select %p134, %s10, 1
        %s136 = smul.addr %s135, 3
        %s137 = smul.addr %s136, 2
        %s138 = scalar_lea.vmem %s0, %s137
      $region24: #{discriminator_forward.8} parent=19 // pred_fallthru
        _
    $region20: #{discriminator_forward.8} parent=5 // pred_fallthru
      _
    %p139 = scmp.le.s32.totalorder 1, %s10
    %p140 = scmp.lt.s32.totalorder %s10, 3
    %p141 = pnand %p139, %p140
    %p142 = pneg %p141
    // Predicated region
    $region25: #{discriminator_forward.8} parent=5 // pred_check
      _
    $region26: #{discriminator_forward.8} parent=5 // pred_check_branch
      %144 = sbr.rel (%p141) target = $region28
    $region27: #{discriminator_forward.8} parent=5 // pred_region
      %s145 = ssub.s32 %s10, 1
      %p146 = scmp.lt.s32.totalorder %s15, 1
      %s147 = scalar_select %p146, %s15, 1
      %s148 = smul.addr %s147, 3
      %s149 = smul.addr %s148, 2
      %s150 = scalar_lea.vmem %s0, %s149
      %p151 = pneg %p36
      %p152 = pneg %p33
      %p153 = pneg %p57
      %p154 = pneg %p54
      %p155 = pneg %p83
      %p156 = pneg %p80
      %p157 = scmp.lt.s32.totalorder %s15, 1
      %s158 = scalar_select %p157, %s15, 1
      %s159 = smul.addr %s158, 2
      %s160 = scalar_lea.vmem %s2, %s159
      %p161 = pneg %p109
      %p162 = pneg %p106
      %p163 = scmp.lt.s32.totalorder %s15, 1
      %s164 = scalar_select %p163, %s15, 1
      %s165 = smul.addr %s164, 2
      %s166 = scalar_lea.vmem %s3, %s165
      %p167 = scmp.lt.s32.totalorder %s15, 1
      %s168 = scalar_select %p167, %s15, 1
      %s169 = smul.addr %s168, 3
      %s170 = smul.addr %s169, 2
      %s171 = scalar_lea.vmem %s0, %s170
      %p172 = scmp.lt.s32.totalorder %s15, 1
      %s173 = scalar_select %p172, %s15, 1
      %s174 = smul.addr %s173, 2
      %s175 = scalar_lea.vmem %s2, %s174
      %p176 = scmp.lt.s32.totalorder %s15, 1
      %s177 = scalar_select %p176, %s15, 1
      %s178 = smul.addr %s177, 2
      %s179 = scalar_lea.vmem %s3, %s178
      %v181 = vld [vmem:[%s171] sm:$0x3f]
      %v182 = vld [vmem:[%s1] sm:$0xf]
      %v183 = vld [vmem:[%s1 + $0x4] sm:$0xf]
      %v184 = vld [vmem:[%s1 + $0x8] sm:$0xf]
      %v185 = vld [vmem:[%s1 + $0xc] sm:$0xf]
      %v186 = vld [vmem:[%s1 + $0x10] sm:$0xf]
      %v187 = vld [vmem:[%s1 + $0x14] sm:$0xf]
      %v188 = vld [vmem:[%s1 + $0x18] sm:$0xf]
      %v189 = vld [vmem:[%s1 + $0x1c] sm:$0xf]
      %v190 = vld [vmem:[%s1 + $0x20] sm:$0xf]
      %v191 = vld [vmem:[%s1 + $0x24] sm:$0xf]
      %v192 = vld [vmem:[%s1 + $0x28] sm:$0xf]
      %v193 = vld [vmem:[%s1 + $0x2c] sm:$0xf]
      %v194 = vld [vmem:[%s1 + $0x30] sm:$0xf]
      %v195 = vld [vmem:[%s1 + $0x34] sm:$0xf]
      %v196 = vld [vmem:[%s1 + $0x38] sm:$0xf]
      %v197 = vld [vmem:[%s1 + $0x3c] sm:$0xf]
      %v198 = vld [vmem:[%s1 + $0x40] sm:$0xf]
      %v199 = vld [vmem:[%s1 + $0x44] sm:$0xf]
      %v200 = vld [vmem:[%s1 + $0x48] sm:$0xf]
      %v201 = vld [vmem:[%s1 + $0x4c] sm:$0xf]
      %v202 = vld [vmem:[%s1 + $0x50] sm:$0xf]
      %v203 = vld [vmem:[%s1 + $0x54] sm:$0xf]
      %v204 = vld [vmem:[%s1 + $0x58] sm:$0xf]
      %v205 = vld [vmem:[%s1 + $0x5c] sm:$0xf]
      %v206 = vld [vmem:[%s1 + $0x60] sm:$0xf]
      %v207 = vld [vmem:[%s1 + $0x64] sm:$0xf]
      %v208 = vld [vmem:[%s1 + $0x68] sm:$0xf]
      %v209 = vld [vmem:[%s1 + $0x6c] sm:$0xf]
      %v210 = vld [vmem:[%s1 + $0x70] sm:$0xf]
      %v211 = vld [vmem:[%s1 + $0x74] sm:$0xf]
      %v212 = vld [vmem:[%s1 + $0x78] sm:$0xf]
      %v213 = vld [vmem:[%s1 + $0x7c] sm:$0xf]
      %v214 = vld [vmem:[%s1 + $0x80] sm:$0xf]
      %v215 = vld [vmem:[%s1 + $0x84] sm:$0xf]
      %v216 = vld [vmem:[%s1 + $0x88] sm:$0xf]
      %v217 = vld [vmem:[%s1 + $0x8c] sm:$0xf]
      %219 = vst [vmem:[#allocation1] ss:$4 sm:$0xff] %v181
      %v220 = vld.sshfl [vmem:[#allocation1] sm:$0xff pattern:$0x73625140]
      %v221 = vld.sshfl [vmem:[#allocation1 + $0x8] sm:$0xff pattern:$0x73625140]
      %v222 = vld.sshfl [vmem:[#allocation1 + $0x10] sm:$0xff pattern:$0x73625140]
      %v261 = vunpack.c.l.b16 %v182
      %v262 = vunpack.c.l.b16 %v183
      %v263 = vunpack.c.l.b16 %v184
      %v264 = vunpack.c.l.b16 %v185
      %v265 = vunpack.c.l.b16 %v186
      %v266 = vunpack.c.l.b16 %v187
      %v267 = vunpack.c.l.b16 %v188
      %v268 = vunpack.c.l.b16 %v189
      %v269 = vunpack.c.l.b16 %v190
      %v270 = vunpack.c.l.b16 %v191
      %v271 = vunpack.c.l.b16 %v192
      %v272 = vunpack.c.l.b16 %v193
      %v273 = vunpack.c.l.b16 %v194
      %v274 = vunpack.c.l.b16 %v195
      %v275 = vunpack.c.l.b16 %v196
      %v276 = vunpack.c.l.b16 %v197
      %v277 = vunpack.c.l.b16 %v198
      %v278 = vunpack.c.l.b16 %v199
      %v279 = vunpack.c.l.b16 %v200
      %v280 = vunpack.c.l.b16 %v201
      %v281 = vunpack.c.l.b16 %v202
      %v282 = vunpack.c.l.b16 %v203
      %v283 = vunpack.c.l.b16 %v204
      %v284 = vunpack.c.l.b16 %v205
      %v285 = vunpack.c.l.b16 %v206
      %v286 = vunpack.c.l.b16 %v207
      %v287 = vunpack.c.l.b16 %v208
      %v288 = vunpack.c.l.b16 %v209
      %v289 = vunpack.c.l.b16 %v210
      %v290 = vunpack.c.l.b16 %v211
      %v291 = vunpack.c.l.b16 %v212
      %v292 = vunpack.c.l.b16 %v213
      %v293 = vunpack.c.l.b16 %v214
      %v294 = vunpack.c.l.b16 %v215
      %v295 = vunpack.c.l.b16 %v216
      %v296 = vunpack.c.l.b16 %v217
      %v297 = vpack.c.b16 %v262, %v261
      %v298 = vpack.c.b16 %v264, %v263
      %v299 = vpack.c.b16 %v266, %v265
      %v300 = vpack.c.b16 %v268, %v267
      %v301 = vpack.c.b16 %v270, %v269
      %v302 = vpack.c.b16 %v272, %v271
      %v303 = vpack.c.b16 %v274, %v273
      %v304 = vpack.c.b16 %v276, %v275
      %v305 = vpack.c.b16 %v278, %v277
      %v306 = vpack.c.b16 %v280, %v279
      %v307 = vpack.c.b16 %v282, %v281
      %v308 = vpack.c.b16 %v284, %v283
      %v309 = vpack.c.b16 %v286, %v285
      %v310 = vpack.c.b16 %v288, %v287
      %v311 = vpack.c.b16 %v290, %v289
      %v312 = vpack.c.b16 %v292, %v291
      %v313 = vpack.c.b16 %v294, %v293
      %v314 = vpack.c.b16 %v296, %v295
      %vm333 = vcmask 261120
      %v334 = vsel %vm333, %v222, 0
      %336 = vmatpush.bf16.msra.mxu0 %v304
      %337 = vmatpush.bf16.msra.mxu0 %v303
      %338 = vmatpush.bf16.msra.mxu0 %v302
      %339 = vmatpush.bf16.msra.mxu0 %v301
      %340 = vmatpush.bf16.msra.mxu0 %v300
      %341 = vmatpush.bf16.msra.mxu0 %v299
      %342 = vmatpush.bf16.msra.mxu0 %v298
      %343 = vmatpush.bf16.msra.mxu0 %v297
      %344 = vmatmul.bf16.gmra.mxu0 %v220
      %v345 = vpop.f32.mrf.mxu0
      %v346 = vadd.f32 0.0, %v345
      %v347 = vpop.f32.mrf.mxu0
      %348 = vdwg.mxu0
      %349 = vmatpush.bf16.msra.mxu0 %v312
      %350 = vmatpush.bf16.msra.mxu0 %v311
      %351 = vmatpush.bf16.msra.mxu0 %v310
      %352 = vmatpush.bf16.msra.mxu0 %v309
      %353 = vmatpush.bf16.msra.mxu0 %v308
      %354 = vmatpush.bf16.msra.mxu0 %v307
      %355 = vmatpush.bf16.msra.mxu0 %v306
      %356 = vmatpush.bf16.msra.mxu0 %v305
      %357 = vmatmul.bf16.gmra.mxu0 %v221
      %v358 = vpop.f32.mrf.mxu0
      %v359 = vadd.f32 %v346, %v358
      %v360 = vpop.f32.mrf.mxu0
      %361 = vdwg.mxu0
      %362 = vmatpush.bf16.msra.mxu0 0
      %363 = vmatpush.bf16.msra.mxu0 0
      %364 = vmatpush.bf16.msra.mxu0 0
      %365 = vmatpush.bf16.msra.mxu0 0
      %366 = vmatpush.bf16.msra.mxu0 0
      %367 = vmatpush.bf16.msra.mxu0 0
      %368 = vmatpush.bf16.msra.mxu0 %v314
      %369 = vmatpush.bf16.msra.mxu0 %v313
      %370 = vmatmul.bf16.gmra.mxu0 %v334
      %v371 = vpop.f32.mrf.mxu0
      %v372 = vadd.f32 %v359, %v371
      %v373 = vpop.f32.mrf.mxu0
      %374 = vdwg.mxu0
      %vm375 = vcmask 60416
      %v376 = vsel %vm375, %v372, 0.0
      %v377 = vrot.slane %v376, 4
      %v378 = vadd.f32 %v376, %v377
      %v379 = vrot.slane %v378, 2
      %v380 = vadd.f32 %v378, %v379
      %v381 = vrot.slane %v380, 1
      %v382 = vadd.f32 %v380, %v381
      %vm383 = vcmask 57344
      %384 = vst.msk [vmem:[%s179] sm:$0x1] %vm383, %v382
      %v385 = vmul.f32 %v372, %v372
      %v386 = vsel %vm375, %v385, 0.0
      %v387 = vrot.slane %v386, 4
      %v388 = vadd.f32 %v386, %v387
      %v389 = vrot.slane %v388, 2
      %v390 = vadd.f32 %v388, %v389
      %v391 = vrot.slane %v390, 1
      %v392 = vadd.f32 %v390, %v391
      %393 = vst.msk [vmem:[%s179 + $0x1] sm:$0x1] %vm383, %v392
      %v394 = vpack.c.bf16 %v372, %v372
      %vm395 = vcmask 58368
      %396 = vst.msk [vmem:[%s175] sm:$0x3] %vm395, %v394
      %p397 = scmp.lt.s32.totalorder %s15, 1
      %s398 = scalar_select %p397, %s15, 1
      %s399 = smul.addr %s398, 2
      %s400 = scalar_lea.vmem %s2, %s399
      %p401 = scmp.lt.s32.totalorder %s15, 1
      %s402 = scalar_select %p401, %s15, 1
      %s403 = smul.addr %s402, 2
      %s404 = scalar_lea.vmem %s3, %s403
      // Predicated region
      $region29: #{discriminator_forward.8} parent=27 // pred_check
        %p405 = pneg %p80
      $region30: #{discriminator_forward.8} parent=27 // pred_check_branch
        %407 = sbr.rel (%p405) target = $region32
      $region31: #{discriminator_forward.8} parent=27 // pred_region
        _
      $region32: #{discriminator_forward.8} parent=27 // pred_fallthru
        _
      // Predicated region
      $region33: #{discriminator_forward.8} parent=27 // pred_check
        %p408 = pneg %p106
      $region34: #{discriminator_forward.8} parent=27 // pred_check_branch
        %410 = sbr.rel (%p408) target = $region36
      $region35: #{discriminator_forward.8} parent=27 // pred_region
        _
      $region36: #{discriminator_forward.8} parent=27 // pred_fallthru
        _
    $region28: #{discriminator_forward.8} parent=5 // pred_fallthru
      _
    %p411 = scmp.le.s32.totalorder 2, %s10
    // Predicated region
    $region37: #{discriminator_forward.8} parent=5 // pred_check
      %p412 = pneg %p411
    $region38: #{discriminator_forward.8} parent=5 // pred_check_branch
      %414 = sbr.rel (%p412) target = $region40
    $region39: #{discriminator_forward.8} parent=5 // pred_region
      %s415 = ssub.s32 %s10, 2
      // Predicated region
      $region41: #{discriminator_forward.8} parent=39 // pred_check
        %p416 = pneg %p86
      $region42: #{discriminator_forward.8} parent=39 // pred_check_branch
        %418 = sbr.rel (%p416) target = $region44
      $region43: #{discriminator_forward.8} parent=39 // pred_region
        %p419 = scmp.lt.s32.totalorder %s16, 1
        %s420 = scalar_select %p419, %s16, 1
        %s421 = smul.addr %s420, 2
        %s422 = scalar_lea.vmem %s2, %s421
      $region44: #{discriminator_forward.8} parent=39 // pred_fallthru
        _
      // Predicated region
      $region45: #{discriminator_forward.8} parent=39 // pred_check
        %p423 = pneg %p112
      $region46: #{discriminator_forward.8} parent=39 // pred_check_branch
        %425 = sbr.rel (%p423) target = $region48
      $region47: #{discriminator_forward.8} parent=39 // pred_region
        %p426 = scmp.lt.s32.totalorder %s16, 1
        %s427 = scalar_select %p426, %s16, 1
        %s428 = smul.addr %s427, 2
        %s429 = scalar_lea.vmem %s3, %s428
      $region48: #{discriminator_forward.8} parent=39 // pred_fallthru
        _
    $region40: #{discriminator_forward.8} parent=5 // pred_fallthru
      _
  $region6: #{discriminator_forward.8} parent=0 // loop_footer
    %s14 = sadd.s32 1, %s10
  $region7: #{discriminator_forward.8} parent=0 // loop_footer_branch
    %9 = sbr.rel target = $region3
  $region8: #{discriminator_forward.8} parent=0 // loop_exit
    _

// kernel: discriminator_forward.9
$region0: #{discriminator_forward.9}
  #allocation0 [shape = 'u32[]', space=smem, size = 0x4, offset = 0x4, fixed_abs, tag = 'smem constant byte address 0x4 - core index']
  #allocation1 [shape = 'u32[72,128]{1,0:T(1,128)}', space=vmem, size = 0x9000, scoped, tag = 'internal scratch']
  %s0 = inlined_call_operand.vmem [shape: bf16[2,4,72], index: 0, kind: input, shape index: {}]
  %s1 = inlined_call_operand.vmem [shape: bf16[72,1], index: 1, kind: input, shape index: {}]
  %s2 = inlined_call_operand.vmem [shape: f32[2,4,1], index: 2, kind: output, shape index: {}]
  %s3 = sld [smem:[#allocation0]]
  $region41: #{discriminator_forward.9} parent=0
    _
  %s5 = ssub.s32 1, %s3
  %s6 = scalar_select 0, %s5, %s3
  loop: start=0, step=1, limit=4
  $region2: #{discriminator_forward.9} parent=0 // loop_pre_header
    _
  $region3: #{discriminator_forward.9} parent=0 // loop_header
    %s8 = sphi 0, %s12
    %p9 = scmp.ge.s32.totalorder %s8, 4
    %s18 = sphi 0, %s20
    %s21 = sphi 0, %s18
    %s22 = sphi 0, %s21
    %s38 = sphi 0, %s22
    %s42 = sphi 0, %s42
    %s44 = sphi 0, %s42
    %s45 = sphi 0, %s44
    %s59 = sphi 0, %s45
    %s65 = sphi 0, %s67
    %s68 = sphi 0, %s65
    %s69 = sphi 0, %s68
    %s85 = sphi 0, %s69
  $region4: #{discriminator_forward.9} parent=0 // loop_header_branch
    %11 = sbr.rel (%p9) target = $region8
  $region5: #{discriminator_forward.9} parent=0 // loop_body
    %s13 = ssub.s32 %s8, 1
    %s14 = ssub.s32 %s8, 2
    %s15 = sadd.s32 %s8, 1
    %s16 = ssub.s32 %s8, %s15
    %p17 = scmp.eq.s32.totalorder %s16, 0
    %s19 = sadd.s32 %s18, 1
    %s20 = scalar_select %p17, %s18, %s19
    %p23 = pneg %p17
    %p24 = scmp.eq.s32.totalorder %s8, 1
    %p25 = por %p23, %p24
    %p26 = scmp.ne.s32.totalorder %s18, %s21
    %p27 = scmp.eq.s32.totalorder %s8, 0
    %p28 = por %p26, %p27
    %p29 = scmp.ne.s32.totalorder %s18, %s21
    %p30 = scmp.eq.s32.totalorder %s13, 1
    %p31 = por %p29, %p30
    %p32 = scmp.ne.s32.totalorder %s21, %s22
    %p33 = scmp.eq.s32.totalorder %s13, 0
    %p34 = por %p32, %p33
    %p35 = scmp.ne.s32.totalorder %s21, %s22
    %p36 = scmp.eq.s32.totalorder %s14, 1
    %p37 = por %p35, %p36
    %p39 = scmp.ne.s32.totalorder %s22, %s38
    %p40 = scmp.eq.s32.totalorder %s14, 0
    %p41 = por %p39, %p40
    %s43 = sadd.s32 %s42, 1
    %p46 = scmp.eq.s32.totalorder %s8, 1
    %p47 = scmp.ne.s32.totalorder %s42, %s44
    %p48 = scmp.eq.s32.totalorder %s8, 0
    %p49 = por %p47, %p48
    %p50 = scmp.ne.s32.totalorder %s42, %s44
    %p51 = scmp.eq.s32.totalorder %s13, 1
    %p52 = por %p50, %p51
    %p53 = scmp.ne.s32.totalorder %s44, %s45
    %p54 = scmp.eq.s32.totalorder %s13, 0
    %p55 = por %p53, %p54
    %p56 = scmp.ne.s32.totalorder %s44, %s45
    %p57 = scmp.eq.s32.totalorder %s14, 1
    %p58 = por %p56, %p57
    %p60 = scmp.ne.s32.totalorder %s45, %s59
    %p61 = scmp.eq.s32.totalorder %s14, 0
    %p62 = por %p60, %p61
    %s63 = ssub.s32 %s8, %s15
    %p64 = scmp.eq.s32.totalorder %s63, 0
    %s66 = sadd.s32 %s65, 1
    %s67 = scalar_select %p64, %s65, %s66
    %p70 = pneg %p64
    %p71 = scmp.eq.s32.totalorder %s8, 1
    %p72 = por %p70, %p71
    %p73 = scmp.ne.s32.totalorder %s65, %s68
    %p74 = scmp.eq.s32.totalorder %s8, 0
    %p75 = por %p73, %p74
    %p76 = scmp.ne.s32.totalorder %s65, %s68
    %p77 = scmp.eq.s32.totalorder %s13, 1
    %p78 = por %p76, %p77
    %p79 = scmp.ne.s32.totalorder %s68, %s69
    %p80 = scmp.eq.s32.totalorder %s13, 0
    %p81 = por %p79, %p80
    %p82 = scmp.ne.s32.totalorder %s68, %s69
    %p83 = scmp.eq.s32.totalorder %s14, 1
    %p84 = por %p82, %p83
    %p86 = scmp.ne.s32.totalorder %s69, %s85
    %p87 = scmp.eq.s32.totalorder %s14, 0
    %p88 = por %p86, %p87
    %p89 = scmp.le.s32.totalorder 1, %s8
    %p90 = scmp.lt.s32.totalorder %s8, 3
    %p91 = pnand %p89, %p90
    %p92 = pneg %p91
    // Predicated region
    $region9: #{discriminator_forward.9} parent=5 // pred_check
      _
    $region10: #{discriminator_forward.9} parent=5 // pred_check_branch
      %94 = sbr.rel (%p91) target = $region12
    $region11: #{discriminator_forward.9} parent=5 // pred_region
      %s95 = ssub.s32 %s8, 1
      // Predicated region
      $region13: #{discriminator_forward.9} parent=11 // pred_check
        %p96 = pneg %p55
      $region14: #{discriminator_forward.9} parent=11 // pred_check_branch
        %98 = sbr.rel (%p96) target = $region16
      $region15: #{discriminator_forward.9} parent=11 // pred_region
        _
      $region16: #{discriminator_forward.9} parent=11 // pred_fallthru
        _
    $region12: #{discriminator_forward.9} parent=5 // pred_fallthru
      _
    %p99 = scmp.lt.s32.totalorder %s8, 2
    // Predicated region
    $region17: #{discriminator_forward.9} parent=5 // pred_check
      %p100 = pneg %p99
    $region18: #{discriminator_forward.9} parent=5 // pred_check_branch
      %102 = sbr.rel (%p100) target = $region20
    $region19: #{discriminator_forward.9} parent=5 // pred_region
      // Predicated region
      $region21: #{discriminator_forward.9} parent=19 // pred_check
        %p103 = pneg %p28
      $region22: #{discriminator_forward.9} parent=19 // pred_check_branch
        %105 = sbr.rel (%p103) target = $region24
      $region23: #{discriminator_forward.9} parent=19 // pred_region
        %p106 = scmp.lt.s32.totalorder %s8, 1
        %s107 = scalar_select %p106, %s8, 1
        %s108 = smul.addr %s107, 2
        %s109 = scalar_lea.vmem %s0, %s108
      $region24: #{discriminator_forward.9} parent=19 // pred_fallthru
        _
    $region20: #{discriminator_forward.9} parent=5 // pred_fallthru
      _
    %p110 = scmp.le.s32.totalorder 1, %s8
    %p111 = scmp.lt.s32.totalorder %s8, 3
    %p112 = pnand %p110, %p111
    %p113 = pneg %p112
    // Predicated region
    $region25: #{discriminator_forward.9} parent=5 // pred_check
      _
    $region26: #{discriminator_forward.9} parent=5 // pred_check_branch
      %115 = sbr.rel (%p112) target = $region28
    $region27: #{discriminator_forward.9} parent=5 // pred_region
      %s116 = ssub.s32 %s8, 1
      %p117 = scmp.lt.s32.totalorder %s13, 1
      %s118 = scalar_select %p117, %s13, 1
      %s119 = smul.addr %s118, 2
      %s120 = scalar_lea.vmem %s0, %s119
      %p121 = pneg %p34
      %p122 = pneg %p31
      %p123 = pneg %p55
      %p124 = pneg %p52
      %p125 = pneg %p81
      %p126 = pneg %p78
      %p127 = scmp.lt.s32.totalorder %s13, 1
      %s128 = scalar_select %p127, %s13, 1
      %s129 = smul.addr %s128, 4
      %s130 = scalar_lea.vmem %s2, %s129
      %p131 = scmp.lt.s32.totalorder %s13, 1
      %s132 = scalar_select %p131, %s13, 1
      %s133 = smul.addr %s132, 2
      %s134 = scalar_lea.vmem %s0, %s133
      %p135 = scmp.lt.s32.totalorder %s13, 1
      %s136 = scalar_select %p135, %s13, 1
      %s137 = smul.addr %s136, 4
      %s138 = scalar_lea.vmem %s2, %s137
      %v140 = vld [vmem:[%s134] sm:$0x3]
      %v141 = vld [vmem:[%s1] sm:$0xf]
      %v142 = vld [vmem:[%s1 + $0x4] sm:$0xf]
      %v143 = vld [vmem:[%s1 + $0x8] sm:$0xf]
      %v144 = vld [vmem:[%s1 + $0xc] sm:$0xf]
      %v145 = vld [vmem:[%s1 + $0x10] sm:$0xf]
      %v146 = vld [vmem:[%s1 + $0x14] sm:$0xf]
      %v147 = vld [vmem:[%s1 + $0x18] sm:$0xf]
      %v148 = vld [vmem:[%s1 + $0x1c] sm:$0xf]
      %v149 = vld [vmem:[%s1 + $0x20] sm:$0xf]
      %v159 = vunpack.c.l.b16 %v141
      %v160 = vunpack.c.l.b16 %v142
      %v161 = vunpack.c.l.b16 %v143
      %v162 = vunpack.c.l.b16 %v144
      %v163 = vunpack.c.l.b16 %v145
      %v164 = vunpack.c.l.b16 %v146
      %v165 = vunpack.c.l.b16 %v147
      %v166 = vunpack.c.l.b16 %v148
      %v167 = vunpack.c.l.b16 %v149
      %v168 = vpack.c.b16 %v160, %v159
      %v169 = vpack.c.b16 %v162, %v161
      %v170 = vpack.c.b16 %v164, %v163
      %v171 = vpack.c.b16 %v166, %v165
      %v172 = vpack.c.b16 %v167, %v167
      %vm177 = vcmask 588800
      %v179 = vsel %vm177, %v140, 0
      %vm181 = vcmask 1043456
      %v183 = vsel %vm181, %v172, 0
      %185 = vmatpush.bf16.msra.mxu0 0
      %186 = vmatpush.bf16.msra.mxu0 0
      %187 = vmatpush.bf16.msra.mxu0 0
      %188 = vmatpush.bf16.msra.mxu0 %v183
      %189 = vmatpush.bf16.msra.mxu0 %v171
      %190 = vmatpush.bf16.msra.mxu0 %v170
      %191 = vmatpush.bf16.msra.mxu0 %v169
      %192 = vmatpush.bf16.msra.mxu0 %v168
      %193 = vmatmul.bf16.gmra.mxu0 %v179
      %v194 = vpop.f32.mrf.mxu0
      %v195 = vadd.f32 0.0, %v194
      %v196 = vpop.f32.mrf.mxu0
      %197 = vdwg.mxu0
      %v198 = vand.u32 2147483647, %v195
      %v199 = vsub.f32 0.0, %v198
      %v200 = vmul.f32 %v199, 1.442695
      %v201 = vpow.pop %v200
      %vm202 = vcmp.ge.f32.partialorder %v195, 0.0
      %v203 = vsel %vm202, 1.0, %v201
      %v204 = vadd.f32 %v201, 1.0
      %v205 = vrcp.pop %v204
      %v206 = vmul.f32 %v204, %v205
      %v207 = vsub.f32 1.0, %v206
      %v208 = vmul.f32 %v205, %v207
      %v209 = vadd.f32 %v205, %v208
      %vm210 = vweird.f32 %v204
      %vm211 = vweird.f32 %v205
      %vm212 = vmor %vm210, %vm211
      %v213 = vsel %vm212, %v205, %v209
      %v214 = vand.u32 2147483647, %v204
      %vm215 = vcmp.eq.f32.partialorder %v214, 8.507059e+37
      %v216 = vand.u32 %v204, 2147483648
      %v217 = vor.u32 1.1754944e-38, %v216
      %v218 = vsel %vm215, %v217, %v213
      %v219 = vmul.f32 %v203, %v218
      %vm220 = vcmask 3072
      %221 = vst.msk [vmem:[%s138] sm:$0xf] %vm220, %v219
      %p222 = scmp.lt.s32.totalorder %s13, 1
      %s223 = scalar_select %p222, %s13, 1
      %s224 = smul.addr %s223, 4
      %s225 = scalar_lea.vmem %s2, %s224
      // Predicated region
      $region29: #{discriminator_forward.9} parent=27 // pred_check
        %p226 = pneg %p78
      $region30: #{discriminator_forward.9} parent=27 // pred_check_branch
        %228 = sbr.rel (%p226) target = $region32
      $region31: #{discriminator_forward.9} parent=27 // pred_region
        _
      $region32: #{discriminator_forward.9} parent=27 // pred_fallthru
        _
    $region28: #{discriminator_forward.9} parent=5 // pred_fallthru
      _
    %p229 = scmp.le.s32.totalorder 2, %s8
    // Predicated region
    $region33: #{discriminator_forward.9} parent=5 // pred_check
      %p230 = pneg %p229
    $region34: #{discriminator_forward.9} parent=5 // pred_check_branch
      %232 = sbr.rel (%p230) target = $region36
    $region35: #{discriminator_forward.9} parent=5 // pred_region
      %s233 = ssub.s32 %s8, 2
      // Predicated region
      $region37: #{discriminator_forward.9} parent=35 // pred_check
        %p234 = pneg %p84
      $region38: #{discriminator_forward.9} parent=35 // pred_check_branch
        %236 = sbr.rel (%p234) target = $region40
      $region39: #{discriminator_forward.9} parent=35 // pred_region
        %p237 = scmp.lt.s32.totalorder %s14, 1
        %s238 = scalar_select %p237, %s14, 1
        %s239 = smul.addr %s238, 4
        %s240 = scalar_lea.vmem %s2, %s239
      $region40: #{discriminator_forward.9} parent=35 // pred_fallthru
        _
    $region36: #{discriminator_forward.9} parent=5 // pred_fallthru
      _
  $region6: #{discriminator_forward.9} parent=0 // loop_footer
    %s12 = sadd.s32 1, %s8
  $region7: #{discriminator_forward.9} parent=0 // loop_footer_branch
    %7 = sbr.rel target = $region3
  $region8: #{discriminator_forward.9} parent=0 // loop_exit
    _

</llo_original>
